<compile_context>
chip_gen: v5e
topology: v5e:2x2
jax: 0.10.0
libtpu: 0.0.40
codegen_flags: <defaults>
</compile_context>

<pallas_src>
import functools

import numpy as np
import jax
import jax.numpy as jnp
from jax.experimental import pallas as pl
from jax.experimental.pallas import tpu as pltpu

EPS = 1e-5                      # PyTorch BatchNorm default eps
COMPUTE_DTYPE = jnp.bfloat16    # MXU input dtype (f32 accumulate)

# BatchNorm layers, in the order their (scale, shift) columns are packed.
BN_ORDER = (
    "bn0", "bn1", "bn2",
    "rb1_bn1", "rb1_bn2", "rb2_bn1", "rb2_bn2",
    "bn3", "bn_r3", "rb3_bn1", "rb3_bn2",
    "bn_r4", "rb4_bn1", "rb4_bn2",
    "bn4", "bn5",
)
N_BN = len(BN_ORDER)            # 16

# Weight operands, in operand order (pre-transposed (d_in, d_out), bf16).
# *_a / *_b are the concat-split halves (h-half / scene_feat-half).
W_NAMES = (
    "fc1",
    "fc2_a", "fc2_b",
    "rb1_fc1", "rb1_fc2", "rb2_fc1", "rb2_fc2",
    "mulv",                      # fused mu_fc + logvar_fc  (hsize2, 2*eps_d)
    "fc3",
    "fcr3_a", "fcr3_b",
    "rb3_fc1", "rb3_fc2",
    "fcr4_a", "fcr4_b",
    "rb4_fc1", "rb4_fc2",
    "fc4_a", "fc4_b",
    "fc5",
)

# Bias-slab packing order (fc1_cs = column-sum of fc1 weight, for bn0 fold).
B_NAMES = (
    "fc1", "fc1_cs", "fc2",
    "rb1_fc1", "rb1_fc2", "rb2_fc1", "rb2_fc2",
    "fc3", "fcr3", "rb3_fc1", "rb3_fc2",
    "fcr4", "rb4_fc1", "rb4_fc2",
    "fc4", "fc5", "mulv",
)


# ------------------------------- tiling helper ------------------------------

def _tiling(m):
    """Pad rows to a multiple of 8, cap TM at 256 and prefer >=2 grid steps."""
    m_pad = -(-m // 8) * 8
    tm = min(256, m_pad)
    if m_pad >= 16 and m_pad // tm < 2:      # leave no TensorCore idle on v7x
        tm = max(8, (m_pad // 2 // 8) * 8)
    m_pad = -(-m_pad // tm) * tm
    return m_pad, tm


def _padded_bytes(shape, dtype):
    r = shape[0] if len(shape) > 1 else 1
    c = shape[-1]
    return (-(-r // 8) * 8) * (-(-c // 128) * 128) * np.dtype(dtype).itemsize


# ----------------------------- fused forward pass ---------------------------

def bps_cvae_forward(params, x, scene_feat, eps, *, single_buffer_weights=True):
    """x: (B, C, n_bps); scene_feat: 3 x (B, C, hsize2); eps: (B, C, eps_d)."""
    B, C, n_bps = x.shape
    hsize2 = scene_feat[0].shape[-1]
    eps_d = eps.shape[-1]
    M = B * C
    M_pad, TM = _tiling(M)

    def rows(a, d, dtype):
        a2 = a.reshape(M, d).astype(dtype)
        if M_pad != M:
            a2 = jnp.pad(a2, ((0, M_pad - M), (0, 0)))
        return a2

    # Activations cross the boundary in bf16 (MXU path is bf16 anyway).
    x2 = rows(x, n_bps, COMPUTE_DTYPE)
    sf = [rows(s, hsize2, COMPUTE_DTYPE) for s in scene_feat]
    e2 = rows(eps, eps_d, jnp.float32)                 # reparam noise stays f32

    # Packed eval-BN scale/shift: (M_pad, 2*N_BN); row r has channel r % C.
    cols = []
    for name in BN_ORDER:
        bn_p = params["bn"][name]
        cols.append(jnp.tile(bn_p["scale"], B))
        cols.append(jnp.tile(bn_p["shift"], B))
    bn_pack = jnp.stack(cols, axis=-1).astype(jnp.float32)
    if M_pad != M:
        bn_pack = jnp.pad(bn_pack, ((0, M_pad - M), (0, 0)))

    # One lane-dense (1, total) f32 bias slab, sliced statically in-kernel.
    b_off, off, pieces = {}, 0, []
    for name in B_NAMES:
        v = params["biases"][name].astype(jnp.float32)
        b_off[name] = (off, v.shape[0])
        pieces.append(v)
        off += v.shape[0]
    bias_pack = jnp.concatenate(pieces).reshape(1, off)

    w_args = [params["weights"][n] for n in W_NAMES]
    n_w = len(W_NAMES)

    # ------------------------------- kernel ---------------------------------
    def kernel(x_ref, sf0_ref, sf1_ref, sf2_ref, eps_ref, bnp_ref, b_ref, *rest):
        w = dict(zip(W_NAMES, rest[:n_w]))
        out_ref, mulv_ref = rest[n_w], rest[n_w + 1]

        bnp = bnp_ref[...]                          # (TM, 2*N_BN) f32

        def bn_s(k):
            return bnp[:, 2 * k:2 * k + 1]

        def bn_t(k):
            return bnp[:, 2 * k + 1:2 * k + 2]

        def bn(y, k):                               # eval-mode BatchNorm1d
            return y * bn_s(k) + bn_t(k)

        def bias(name):                             # static slice of the slab
            o, n = b_off[name]
            return b_ref[:, o:o + n]                # (1, n) f32

        def dot(h, name):                           # bf16 MXU, f32 accumulate
            return jnp.dot(h.astype(COMPUTE_DTYPE), w[name][...],
                           preferred_element_type=jnp.float32)

        def dot2(h, s, na, nb):                     # split-dot == concat matmul
            return dot(h, na) + dot(s, nb)

        def relu(y):
            return jnp.maximum(y, 0.0)

        def res_block(h, fa, fb, k1, k2):
            u = relu(bn(dot(h, fa) + bias(fa), k1))
            v = bn(dot(u, fb) + bias(fb), k2) + h
            return relu(v)

        sf0 = sf0_ref[...]

        # ---- encoder: bn0 folded into the fc1 epilogue -----------------------
        y = dot(x_ref[...], "fc1")
        y = y * bn_s(0) + (bn_t(0) * bias("fc1_cs") + bias("fc1"))
        h = relu(bn(y, 1))                                          # relu(bn1)
        h = relu(bn(dot2(h, sf0, "fc2_a", "fc2_b") + bias("fc2"), 2))
        h = res_block(h, "rb1_fc1", "rb1_fc2", 3, 4)   # outer F.relu is a no-op
        h = res_block(h, "rb2_fc1", "rb2_fc2", 5, 6)

        # ---- fused latent heads + reparameterization -------------------------
        mulv = dot(h, "mulv") + bias("mulv")           # (TM, 2*eps_d) f32
        mulv_ref[...] = mulv
        mu = mulv[:, :eps_d]
        lv = mulv[:, eps_d:]
        z = eps_ref[...] * jnp.exp(0.5 * lv) + mu      # eps*std + mu

        # ---- decoder ----------------------------------------------------------
        h = relu(bn(dot(z, "fc3") + bias("fc3"), 7))
        h = relu(bn(dot2(h, sf0, "fcr3_a", "fcr3_b") + bias("fcr3"), 8))
        h = res_block(h, "rb3_fc1", "rb3_fc2", 9, 10)
        h = relu(bn(dot2(h, sf1_ref[...], "fcr4_a", "fcr4_b") + bias("fcr4"), 11))
        h = res_block(h, "rb4_fc1", "rb4_fc2", 12, 13)
        h = relu(bn(dot2(h, sf2_ref[...], "fc4_a", "fc4_b") + bias("fc4"), 14))
        out = relu(bn(dot(h, "fc5") + bias("fc5"), 15))
        out_ref[...] = out.astype(out_ref.dtype)

    # ------------------------------ specs ------------------------------------
    def row_spec(d):
        return pl.BlockSpec((TM, d), lambda i: (i, 0))

    def const_spec(a):
        # Constant index_map: the weight never changes across the grid, so one
        # pipeline buffer is enough -> halves the resident-weight VMEM.
        if single_buffer_weights:
            return pl.BlockSpec(a.shape, lambda i: (0, 0),
                                pipeline_mode=pl.Buffered(1))
        return pl.BlockSpec(a.shape, lambda i: (0, 0))

    in_specs = [row_spec(n_bps), row_spec(hsize2), row_spec(hsize2),
                row_spec(hsize2), row_spec(eps_d), row_spec(2 * N_BN),
                const_spec(bias_pack)]
    in_specs += [const_spec(a) for a in w_args]

    out_shape = (jax.ShapeDtypeStruct((M_pad, n_bps), COMPUTE_DTYPE),
                 jax.ShapeDtypeStruct((M_pad, 2 * eps_d), jnp.float32))
    out_specs = (row_spec(n_bps), row_spec(2 * eps_d))

    # ------------------ VMEM budget + advisory cost estimate ------------------
    w_factor = 1 if single_buffer_weights else 2
    w_bytes = w_factor * (sum(_padded_bytes(a.shape, a.dtype) for a in w_args)
                          + _padded_bytes(bias_pack.shape, jnp.float32))
    row_tiles = [(n_bps, COMPUTE_DTYPE), (hsize2, COMPUTE_DTYPE),
                 (hsize2, COMPUTE_DTYPE), (hsize2, COMPUTE_DTYPE),
                 (eps_d, jnp.float32), (2 * N_BN, jnp.float32),
                 (n_bps, COMPUTE_DTYPE), (2 * eps_d, jnp.float32)]
    tile_bytes = 2 * sum(_padded_bytes((TM, d), dt) for d, dt in row_tiles)
    vmem_limit = int(min(max(int(1.25 * (w_bytes + tile_bytes)) + (8 << 20),
                             32 << 20), 128 << 20))

    flops = 2 * M_pad * sum(int(a.shape[0]) * int(a.shape[1]) for a in w_args)
    bytes_accessed = int(
        sum(a.size * np.dtype(a.dtype).itemsize for a in w_args)
        + bias_pack.size * 4 + x2.size * 2 + sum(s.size * 2 for s in sf)
        + e2.size * 4 + bn_pack.size * 4
        + M_pad * n_bps * 2 + M_pad * 2 * eps_d * 4)
    cost = pl.CostEstimate(flops=int(flops),
                           transcendentals=int(M_pad * eps_d),
                           bytes_accessed=bytes_accessed)

    out2, mulv2 = pl.pallas_call(
        kernel,
        out_shape=out_shape,
        grid=(M_pad // TM,),
        in_specs=in_specs,
        out_specs=out_specs,
        compiler_params=pltpu.CompilerParams(
            dimension_semantics=("parallel",),
            vmem_limit_bytes=vmem_limit),
        cost_estimate=cost,
    )(x2, sf[0], sf[1], sf[2], e2, bn_pack, bias_pack, *w_args)

    output = out2[:M].reshape(B, C, n_bps)          # bf16
    mu = mulv2[:M, :eps_d].reshape(B, C, eps_d)     # f32
    logvar = mulv2[:M, eps_d:].reshape(B, C, eps_d)  # f32
    return output, mu, logvar


# ------------------------ deterministic parameter init -----------------------

def _bn_params(key, c):
    # eval-mode BatchNorm1d folded to per-channel scale/shift
    k1, k2, k3, k4 = jax.random.split(key, 4)
    gamma = 1.0 + 0.1 * jax.random.normal(k1, (c,), jnp.float32)
    beta = 0.1 * jax.random.normal(k2, (c,), jnp.float32)
    mean = 0.1 * jax.random.normal(k3, (c,), jnp.float32)
    var = 1.0 + 0.1 * jax.random.uniform(k4, (c,), jnp.float32)
    scale = gamma / jnp.sqrt(var + EPS)
    shift = beta - mean * scale
    return {"scale": scale, "shift": shift}


def init_params(key, n_bps, n_bps_feat, hsize1, hsize2, eps_d):
    keys = iter(jax.random.split(key, 64))
    C = n_bps_feat
    W, Bv, BN = {}, {}, {}

    def lin(d_in, d_out):
        kw, kb = jax.random.split(next(keys))
        w = jax.random.normal(kw, (d_out, d_in), jnp.float32) / jnp.sqrt(float(d_in))
        b = 0.01 * jax.random.normal(kb, (d_out,), jnp.float32)
        return w.T.astype(COMPUTE_DTYPE), b           # pre-transposed (d_in, d_out)

    def lin_split(d1, d2, d_out):                     # concat-input layer, pre-split
        wt, b = lin(d1 + d2, d_out)
        return wt[:d1], wt[d1:], b

    BN["bn0"] = _bn_params(next(keys), C)
    W["fc1"], Bv["fc1"] = lin(n_bps, hsize1)
    Bv["fc1_cs"] = jnp.sum(W["fc1"].astype(jnp.float32), axis=0)   # bn0 fold
    BN["bn1"] = _bn_params(next(keys), C)
    W["fc2_a"], W["fc2_b"], Bv["fc2"] = lin_split(hsize1, hsize2, hsize2)
    BN["bn2"] = _bn_params(next(keys), C)
    for i in (1, 2, 3, 4):                            # ResBlock 1..4
        W[f"rb{i}_fc1"], Bv[f"rb{i}_fc1"] = lin(hsize2, hsize2)
        BN[f"rb{i}_bn1"] = _bn_params(next(keys), C)
        W[f"rb{i}_fc2"], Bv[f"rb{i}_fc2"] = lin(hsize2, hsize2)
        BN[f"rb{i}_bn2"] = _bn_params(next(keys), C)
    wt_mu, b_mu = lin(hsize2, eps_d)                  # mu_fc
    wt_lv, b_lv = lin(hsize2, eps_d)                  # logvar_fc
    W["mulv"] = jnp.concatenate([wt_mu, wt_lv], axis=1)   # (hsize2, 2*eps_d)
    Bv["mulv"] = jnp.concatenate([b_mu, b_lv])
    W["fc3"], Bv["fc3"] = lin(eps_d, hsize2)
    BN["bn3"] = _bn_params(next(keys), C)
    W["fcr3_a"], W["fcr3_b"], Bv["fcr3"] = lin_split(hsize2, hsize2, hsize2)
    BN["bn_r3"] = _bn_params(next(keys), C)
    W["fcr4_a"], W["fcr4_b"], Bv["fcr4"] = lin_split(hsize2, hsize2, hsize2)
    BN["bn_r4"] = _bn_params(next(keys), C)
    W["fc4_a"], W["fc4_b"], Bv["fc4"] = lin_split(hsize2, hsize2, hsize1)
    BN["bn4"] = _bn_params(next(keys), C)
    W["fc5"], Bv["fc5"] = lin(hsize1, n_bps)
    BN["bn5"] = _bn_params(next(keys), C)
    return {"weights": W, "biases": Bv, "bn": BN}


# ------------------------------------ main ------------------------------------

if __name__ == "__main__":
    # small shapes consistent with the module (defaults scaled down)
    B, C = 2, 1                                  # batch, n_bps_feat
    n_bps, hsize1, hsize2, eps_d = 256, 128, 128, 32

    key = jax.random.PRNGKey(0)
    kp, kx, ks0, ks1, ks2, ke = jax.random.split(key, 6)
    params = init_params(kp, n_bps, C, hsize1, hsize2, eps_d)
    x = jax.random.normal(kx, (B, C, n_bps), jnp.float32)
    scene_feat = tuple(jax.random.normal(k, (B, C, hsize2), jnp.float32)
                       for k in (ks0, ks1, ks2))
    eps = jax.random.normal(ke, (B, C, eps_d), jnp.float32)   # reparam noise

    def run(single_buffer):
        fwd = jax.jit(functools.partial(bps_cvae_forward,
                                        single_buffer_weights=single_buffer))
        res = fwd(params, x, scene_feat, eps)
        jax.block_until_ready(res)
        return res

    try:
        output, mu, logvar = run(True)
    except Exception:
        # Fallback: this JAX build rejects pl.Buffered(1) single-buffering of
        # the resident weight operands; default double-buffering still works.
        output, mu, logvar = run(False)

    assert output.shape == (B, C, n_bps)
    assert mu.shape == (B, C, eps_d)
    assert logvar.shape == (B, C, eps_d)
    assert bool(jnp.all(jnp.isfinite(output.astype(jnp.float32))))
    assert bool(jnp.all(output >= 0))            # final layer is ReLU'd, as in the spec
    print("KERNEL_OK")
</pallas_src>

<mosaic_0001>
module attributes {stable_mosaic.version = 11 : i64} {
  func.func @kernel(%arg0: i32, %arg1: memref<8x256xbf16, #tpu.memory_space<vmem>>, %arg2: memref<8x128xbf16, #tpu.memory_space<vmem>>, %arg3: memref<8x128xbf16, #tpu.memory_space<vmem>>, %arg4: memref<8x128xbf16, #tpu.memory_space<vmem>>, %arg5: memref<8x32xf32, #tpu.memory_space<vmem>>, %arg6: memref<8x32xf32, #tpu.memory_space<vmem>>, %arg7: memref<1x2240xf32, #tpu.memory_space<vmem>>, %arg8: memref<256x128xbf16, #tpu.memory_space<vmem>>, %arg9: memref<128x128xbf16, #tpu.memory_space<vmem>>, %arg10: memref<128x128xbf16, #tpu.memory_space<vmem>>, %arg11: memref<128x128xbf16, #tpu.memory_space<vmem>>, %arg12: memref<128x128xbf16, #tpu.memory_space<vmem>>, %arg13: memref<128x128xbf16, #tpu.memory_space<vmem>>, %arg14: memref<128x128xbf16, #tpu.memory_space<vmem>>, %arg15: memref<128x64xbf16, #tpu.memory_space<vmem>>, %arg16: memref<32x128xbf16, #tpu.memory_space<vmem>>, %arg17: memref<128x128xbf16, #tpu.memory_space<vmem>>, %arg18: memref<128x128xbf16, #tpu.memory_space<vmem>>, %arg19: memref<128x128xbf16, #tpu.memory_space<vmem>>, %arg20: memref<128x128xbf16, #tpu.memory_space<vmem>>, %arg21: memref<128x128xbf16, #tpu.memory_space<vmem>>, %arg22: memref<128x128xbf16, #tpu.memory_space<vmem>>, %arg23: memref<128x128xbf16, #tpu.memory_space<vmem>>, %arg24: memref<128x128xbf16, #tpu.memory_space<vmem>>, %arg25: memref<128x128xbf16, #tpu.memory_space<vmem>>, %arg26: memref<128x128xbf16, #tpu.memory_space<vmem>>, %arg27: memref<128x256xbf16, #tpu.memory_space<vmem>>, %arg28: memref<8x256xbf16, #tpu.memory_space<vmem>>, %arg29: memref<8x64xf32, #tpu.memory_space<vmem>>) attributes {dimension_semantics = [#tpu.dimension_semantics<parallel>], iteration_bounds = array<i64: 1>, scalar_prefetch = 0 : i64, scratch_operands = 0 : i64, tpu.core_type = #tpu.core_type<tc>, window_params = [{transform_indices = @transform_0, window_bounds = array<i64: 8, 256>}, {transform_indices = @transform_1, window_bounds = array<i64: 8, 128>}, {transform_indices = @transform_2, window_bounds = array<i64: 8, 128>}, {transform_indices = @transform_3, window_bounds = array<i64: 8, 128>}, {transform_indices = @transform_4, window_bounds = array<i64: 8, 32>}, {transform_indices = @transform_5, window_bounds = array<i64: 8, 32>}, {pipeline_mode = #tpu.pipeline_mode<synchronous>, transform_indices = @transform_6, window_bounds = array<i64: 1, 2240>}, {pipeline_mode = #tpu.pipeline_mode<synchronous>, transform_indices = @transform_7, window_bounds = array<i64: 256, 128>}, {pipeline_mode = #tpu.pipeline_mode<synchronous>, transform_indices = @transform_8, window_bounds = array<i64: 128, 128>}, {pipeline_mode = #tpu.pipeline_mode<synchronous>, transform_indices = @transform_9, window_bounds = array<i64: 128, 128>}, {pipeline_mode = #tpu.pipeline_mode<synchronous>, transform_indices = @transform_10, window_bounds = array<i64: 128, 128>}, {pipeline_mode = #tpu.pipeline_mode<synchronous>, transform_indices = @transform_11, window_bounds = array<i64: 128, 128>}, {pipeline_mode = #tpu.pipeline_mode<synchronous>, transform_indices = @transform_12, window_bounds = array<i64: 128, 128>}, {pipeline_mode = #tpu.pipeline_mode<synchronous>, transform_indices = @transform_13, window_bounds = array<i64: 128, 128>}, {pipeline_mode = #tpu.pipeline_mode<synchronous>, transform_indices = @transform_14, window_bounds = array<i64: 128, 64>}, {pipeline_mode = #tpu.pipeline_mode<synchronous>, transform_indices = @transform_15, window_bounds = array<i64: 32, 128>}, {pipeline_mode = #tpu.pipeline_mode<synchronous>, transform_indices = @transform_16, window_bounds = array<i64: 128, 128>}, {pipeline_mode = #tpu.pipeline_mode<synchronous>, transform_indices = @transform_17, window_bounds = array<i64: 128, 128>}, {pipeline_mode = #tpu.pipeline_mode<synchronous>, transform_indices = @transform_18, window_bounds = array<i64: 128, 128>}, {pipeline_mode = #tpu.pipeline_mode<synchronous>, transform_indices = @transform_19, window_bounds = array<i64: 128, 128>}, {pipeline_mode = #tpu.pipeline_mode<synchronous>, transform_indices = @transform_20, window_bounds = array<i64: 128, 128>}, {pipeline_mode = #tpu.pipeline_mode<synchronous>, transform_indices = @transform_21, window_bounds = array<i64: 128, 128>}, {pipeline_mode = #tpu.pipeline_mode<synchronous>, transform_indices = @transform_22, window_bounds = array<i64: 128, 128>}, {pipeline_mode = #tpu.pipeline_mode<synchronous>, transform_indices = @transform_23, window_bounds = array<i64: 128, 128>}, {pipeline_mode = #tpu.pipeline_mode<synchronous>, transform_indices = @transform_24, window_bounds = array<i64: 128, 128>}, {pipeline_mode = #tpu.pipeline_mode<synchronous>, transform_indices = @transform_25, window_bounds = array<i64: 128, 128>}, {pipeline_mode = #tpu.pipeline_mode<synchronous>, transform_indices = @transform_26, window_bounds = array<i64: 128, 256>}, {transform_indices = @transform_27, window_bounds = array<i64: 8, 256>}, {transform_indices = @transform_28, window_bounds = array<i64: 8, 64>}]} {
    %c0 = arith.constant 0 : index
    %c0_0 = arith.constant 0 : index
    %0 = vector.load %arg6[%c0, %c0_0] : memref<8x32xf32, #tpu.memory_space<vmem>>, vector<8x32xf32>
    %c0_1 = arith.constant 0 : index
    %c0_2 = arith.constant 0 : index
    %1 = vector.load %arg2[%c0_1, %c0_2] : memref<8x128xbf16, #tpu.memory_space<vmem>>, vector<8x128xbf16>
    %c0_3 = arith.constant 0 : index
    %c0_4 = arith.constant 0 : index
    %2 = vector.load %arg1[%c0_3, %c0_4] : memref<8x256xbf16, #tpu.memory_space<vmem>>, vector<8x256xbf16>
    %c0_5 = arith.constant 0 : index
    %c0_6 = arith.constant 0 : index
    %3 = vector.load %arg8[%c0_5, %c0_6] : memref<256x128xbf16, #tpu.memory_space<vmem>>, vector<256x128xbf16>
    %cst = arith.constant dense<0.000000e+00> : vector<8x128xf32>
    %4 = tpu.matmul %2, %3, %cst {dimension_numbers = #tpu.dot_dimension_numbers<[1], [0], [0], [1], [0, 0, 1, 1], [], []>} : vector<8x256xbf16>, vector<256x128xbf16>, vector<8x128xf32> -> vector<8x128xf32>
    %5 = vector.extract_strided_slice %0 {offsets = [0, 0], sizes = [8, 1], strides = [1, 1]} : vector<8x32xf32> to vector<8x1xf32>
    %6 = vector.broadcast %5 : vector<8x1xf32> to vector<8x128xf32>
    %7 = arith.mulf %4, %6 : vector<8x128xf32>
    %8 = vector.extract_strided_slice %0 {offsets = [0, 1], sizes = [8, 1], strides = [1, 1]} : vector<8x32xf32> to vector<8x1xf32>
    %c0_7 = arith.constant 0 : index
    %c128 = arith.constant 128 : index
    %9 = vector.load %arg7[%c0_7, %c128] : memref<1x2240xf32, #tpu.memory_space<vmem>>, vector<1x128xf32>
    %10 = vector.broadcast %8 : vector<8x1xf32> to vector<8x128xf32>
    %11 = vector.broadcast %9 : vector<1x128xf32> to vector<8x128xf32>
    %12 = arith.mulf %10, %11 : vector<8x128xf32>
    %c0_8 = arith.constant 0 : index
    %c0_9 = arith.constant 0 : index
    %13 = vector.load %arg7[%c0_8, %c0_9] : memref<1x2240xf32, #tpu.memory_space<vmem>>, vector<1x128xf32>
    %14 = vector.broadcast %13 : vector<1x128xf32> to vector<8x128xf32>
    %15 = arith.addf %12, %14 : vector<8x128xf32>
    %16 = arith.addf %7, %15 : vector<8x128xf32>
    %17 = vector.extract_strided_slice %0 {offsets = [0, 2], sizes = [8, 1], strides = [1, 1]} : vector<8x32xf32> to vector<8x1xf32>
    %18 = vector.broadcast %17 : vector<8x1xf32> to vector<8x128xf32>
    %19 = arith.mulf %16, %18 : vector<8x128xf32>
    %20 = vector.extract_strided_slice %0 {offsets = [0, 3], sizes = [8, 1], strides = [1, 1]} : vector<8x32xf32> to vector<8x1xf32>
    %21 = vector.broadcast %20 : vector<8x1xf32> to vector<8x128xf32>
    %22 = arith.addf %19, %21 : vector<8x128xf32>
    %cst_10 = arith.constant 0.000000e+00 : f32
    %23 = vector.broadcast %cst_10 : f32 to vector<8x128xf32>
    %24 = arith.maximumf %22, %23 : vector<8x128xf32>
    %25 = arith.truncf %24 : vector<8x128xf32> to vector<8x128xbf16>
    %c0_11 = arith.constant 0 : index
    %c0_12 = arith.constant 0 : index
    %26 = vector.load %arg9[%c0_11, %c0_12] : memref<128x128xbf16, #tpu.memory_space<vmem>>, vector<128x128xbf16>
    %cst_13 = arith.constant dense<0.000000e+00> : vector<8x128xf32>
    %27 = tpu.matmul %25, %26, %cst_13 {dimension_numbers = #tpu.dot_dimension_numbers<[1], [0], [0], [1], [0, 0, 1, 1], [], []>} : vector<8x128xbf16>, vector<128x128xbf16>, vector<8x128xf32> -> vector<8x128xf32>
    %c0_14 = arith.constant 0 : index
    %c0_15 = arith.constant 0 : index
    %28 = vector.load %arg10[%c0_14, %c0_15] : memref<128x128xbf16, #tpu.memory_space<vmem>>, vector<128x128xbf16>
    %cst_16 = arith.constant dense<0.000000e+00> : vector<8x128xf32>
    %29 = tpu.matmul %1, %28, %cst_16 {dimension_numbers = #tpu.dot_dimension_numbers<[1], [0], [0], [1], [0, 0, 1, 1], [], []>} : vector<8x128xbf16>, vector<128x128xbf16>, vector<8x128xf32> -> vector<8x128xf32>
    %30 = arith.addf %27, %29 : vector<8x128xf32>
    %c0_17 = arith.constant 0 : index
    %c256 = arith.constant 256 : index
    %31 = vector.load %arg7[%c0_17, %c256] : memref<1x2240xf32, #tpu.memory_space<vmem>>, vector<1x128xf32>
    %32 = vector.broadcast %31 : vector<1x128xf32> to vector<8x128xf32>
    %33 = arith.addf %30, %32 : vector<8x128xf32>
    %34 = vector.extract_strided_slice %0 {offsets = [0, 4], sizes = [8, 1], strides = [1, 1]} : vector<8x32xf32> to vector<8x1xf32>
    %35 = vector.broadcast %34 : vector<8x1xf32> to vector<8x128xf32>
    %36 = arith.mulf %33, %35 : vector<8x128xf32>
    %37 = vector.extract_strided_slice %0 {offsets = [0, 5], sizes = [8, 1], strides = [1, 1]} : vector<8x32xf32> to vector<8x1xf32>
    %38 = vector.broadcast %37 : vector<8x1xf32> to vector<8x128xf32>
    %39 = arith.addf %36, %38 : vector<8x128xf32>
    %cst_18 = arith.constant 0.000000e+00 : f32
    %40 = vector.broadcast %cst_18 : f32 to vector<8x128xf32>
    %41 = arith.maximumf %39, %40 : vector<8x128xf32>
    %42 = arith.truncf %41 : vector<8x128xf32> to vector<8x128xbf16>
    %c0_19 = arith.constant 0 : index
    %c0_20 = arith.constant 0 : index
    %43 = vector.load %arg11[%c0_19, %c0_20] : memref<128x128xbf16, #tpu.memory_space<vmem>>, vector<128x128xbf16>
    %cst_21 = arith.constant dense<0.000000e+00> : vector<8x128xf32>
    %44 = tpu.matmul %42, %43, %cst_21 {dimension_numbers = #tpu.dot_dimension_numbers<[1], [0], [0], [1], [0, 0, 1, 1], [], []>} : vector<8x128xbf16>, vector<128x128xbf16>, vector<8x128xf32> -> vector<8x128xf32>
    %c0_22 = arith.constant 0 : index
    %c384 = arith.constant 384 : index
    %45 = vector.load %arg7[%c0_22, %c384] : memref<1x2240xf32, #tpu.memory_space<vmem>>, vector<1x128xf32>
    %46 = vector.broadcast %45 : vector<1x128xf32> to vector<8x128xf32>
    %47 = arith.addf %44, %46 : vector<8x128xf32>
    %48 = vector.extract_strided_slice %0 {offsets = [0, 6], sizes = [8, 1], strides = [1, 1]} : vector<8x32xf32> to vector<8x1xf32>
    %49 = vector.broadcast %48 : vector<8x1xf32> to vector<8x128xf32>
    %50 = arith.mulf %47, %49 : vector<8x128xf32>
    %51 = vector.extract_strided_slice %0 {offsets = [0, 7], sizes = [8, 1], strides = [1, 1]} : vector<8x32xf32> to vector<8x1xf32>
    %52 = vector.broadcast %51 : vector<8x1xf32> to vector<8x128xf32>
    %53 = arith.addf %50, %52 : vector<8x128xf32>
    %cst_23 = arith.constant 0.000000e+00 : f32
    %54 = vector.broadcast %cst_23 : f32 to vector<8x128xf32>
    %55 = arith.maximumf %53, %54 : vector<8x128xf32>
    %56 = arith.truncf %55 : vector<8x128xf32> to vector<8x128xbf16>
    %c0_24 = arith.constant 0 : index
    %c0_25 = arith.constant 0 : index
    %57 = vector.load %arg12[%c0_24, %c0_25] : memref<128x128xbf16, #tpu.memory_space<vmem>>, vector<128x128xbf16>
    %cst_26 = arith.constant dense<0.000000e+00> : vector<8x128xf32>
    %58 = tpu.matmul %56, %57, %cst_26 {dimension_numbers = #tpu.dot_dimension_numbers<[1], [0], [0], [1], [0, 0, 1, 1], [], []>} : vector<8x128xbf16>, vector<128x128xbf16>, vector<8x128xf32> -> vector<8x128xf32>
    %c0_27 = arith.constant 0 : index
    %c512 = arith.constant 512 : index
    %59 = vector.load %arg7[%c0_27, %c512] : memref<1x2240xf32, #tpu.memory_space<vmem>>, vector<1x128xf32>
    %60 = vector.broadcast %59 : vector<1x128xf32> to vector<8x128xf32>
    %61 = arith.addf %58, %60 : vector<8x128xf32>
    %62 = vector.extract_strided_slice %0 {offsets = [0, 8], sizes = [8, 1], strides = [1, 1]} : vector<8x32xf32> to vector<8x1xf32>
    %63 = vector.broadcast %62 : vector<8x1xf32> to vector<8x128xf32>
    %64 = arith.mulf %61, %63 : vector<8x128xf32>
    %65 = vector.extract_strided_slice %0 {offsets = [0, 9], sizes = [8, 1], strides = [1, 1]} : vector<8x32xf32> to vector<8x1xf32>
    %66 = vector.broadcast %65 : vector<8x1xf32> to vector<8x128xf32>
    %67 = arith.addf %64, %66 : vector<8x128xf32>
    %68 = arith.addf %67, %41 : vector<8x128xf32>
    %cst_28 = arith.constant 0.000000e+00 : f32
    %69 = vector.broadcast %cst_28 : f32 to vector<8x128xf32>
    %70 = arith.maximumf %68, %69 : vector<8x128xf32>
    %71 = arith.truncf %70 : vector<8x128xf32> to vector<8x128xbf16>
    %c0_29 = arith.constant 0 : index
    %c0_30 = arith.constant 0 : index
    %72 = vector.load %arg13[%c0_29, %c0_30] : memref<128x128xbf16, #tpu.memory_space<vmem>>, vector<128x128xbf16>
    %cst_31 = arith.constant dense<0.000000e+00> : vector<8x128xf32>
    %73 = tpu.matmul %71, %72, %cst_31 {dimension_numbers = #tpu.dot_dimension_numbers<[1], [0], [0], [1], [0, 0, 1, 1], [], []>} : vector<8x128xbf16>, vector<128x128xbf16>, vector<8x128xf32> -> vector<8x128xf32>
    %c0_32 = arith.constant 0 : index
    %c640 = arith.constant 640 : index
    %74 = vector.load %arg7[%c0_32, %c640] : memref<1x2240xf32, #tpu.memory_space<vmem>>, vector<1x128xf32>
    %75 = vector.broadcast %74 : vector<1x128xf32> to vector<8x128xf32>
    %76 = arith.addf %73, %75 : vector<8x128xf32>
    %77 = vector.extract_strided_slice %0 {offsets = [0, 10], sizes = [8, 1], strides = [1, 1]} : vector<8x32xf32> to vector<8x1xf32>
    %78 = vector.broadcast %77 : vector<8x1xf32> to vector<8x128xf32>
    %79 = arith.mulf %76, %78 : vector<8x128xf32>
    %80 = vector.extract_strided_slice %0 {offsets = [0, 11], sizes = [8, 1], strides = [1, 1]} : vector<8x32xf32> to vector<8x1xf32>
    %81 = vector.broadcast %80 : vector<8x1xf32> to vector<8x128xf32>
    %82 = arith.addf %79, %81 : vector<8x128xf32>
    %cst_33 = arith.constant 0.000000e+00 : f32
    %83 = vector.broadcast %cst_33 : f32 to vector<8x128xf32>
    %84 = arith.maximumf %82, %83 : vector<8x128xf32>
    %85 = arith.truncf %84 : vector<8x128xf32> to vector<8x128xbf16>
    %c0_34 = arith.constant 0 : index
    %c0_35 = arith.constant 0 : index
    %86 = vector.load %arg14[%c0_34, %c0_35] : memref<128x128xbf16, #tpu.memory_space<vmem>>, vector<128x128xbf16>
    %cst_36 = arith.constant dense<0.000000e+00> : vector<8x128xf32>
    %87 = tpu.matmul %85, %86, %cst_36 {dimension_numbers = #tpu.dot_dimension_numbers<[1], [0], [0], [1], [0, 0, 1, 1], [], []>} : vector<8x128xbf16>, vector<128x128xbf16>, vector<8x128xf32> -> vector<8x128xf32>
    %c0_37 = arith.constant 0 : index
    %c768 = arith.constant 768 : index
    %88 = vector.load %arg7[%c0_37, %c768] : memref<1x2240xf32, #tpu.memory_space<vmem>>, vector<1x128xf32>
    %89 = vector.broadcast %88 : vector<1x128xf32> to vector<8x128xf32>
    %90 = arith.addf %87, %89 : vector<8x128xf32>
    %91 = vector.extract_strided_slice %0 {offsets = [0, 12], sizes = [8, 1], strides = [1, 1]} : vector<8x32xf32> to vector<8x1xf32>
    %92 = vector.broadcast %91 : vector<8x1xf32> to vector<8x128xf32>
    %93 = arith.mulf %90, %92 : vector<8x128xf32>
    %94 = vector.extract_strided_slice %0 {offsets = [0, 13], sizes = [8, 1], strides = [1, 1]} : vector<8x32xf32> to vector<8x1xf32>
    %95 = vector.broadcast %94 : vector<8x1xf32> to vector<8x128xf32>
    %96 = arith.addf %93, %95 : vector<8x128xf32>
    %97 = arith.addf %96, %70 : vector<8x128xf32>
    %cst_38 = arith.constant 0.000000e+00 : f32
    %98 = vector.broadcast %cst_38 : f32 to vector<8x128xf32>
    %99 = arith.maximumf %97, %98 : vector<8x128xf32>
    %100 = arith.truncf %99 : vector<8x128xf32> to vector<8x128xbf16>
    %c0_39 = arith.constant 0 : index
    %c0_40 = arith.constant 0 : index
    %101 = vector.load %arg15[%c0_39, %c0_40] : memref<128x64xbf16, #tpu.memory_space<vmem>>, vector<128x64xbf16>
    %cst_41 = arith.constant dense<0.000000e+00> : vector<8x64xf32>
    %102 = tpu.matmul %100, %101, %cst_41 {dimension_numbers = #tpu.dot_dimension_numbers<[1], [0], [0], [1], [0, 0, 1, 1], [], []>} : vector<8x128xbf16>, vector<128x64xbf16>, vector<8x64xf32> -> vector<8x64xf32>
    %c0_42 = arith.constant 0 : index
    %c2176 = arith.constant 2176 : index
    %103 = vector.load %arg7[%c0_42, %c2176] : memref<1x2240xf32, #tpu.memory_space<vmem>>, vector<1x64xf32>
    %104 = vector.broadcast %103 : vector<1x64xf32> to vector<8x64xf32>
    %105 = arith.addf %102, %104 : vector<8x64xf32>
    %c0_43 = arith.constant 0 : index
    %c0_44 = arith.constant 0 : index
    %106 = vector.load %arg29[%c0_43, %c0_44] : memref<8x64xf32, #tpu.memory_space<vmem>>, vector<8x64xf32>
    tpu.vector_store %arg29[%c0_43, %c0_44], %105 {strides = array<i32>} : memref<8x64xf32, #tpu.memory_space<vmem>>, vector<8x64xf32>,
    %107 = vector.extract_strided_slice %105 {offsets = [0, 0], sizes = [8, 32], strides = [1, 1]} : vector<8x64xf32> to vector<8x32xf32>
    %108 = vector.extract_strided_slice %105 {offsets = [0, 32], sizes = [8, 32], strides = [1, 1]} : vector<8x64xf32> to vector<8x32xf32>
    %c0_45 = arith.constant 0 : index
    %c0_46 = arith.constant 0 : index
    %109 = vector.load %arg5[%c0_45, %c0_46] : memref<8x32xf32, #tpu.memory_space<vmem>>, vector<8x32xf32>
    %cst_47 = arith.constant 5.000000e-01 : f32
    %110 = vector.broadcast %cst_47 : f32 to vector<8x32xf32>
    %111 = arith.mulf %110, %108 : vector<8x32xf32>
    %112 = math.exp %111 : vector<8x32xf32>
    %113 = arith.mulf %109, %112 : vector<8x32xf32>
    %114 = arith.addf %113, %107 : vector<8x32xf32>
    %115 = arith.truncf %114 : vector<8x32xf32> to vector<8x32xbf16>
    %c0_48 = arith.constant 0 : index
    %c0_49 = arith.constant 0 : index
    %116 = vector.load %arg16[%c0_48, %c0_49] : memref<32x128xbf16, #tpu.memory_space<vmem>>, vector<32x128xbf16>
    %cst_50 = arith.constant dense<0.000000e+00> : vector<8x128xf32>
    %117 = tpu.matmul %115, %116, %cst_50 {dimension_numbers = #tpu.dot_dimension_numbers<[1], [0], [0], [1], [0, 0, 1, 1], [], []>} : vector<8x32xbf16>, vector<32x128xbf16>, vector<8x128xf32> -> vector<8x128xf32>
    %c0_51 = arith.constant 0 : index
    %c896 = arith.constant 896 : index
    %118 = vector.load %arg7[%c0_51, %c896] : memref<1x2240xf32, #tpu.memory_space<vmem>>, vector<1x128xf32>
    %119 = vector.broadcast %118 : vector<1x128xf32> to vector<8x128xf32>
    %120 = arith.addf %117, %119 : vector<8x128xf32>
    %121 = vector.extract_strided_slice %0 {offsets = [0, 14], sizes = [8, 1], strides = [1, 1]} : vector<8x32xf32> to vector<8x1xf32>
    %122 = vector.broadcast %121 : vector<8x1xf32> to vector<8x128xf32>
    %123 = arith.mulf %120, %122 : vector<8x128xf32>
    %124 = vector.extract_strided_slice %0 {offsets = [0, 15], sizes = [8, 1], strides = [1, 1]} : vector<8x32xf32> to vector<8x1xf32>
    %125 = vector.broadcast %124 : vector<8x1xf32> to vector<8x128xf32>
    %126 = arith.addf %123, %125 : vector<8x128xf32>
    %cst_52 = arith.constant 0.000000e+00 : f32
    %127 = vector.broadcast %cst_52 : f32 to vector<8x128xf32>
    %128 = arith.maximumf %126, %127 : vector<8x128xf32>
    %129 = arith.truncf %128 : vector<8x128xf32> to vector<8x128xbf16>
    %c0_53 = arith.constant 0 : index
    %c0_54 = arith.constant 0 : index
    %130 = vector.load %arg17[%c0_53, %c0_54] : memref<128x128xbf16, #tpu.memory_space<vmem>>, vector<128x128xbf16>
    %cst_55 = arith.constant dense<0.000000e+00> : vector<8x128xf32>
    %131 = tpu.matmul %129, %130, %cst_55 {dimension_numbers = #tpu.dot_dimension_numbers<[1], [0], [0], [1], [0, 0, 1, 1], [], []>} : vector<8x128xbf16>, vector<128x128xbf16>, vector<8x128xf32> -> vector<8x128xf32>
    %c0_56 = arith.constant 0 : index
    %c0_57 = arith.constant 0 : index
    %132 = vector.load %arg18[%c0_56, %c0_57] : memref<128x128xbf16, #tpu.memory_space<vmem>>, vector<128x128xbf16>
    %cst_58 = arith.constant dense<0.000000e+00> : vector<8x128xf32>
    %133 = tpu.matmul %1, %132, %cst_58 {dimension_numbers = #tpu.dot_dimension_numbers<[1], [0], [0], [1], [0, 0, 1, 1], [], []>} : vector<8x128xbf16>, vector<128x128xbf16>, vector<8x128xf32> -> vector<8x128xf32>
    %134 = arith.addf %131, %133 : vector<8x128xf32>
    %c0_59 = arith.constant 0 : index
    %c1024 = arith.constant 1024 : index
    %135 = vector.load %arg7[%c0_59, %c1024] : memref<1x2240xf32, #tpu.memory_space<vmem>>, vector<1x128xf32>
    %136 = vector.broadcast %135 : vector<1x128xf32> to vector<8x128xf32>
    %137 = arith.addf %134, %136 : vector<8x128xf32>
    %138 = vector.extract_strided_slice %0 {offsets = [0, 16], sizes = [8, 1], strides = [1, 1]} : vector<8x32xf32> to vector<8x1xf32>
    %139 = vector.broadcast %138 : vector<8x1xf32> to vector<8x128xf32>
    %140 = arith.mulf %137, %139 : vector<8x128xf32>
    %141 = vector.extract_strided_slice %0 {offsets = [0, 17], sizes = [8, 1], strides = [1, 1]} : vector<8x32xf32> to vector<8x1xf32>
    %142 = vector.broadcast %141 : vector<8x1xf32> to vector<8x128xf32>
    %143 = arith.addf %140, %142 : vector<8x128xf32>
    %cst_60 = arith.constant 0.000000e+00 : f32
    %144 = vector.broadcast %cst_60 : f32 to vector<8x128xf32>
    %145 = arith.maximumf %143, %144 : vector<8x128xf32>
    %146 = arith.truncf %145 : vector<8x128xf32> to vector<8x128xbf16>
    %c0_61 = arith.constant 0 : index
    %c0_62 = arith.constant 0 : index
    %147 = vector.load %arg19[%c0_61, %c0_62] : memref<128x128xbf16, #tpu.memory_space<vmem>>, vector<128x128xbf16>
    %cst_63 = arith.constant dense<0.000000e+00> : vector<8x128xf32>
    %148 = tpu.matmul %146, %147, %cst_63 {dimension_numbers = #tpu.dot_dimension_numbers<[1], [0], [0], [1], [0, 0, 1, 1], [], []>} : vector<8x128xbf16>, vector<128x128xbf16>, vector<8x128xf32> -> vector<8x128xf32>
    %c0_64 = arith.constant 0 : index
    %c1152 = arith.constant 1152 : index
    %149 = vector.load %arg7[%c0_64, %c1152] : memref<1x2240xf32, #tpu.memory_space<vmem>>, vector<1x128xf32>
    %150 = vector.broadcast %149 : vector<1x128xf32> to vector<8x128xf32>
    %151 = arith.addf %148, %150 : vector<8x128xf32>
    %152 = vector.extract_strided_slice %0 {offsets = [0, 18], sizes = [8, 1], strides = [1, 1]} : vector<8x32xf32> to vector<8x1xf32>
    %153 = vector.broadcast %152 : vector<8x1xf32> to vector<8x128xf32>
    %154 = arith.mulf %151, %153 : vector<8x128xf32>
    %155 = vector.extract_strided_slice %0 {offsets = [0, 19], sizes = [8, 1], strides = [1, 1]} : vector<8x32xf32> to vector<8x1xf32>
    %156 = vector.broadcast %155 : vector<8x1xf32> to vector<8x128xf32>
    %157 = arith.addf %154, %156 : vector<8x128xf32>
    %cst_65 = arith.constant 0.000000e+00 : f32
    %158 = vector.broadcast %cst_65 : f32 to vector<8x128xf32>
    %159 = arith.maximumf %157, %158 : vector<8x128xf32>
    %160 = arith.truncf %159 : vector<8x128xf32> to vector<8x128xbf16>
    %c0_66 = arith.constant 0 : index
    %c0_67 = arith.constant 0 : index
    %161 = vector.load %arg20[%c0_66, %c0_67] : memref<128x128xbf16, #tpu.memory_space<vmem>>, vector<128x128xbf16>
    %cst_68 = arith.constant dense<0.000000e+00> : vector<8x128xf32>
    %162 = tpu.matmul %160, %161, %cst_68 {dimension_numbers = #tpu.dot_dimension_numbers<[1], [0], [0], [1], [0, 0, 1, 1], [], []>} : vector<8x128xbf16>, vector<128x128xbf16>, vector<8x128xf32> -> vector<8x128xf32>
    %c0_69 = arith.constant 0 : index
    %c1280 = arith.constant 1280 : index
    %163 = vector.load %arg7[%c0_69, %c1280] : memref<1x2240xf32, #tpu.memory_space<vmem>>, vector<1x128xf32>
    %164 = vector.broadcast %163 : vector<1x128xf32> to vector<8x128xf32>
    %165 = arith.addf %162, %164 : vector<8x128xf32>
    %166 = vector.extract_strided_slice %0 {offsets = [0, 20], sizes = [8, 1], strides = [1, 1]} : vector<8x32xf32> to vector<8x1xf32>
    %167 = vector.broadcast %166 : vector<8x1xf32> to vector<8x128xf32>
    %168 = arith.mulf %165, %167 : vector<8x128xf32>
    %169 = vector.extract_strided_slice %0 {offsets = [0, 21], sizes = [8, 1], strides = [1, 1]} : vector<8x32xf32> to vector<8x1xf32>
    %170 = vector.broadcast %169 : vector<8x1xf32> to vector<8x128xf32>
    %171 = arith.addf %168, %170 : vector<8x128xf32>
    %172 = arith.addf %171, %145 : vector<8x128xf32>
    %cst_70 = arith.constant 0.000000e+00 : f32
    %173 = vector.broadcast %cst_70 : f32 to vector<8x128xf32>
    %174 = arith.maximumf %172, %173 : vector<8x128xf32>
    %c0_71 = arith.constant 0 : index
    %c0_72 = arith.constant 0 : index
    %175 = vector.load %arg3[%c0_71, %c0_72] : memref<8x128xbf16, #tpu.memory_space<vmem>>, vector<8x128xbf16>
    %176 = arith.truncf %174 : vector<8x128xf32> to vector<8x128xbf16>
    %c0_73 = arith.constant 0 : index
    %c0_74 = arith.constant 0 : index
    %177 = vector.load %arg21[%c0_73, %c0_74] : memref<128x128xbf16, #tpu.memory_space<vmem>>, vector<128x128xbf16>
    %cst_75 = arith.constant dense<0.000000e+00> : vector<8x128xf32>
    %178 = tpu.matmul %176, %177, %cst_75 {dimension_numbers = #tpu.dot_dimension_numbers<[1], [0], [0], [1], [0, 0, 1, 1], [], []>} : vector<8x128xbf16>, vector<128x128xbf16>, vector<8x128xf32> -> vector<8x128xf32>
    %c0_76 = arith.constant 0 : index
    %c0_77 = arith.constant 0 : index
    %179 = vector.load %arg22[%c0_76, %c0_77] : memref<128x128xbf16, #tpu.memory_space<vmem>>, vector<128x128xbf16>
    %cst_78 = arith.constant dense<0.000000e+00> : vector<8x128xf32>
    %180 = tpu.matmul %175, %179, %cst_78 {dimension_numbers = #tpu.dot_dimension_numbers<[1], [0], [0], [1], [0, 0, 1, 1], [], []>} : vector<8x128xbf16>, vector<128x128xbf16>, vector<8x128xf32> -> vector<8x128xf32>
    %181 = arith.addf %178, %180 : vector<8x128xf32>
    %c0_79 = arith.constant 0 : index
    %c1408 = arith.constant 1408 : index
    %182 = vector.load %arg7[%c0_79, %c1408] : memref<1x2240xf32, #tpu.memory_space<vmem>>, vector<1x128xf32>
    %183 = vector.broadcast %182 : vector<1x128xf32> to vector<8x128xf32>
    %184 = arith.addf %181, %183 : vector<8x128xf32>
    %185 = vector.extract_strided_slice %0 {offsets = [0, 22], sizes = [8, 1], strides = [1, 1]} : vector<8x32xf32> to vector<8x1xf32>
    %186 = vector.broadcast %185 : vector<8x1xf32> to vector<8x128xf32>
    %187 = arith.mulf %184, %186 : vector<8x128xf32>
    %188 = vector.extract_strided_slice %0 {offsets = [0, 23], sizes = [8, 1], strides = [1, 1]} : vector<8x32xf32> to vector<8x1xf32>
    %189 = vector.broadcast %188 : vector<8x1xf32> to vector<8x128xf32>
    %190 = arith.addf %187, %189 : vector<8x128xf32>
    %cst_80 = arith.constant 0.000000e+00 : f32
    %191 = vector.broadcast %cst_80 : f32 to vector<8x128xf32>
    %192 = arith.maximumf %190, %191 : vector<8x128xf32>
    %193 = arith.truncf %192 : vector<8x128xf32> to vector<8x128xbf16>
    %c0_81 = arith.constant 0 : index
    %c0_82 = arith.constant 0 : index
    %194 = vector.load %arg23[%c0_81, %c0_82] : memref<128x128xbf16, #tpu.memory_space<vmem>>, vector<128x128xbf16>
    %cst_83 = arith.constant dense<0.000000e+00> : vector<8x128xf32>
    %195 = tpu.matmul %193, %194, %cst_83 {dimension_numbers = #tpu.dot_dimension_numbers<[1], [0], [0], [1], [0, 0, 1, 1], [], []>} : vector<8x128xbf16>, vector<128x128xbf16>, vector<8x128xf32> -> vector<8x128xf32>
    %c0_84 = arith.constant 0 : index
    %c1536 = arith.constant 1536 : index
    %196 = vector.load %arg7[%c0_84, %c1536] : memref<1x2240xf32, #tpu.memory_space<vmem>>, vector<1x128xf32>
    %197 = vector.broadcast %196 : vector<1x128xf32> to vector<8x128xf32>
    %198 = arith.addf %195, %197 : vector<8x128xf32>
    %199 = vector.extract_strided_slice %0 {offsets = [0, 24], sizes = [8, 1], strides = [1, 1]} : vector<8x32xf32> to vector<8x1xf32>
    %200 = vector.broadcast %199 : vector<8x1xf32> to vector<8x128xf32>
    %201 = arith.mulf %198, %200 : vector<8x128xf32>
    %202 = vector.extract_strided_slice %0 {offsets = [0, 25], sizes = [8, 1], strides = [1, 1]} : vector<8x32xf32> to vector<8x1xf32>
    %203 = vector.broadcast %202 : vector<8x1xf32> to vector<8x128xf32>
    %204 = arith.addf %201, %203 : vector<8x128xf32>
    %cst_85 = arith.constant 0.000000e+00 : f32
    %205 = vector.broadcast %cst_85 : f32 to vector<8x128xf32>
    %206 = arith.maximumf %204, %205 : vector<8x128xf32>
    %207 = arith.truncf %206 : vector<8x128xf32> to vector<8x128xbf16>
    %c0_86 = arith.constant 0 : index
    %c0_87 = arith.constant 0 : index
    %208 = vector.load %arg24[%c0_86, %c0_87] : memref<128x128xbf16, #tpu.memory_space<vmem>>, vector<128x128xbf16>
    %cst_88 = arith.constant dense<0.000000e+00> : vector<8x128xf32>
    %209 = tpu.matmul %207, %208, %cst_88 {dimension_numbers = #tpu.dot_dimension_numbers<[1], [0], [0], [1], [0, 0, 1, 1], [], []>} : vector<8x128xbf16>, vector<128x128xbf16>, vector<8x128xf32> -> vector<8x128xf32>
    %c0_89 = arith.constant 0 : index
    %c1664 = arith.constant 1664 : index
    %210 = vector.load %arg7[%c0_89, %c1664] : memref<1x2240xf32, #tpu.memory_space<vmem>>, vector<1x128xf32>
    %211 = vector.broadcast %210 : vector<1x128xf32> to vector<8x128xf32>
    %212 = arith.addf %209, %211 : vector<8x128xf32>
    %213 = vector.extract_strided_slice %0 {offsets = [0, 26], sizes = [8, 1], strides = [1, 1]} : vector<8x32xf32> to vector<8x1xf32>
    %214 = vector.broadcast %213 : vector<8x1xf32> to vector<8x128xf32>
    %215 = arith.mulf %212, %214 : vector<8x128xf32>
    %216 = vector.extract_strided_slice %0 {offsets = [0, 27], sizes = [8, 1], strides = [1, 1]} : vector<8x32xf32> to vector<8x1xf32>
    %217 = vector.broadcast %216 : vector<8x1xf32> to vector<8x128xf32>
    %218 = arith.addf %215, %217 : vector<8x128xf32>
    %219 = arith.addf %218, %192 : vector<8x128xf32>
    %cst_90 = arith.constant 0.000000e+00 : f32
    %220 = vector.broadcast %cst_90 : f32 to vector<8x128xf32>
    %221 = arith.maximumf %219, %220 : vector<8x128xf32>
    %c0_91 = arith.constant 0 : index
    %c0_92 = arith.constant 0 : index
    %222 = vector.load %arg4[%c0_91, %c0_92] : memref<8x128xbf16, #tpu.memory_space<vmem>>, vector<8x128xbf16>
    %223 = arith.truncf %221 : vector<8x128xf32> to vector<8x128xbf16>
    %c0_93 = arith.constant 0 : index
    %c0_94 = arith.constant 0 : index
    %224 = vector.load %arg25[%c0_93, %c0_94] : memref<128x128xbf16, #tpu.memory_space<vmem>>, vector<128x128xbf16>
    %cst_95 = arith.constant dense<0.000000e+00> : vector<8x128xf32>
    %225 = tpu.matmul %223, %224, %cst_95 {dimension_numbers = #tpu.dot_dimension_numbers<[1], [0], [0], [1], [0, 0, 1, 1], [], []>} : vector<8x128xbf16>, vector<128x128xbf16>, vector<8x128xf32> -> vector<8x128xf32>
    %c0_96 = arith.constant 0 : index
    %c0_97 = arith.constant 0 : index
    %226 = vector.load %arg26[%c0_96, %c0_97] : memref<128x128xbf16, #tpu.memory_space<vmem>>, vector<128x128xbf16>
    %cst_98 = arith.constant dense<0.000000e+00> : vector<8x128xf32>
    %227 = tpu.matmul %222, %226, %cst_98 {dimension_numbers = #tpu.dot_dimension_numbers<[1], [0], [0], [1], [0, 0, 1, 1], [], []>} : vector<8x128xbf16>, vector<128x128xbf16>, vector<8x128xf32> -> vector<8x128xf32>
    %228 = arith.addf %225, %227 : vector<8x128xf32>
    %c0_99 = arith.constant 0 : index
    %c1792 = arith.constant 1792 : index
    %229 = vector.load %arg7[%c0_99, %c1792] : memref<1x2240xf32, #tpu.memory_space<vmem>>, vector<1x128xf32>
    %230 = vector.broadcast %229 : vector<1x128xf32> to vector<8x128xf32>
    %231 = arith.addf %228, %230 : vector<8x128xf32>
    %232 = vector.extract_strided_slice %0 {offsets = [0, 28], sizes = [8, 1], strides = [1, 1]} : vector<8x32xf32> to vector<8x1xf32>
    %233 = vector.broadcast %232 : vector<8x1xf32> to vector<8x128xf32>
    %234 = arith.mulf %231, %233 : vector<8x128xf32>
    %235 = vector.extract_strided_slice %0 {offsets = [0, 29], sizes = [8, 1], strides = [1, 1]} : vector<8x32xf32> to vector<8x1xf32>
    %236 = vector.broadcast %235 : vector<8x1xf32> to vector<8x128xf32>
    %237 = arith.addf %234, %236 : vector<8x128xf32>
    %cst_100 = arith.constant 0.000000e+00 : f32
    %238 = vector.broadcast %cst_100 : f32 to vector<8x128xf32>
    %239 = arith.maximumf %237, %238 : vector<8x128xf32>
    %240 = arith.truncf %239 : vector<8x128xf32> to vector<8x128xbf16>
    %c0_101 = arith.constant 0 : index
    %c0_102 = arith.constant 0 : index
    %241 = vector.load %arg27[%c0_101, %c0_102] : memref<128x256xbf16, #tpu.memory_space<vmem>>, vector<128x256xbf16>
    %cst_103 = arith.constant dense<0.000000e+00> : vector<8x256xf32>
    %242 = tpu.matmul %240, %241, %cst_103 {dimension_numbers = #tpu.dot_dimension_numbers<[1], [0], [0], [1], [0, 0, 1, 1], [], []>} : vector<8x128xbf16>, vector<128x256xbf16>, vector<8x256xf32> -> vector<8x256xf32>
    %c0_104 = arith.constant 0 : index
    %c1920 = arith.constant 1920 : index
    %243 = vector.load %arg7[%c0_104, %c1920] : memref<1x2240xf32, #tpu.memory_space<vmem>>, vector<1x256xf32>
    %244 = vector.broadcast %243 : vector<1x256xf32> to vector<8x256xf32>
    %245 = arith.addf %242, %244 : vector<8x256xf32>
    %246 = vector.extract_strided_slice %0 {offsets = [0, 30], sizes = [8, 1], strides = [1, 1]} : vector<8x32xf32> to vector<8x1xf32>
    %247 = vector.broadcast %246 : vector<8x1xf32> to vector<8x256xf32>
    %248 = arith.mulf %245, %247 : vector<8x256xf32>
    %249 = vector.extract_strided_slice %0 {offsets = [0, 31], sizes = [8, 1], strides = [1, 1]} : vector<8x32xf32> to vector<8x1xf32>
    %250 = vector.broadcast %249 : vector<8x1xf32> to vector<8x256xf32>
    %251 = arith.addf %248, %250 : vector<8x256xf32>
    %cst_105 = arith.constant 0.000000e+00 : f32
    %252 = vector.broadcast %cst_105 : f32 to vector<8x256xf32>
    %253 = arith.maximumf %251, %252 : vector<8x256xf32>
    %254 = arith.truncf %253 : vector<8x256xf32> to vector<8x256xbf16>
    %c0_106 = arith.constant 0 : index
    %c0_107 = arith.constant 0 : index
    %255 = vector.load %arg28[%c0_106, %c0_107] : memref<8x256xbf16, #tpu.memory_space<vmem>>, vector<8x256xbf16>
    tpu.vector_store %arg28[%c0_106, %c0_107], %254 {strides = array<i32>} : memref<8x256xbf16, #tpu.memory_space<vmem>>, vector<8x256xbf16>,
    return
  }
  func.func @transform_0(%arg0: i32) -> (i32, i32) {
    %c0_i32 = arith.constant 0 : i32
    %c0_i32_0 = arith.constant 0 : i32
    return %arg0, %c0_i32 : i32, i32
  }
  func.func @transform_1(%arg0: i32) -> (i32, i32) {
    %c0_i32 = arith.constant 0 : i32
    %c0_i32_0 = arith.constant 0 : i32
    return %arg0, %c0_i32 : i32, i32
  }
  func.func @transform_2(%arg0: i32) -> (i32, i32) {
    %c0_i32 = arith.constant 0 : i32
    %c0_i32_0 = arith.constant 0 : i32
    return %arg0, %c0_i32 : i32, i32
  }
  func.func @transform_3(%arg0: i32) -> (i32, i32) {
    %c0_i32 = arith.constant 0 : i32
    %c0_i32_0 = arith.constant 0 : i32
    return %arg0, %c0_i32 : i32, i32
  }
  func.func @transform_4(%arg0: i32) -> (i32, i32) {
    %c0_i32 = arith.constant 0 : i32
    %c0_i32_0 = arith.constant 0 : i32
    return %arg0, %c0_i32 : i32, i32
  }
  func.func @transform_5(%arg0: i32) -> (i32, i32) {
    %c0_i32 = arith.constant 0 : i32
    %c0_i32_0 = arith.constant 0 : i32
    return %arg0, %c0_i32 : i32, i32
  }
  func.func @transform_6(%arg0: i32) -> (i32, i32) {
    %c0_i32 = arith.constant 0 : i32
    %c0_i32_0 = arith.constant 0 : i32
    %c0_i32_1 = arith.constant 0 : i32
    return %c0_i32, %c0_i32_0 : i32, i32
  }
  func.func @transform_7(%arg0: i32) -> (i32, i32) {
    %c0_i32 = arith.constant 0 : i32
    %c0_i32_0 = arith.constant 0 : i32
    %c0_i32_1 = arith.constant 0 : i32
    return %c0_i32, %c0_i32_0 : i32, i32
  }
  func.func @transform_8(%arg0: i32) -> (i32, i32) {
    %c0_i32 = arith.constant 0 : i32
    %c0_i32_0 = arith.constant 0 : i32
    %c0_i32_1 = arith.constant 0 : i32
    return %c0_i32, %c0_i32_0 : i32, i32
  }
  func.func @transform_9(%arg0: i32) -> (i32, i32) {
    %c0_i32 = arith.constant 0 : i32
    %c0_i32_0 = arith.constant 0 : i32
    %c0_i32_1 = arith.constant 0 : i32
    return %c0_i32, %c0_i32_0 : i32, i32
  }
  func.func @transform_10(%arg0: i32) -> (i32, i32) {
    %c0_i32 = arith.constant 0 : i32
    %c0_i32_0 = arith.constant 0 : i32
    %c0_i32_1 = arith.constant 0 : i32
    return %c0_i32, %c0_i32_0 : i32, i32
  }
  func.func @transform_11(%arg0: i32) -> (i32, i32) {
    %c0_i32 = arith.constant 0 : i32
    %c0_i32_0 = arith.constant 0 : i32
    %c0_i32_1 = arith.constant 0 : i32
    return %c0_i32, %c0_i32_0 : i32, i32
  }
  func.func @transform_12(%arg0: i32) -> (i32, i32) {
    %c0_i32 = arith.constant 0 : i32
    %c0_i32_0 = arith.constant 0 : i32
    %c0_i32_1 = arith.constant 0 : i32
    return %c0_i32, %c0_i32_0 : i32, i32
  }
  func.func @transform_13(%arg0: i32) -> (i32, i32) {
    %c0_i32 = arith.constant 0 : i32
    %c0_i32_0 = arith.constant 0 : i32
    %c0_i32_1 = arith.constant 0 : i32
    return %c0_i32, %c0_i32_0 : i32, i32
  }
  func.func @transform_14(%arg0: i32) -> (i32, i32) {
    %c0_i32 = arith.constant 0 : i32
    %c0_i32_0 = arith.constant 0 : i32
    %c0_i32_1 = arith.constant 0 : i32
    return %c0_i32, %c0_i32_0 : i32, i32
  }
  func.func @transform_15(%arg0: i32) -> (i32, i32) {
    %c0_i32 = arith.constant 0 : i32
    %c0_i32_0 = arith.constant 0 : i32
    %c0_i32_1 = arith.constant 0 : i32
    return %c0_i32, %c0_i32_0 : i32, i32
  }
  func.func @transform_16(%arg0: i32) -> (i32, i32) {
    %c0_i32 = arith.constant 0 : i32
    %c0_i32_0 = arith.constant 0 : i32
    %c0_i32_1 = arith.constant 0 : i32
    return %c0_i32, %c0_i32_0 : i32, i32
  }
  func.func @transform_17(%arg0: i32) -> (i32, i32) {
    %c0_i32 = arith.constant 0 : i32
    %c0_i32_0 = arith.constant 0 : i32
    %c0_i32_1 = arith.constant 0 : i32
    return %c0_i32, %c0_i32_0 : i32, i32
  }
  func.func @transform_18(%arg0: i32) -> (i32, i32) {
    %c0_i32 = arith.constant 0 : i32
    %c0_i32_0 = arith.constant 0 : i32
    %c0_i32_1 = arith.constant 0 : i32
    return %c0_i32, %c0_i32_0 : i32, i32
  }
  func.func @transform_19(%arg0: i32) -> (i32, i32) {
    %c0_i32 = arith.constant 0 : i32
    %c0_i32_0 = arith.constant 0 : i32
    %c0_i32_1 = arith.constant 0 : i32
    return %c0_i32, %c0_i32_0 : i32, i32
  }
  func.func @transform_20(%arg0: i32) -> (i32, i32) {
    %c0_i32 = arith.constant 0 : i32
    %c0_i32_0 = arith.constant 0 : i32
    %c0_i32_1 = arith.constant 0 : i32
    return %c0_i32, %c0_i32_0 : i32, i32
  }
  func.func @transform_21(%arg0: i32) -> (i32, i32) {
    %c0_i32 = arith.constant 0 : i32
    %c0_i32_0 = arith.constant 0 : i32
    %c0_i32_1 = arith.constant 0 : i32
    return %c0_i32, %c0_i32_0 : i32, i32
  }
  func.func @transform_22(%arg0: i32) -> (i32, i32) {
    %c0_i32 = arith.constant 0 : i32
    %c0_i32_0 = arith.constant 0 : i32
    %c0_i32_1 = arith.constant 0 : i32
    return %c0_i32, %c0_i32_0 : i32, i32
  }
  func.func @transform_23(%arg0: i32) -> (i32, i32) {
    %c0_i32 = arith.constant 0 : i32
    %c0_i32_0 = arith.constant 0 : i32
    %c0_i32_1 = arith.constant 0 : i32
    return %c0_i32, %c0_i32_0 : i32, i32
  }
  func.func @transform_24(%arg0: i32) -> (i32, i32) {
    %c0_i32 = arith.constant 0 : i32
    %c0_i32_0 = arith.constant 0 : i32
    %c0_i32_1 = arith.constant 0 : i32
    return %c0_i32, %c0_i32_0 : i32, i32
  }
  func.func @transform_25(%arg0: i32) -> (i32, i32) {
    %c0_i32 = arith.constant 0 : i32
    %c0_i32_0 = arith.constant 0 : i32
    %c0_i32_1 = arith.constant 0 : i32
    return %c0_i32, %c0_i32_0 : i32, i32
  }
  func.func @transform_26(%arg0: i32) -> (i32, i32) {
    %c0_i32 = arith.constant 0 : i32
    %c0_i32_0 = arith.constant 0 : i32
    %c0_i32_1 = arith.constant 0 : i32
    return %c0_i32, %c0_i32_0 : i32, i32
  }
  func.func @transform_27(%arg0: i32) -> (i32, i32) {
    %c0_i32 = arith.constant 0 : i32
    %c0_i32_0 = arith.constant 0 : i32
    return %arg0, %c0_i32 : i32, i32
  }
  func.func @transform_28(%arg0: i32) -> (i32, i32) {
    %c0_i32 = arith.constant 0 : i32
    %c0_i32_0 = arith.constant 0 : i32
    return %arg0, %c0_i32 : i32, i32
  }
}

module attributes {stable_mosaic.version = 11 : i64} {
  func.func @kernel(%arg0: i32, %arg1: memref<8x256xbf16, #tpu.memory_space<vmem>>, %arg2: memref<8x128xbf16, #tpu.memory_space<vmem>>, %arg3: memref<8x128xbf16, #tpu.memory_space<vmem>>, %arg4: memref<8x128xbf16, #tpu.memory_space<vmem>>, %arg5: memref<8x32xf32, #tpu.memory_space<vmem>>, %arg6: memref<8x32xf32, #tpu.memory_space<vmem>>, %arg7: memref<1x2240xf32, #tpu.memory_space<vmem>>, %arg8: memref<256x128xbf16, #tpu.memory_space<vmem>>, %arg9: memref<128x128xbf16, #tpu.memory_space<vmem>>, %arg10: memref<128x128xbf16, #tpu.memory_space<vmem>>, %arg11: memref<128x128xbf16, #tpu.memory_space<vmem>>, %arg12: memref<128x128xbf16, #tpu.memory_space<vmem>>, %arg13: memref<128x128xbf16, #tpu.memory_space<vmem>>, %arg14: memref<128x128xbf16, #tpu.memory_space<vmem>>, %arg15: memref<128x64xbf16, #tpu.memory_space<vmem>>, %arg16: memref<32x128xbf16, #tpu.memory_space<vmem>>, %arg17: memref<128x128xbf16, #tpu.memory_space<vmem>>, %arg18: memref<128x128xbf16, #tpu.memory_space<vmem>>, %arg19: memref<128x128xbf16, #tpu.memory_space<vmem>>, %arg20: memref<128x128xbf16, #tpu.memory_space<vmem>>, %arg21: memref<128x128xbf16, #tpu.memory_space<vmem>>, %arg22: memref<128x128xbf16, #tpu.memory_space<vmem>>, %arg23: memref<128x128xbf16, #tpu.memory_space<vmem>>, %arg24: memref<128x128xbf16, #tpu.memory_space<vmem>>, %arg25: memref<128x128xbf16, #tpu.memory_space<vmem>>, %arg26: memref<128x128xbf16, #tpu.memory_space<vmem>>, %arg27: memref<128x256xbf16, #tpu.memory_space<vmem>>, %arg28: memref<8x256xbf16, #tpu.memory_space<vmem>>, %arg29: memref<8x64xf32, #tpu.memory_space<vmem>>) attributes {dimension_semantics = [#tpu.dimension_semantics<parallel>], iteration_bounds = array<i64: 1>, scalar_prefetch = 0 : i64, scratch_operands = 0 : i64, tpu.core_type = #tpu.core_type<tc>, window_params = [{transform_indices = @transform_0, window_bounds = array<i64: 8, 256>}, {transform_indices = @transform_1, window_bounds = array<i64: 8, 128>}, {transform_indices = @transform_2, window_bounds = array<i64: 8, 128>}, {transform_indices = @transform_3, window_bounds = array<i64: 8, 128>}, {transform_indices = @transform_4, window_bounds = array<i64: 8, 32>}, {transform_indices = @transform_5, window_bounds = array<i64: 8, 32>}, {pipeline_mode = #tpu.pipeline_mode<synchronous>, transform_indices = @transform_6, window_bounds = array<i64: 1, 2240>}, {pipeline_mode = #tpu.pipeline_mode<synchronous>, transform_indices = @transform_7, window_bounds = array<i64: 256, 128>}, {pipeline_mode = #tpu.pipeline_mode<synchronous>, transform_indices = @transform_8, window_bounds = array<i64: 128, 128>}, {pipeline_mode = #tpu.pipeline_mode<synchronous>, transform_indices = @transform_9, window_bounds = array<i64: 128, 128>}, {pipeline_mode = #tpu.pipeline_mode<synchronous>, transform_indices = @transform_10, window_bounds = array<i64: 128, 128>}, {pipeline_mode = #tpu.pipeline_mode<synchronous>, transform_indices = @transform_11, window_bounds = array<i64: 128, 128>}, {pipeline_mode = #tpu.pipeline_mode<synchronous>, transform_indices = @transform_12, window_bounds = array<i64: 128, 128>}, {pipeline_mode = #tpu.pipeline_mode<synchronous>, transform_indices = @transform_13, window_bounds = array<i64: 128, 128>}, {pipeline_mode = #tpu.pipeline_mode<synchronous>, transform_indices = @transform_14, window_bounds = array<i64: 128, 64>}, {pipeline_mode = #tpu.pipeline_mode<synchronous>, transform_indices = @transform_15, window_bounds = array<i64: 32, 128>}, {pipeline_mode = #tpu.pipeline_mode<synchronous>, transform_indices = @transform_16, window_bounds = array<i64: 128, 128>}, {pipeline_mode = #tpu.pipeline_mode<synchronous>, transform_indices = @transform_17, window_bounds = array<i64: 128, 128>}, {pipeline_mode = #tpu.pipeline_mode<synchronous>, transform_indices = @transform_18, window_bounds = array<i64: 128, 128>}, {pipeline_mode = #tpu.pipeline_mode<synchronous>, transform_indices = @transform_19, window_bounds = array<i64: 128, 128>}, {pipeline_mode = #tpu.pipeline_mode<synchronous>, transform_indices = @transform_20, window_bounds = array<i64: 128, 128>}, {pipeline_mode = #tpu.pipeline_mode<synchronous>, transform_indices = @transform_21, window_bounds = array<i64: 128, 128>}, {pipeline_mode = #tpu.pipeline_mode<synchronous>, transform_indices = @transform_22, window_bounds = array<i64: 128, 128>}, {pipeline_mode = #tpu.pipeline_mode<synchronous>, transform_indices = @transform_23, window_bounds = array<i64: 128, 128>}, {pipeline_mode = #tpu.pipeline_mode<synchronous>, transform_indices = @transform_24, window_bounds = array<i64: 128, 128>}, {pipeline_mode = #tpu.pipeline_mode<synchronous>, transform_indices = @transform_25, window_bounds = array<i64: 128, 128>}, {pipeline_mode = #tpu.pipeline_mode<synchronous>, transform_indices = @transform_26, window_bounds = array<i64: 128, 256>}, {transform_indices = @transform_27, window_bounds = array<i64: 8, 256>}, {transform_indices = @transform_28, window_bounds = array<i64: 8, 64>}]} {
    %c0 = arith.constant 0 : index
    %c0_0 = arith.constant 0 : index
    %0 = vector.load %arg6[%c0, %c0_0] : memref<8x32xf32, #tpu.memory_space<vmem>>, vector<8x32xf32>
    %c0_1 = arith.constant 0 : index
    %c0_2 = arith.constant 0 : index
    %1 = vector.load %arg2[%c0_1, %c0_2] : memref<8x128xbf16, #tpu.memory_space<vmem>>, vector<8x128xbf16>
    %c0_3 = arith.constant 0 : index
    %c0_4 = arith.constant 0 : index
    %2 = vector.load %arg1[%c0_3, %c0_4] : memref<8x256xbf16, #tpu.memory_space<vmem>>, vector<8x256xbf16>
    %c0_5 = arith.constant 0 : index
    %c0_6 = arith.constant 0 : index
    %3 = vector.load %arg8[%c0_5, %c0_6] : memref<256x128xbf16, #tpu.memory_space<vmem>>, vector<256x128xbf16>
    %cst = arith.constant dense<0.000000e+00> : vector<8x128xf32>
    %4 = tpu.matmul %2, %3, %cst {dimension_numbers = #tpu.dot_dimension_numbers<[1], [0], [0], [1], [0, 0, 1, 1], [], []>} : vector<8x256xbf16>, vector<256x128xbf16>, vector<8x128xf32> -> vector<8x128xf32>
    %5 = vector.extract_strided_slice %0 {offsets = [0, 0], sizes = [8, 1], strides = [1, 1]} : vector<8x32xf32> to vector<8x1xf32>
    %6 = vector.broadcast %5 : vector<8x1xf32> to vector<8x128xf32>
    %7 = arith.mulf %4, %6 : vector<8x128xf32>
    %8 = vector.extract_strided_slice %0 {offsets = [0, 1], sizes = [8, 1], strides = [1, 1]} : vector<8x32xf32> to vector<8x1xf32>
    %c0_7 = arith.constant 0 : index
    %c128 = arith.constant 128 : index
    %9 = vector.load %arg7[%c0_7, %c128] : memref<1x2240xf32, #tpu.memory_space<vmem>>, vector<1x128xf32>
    %10 = vector.broadcast %8 : vector<8x1xf32> to vector<8x128xf32>
    %11 = vector.broadcast %9 : vector<1x128xf32> to vector<8x128xf32>
    %12 = arith.mulf %10, %11 : vector<8x128xf32>
    %c0_8 = arith.constant 0 : index
    %c0_9 = arith.constant 0 : index
    %13 = vector.load %arg7[%c0_8, %c0_9] : memref<1x2240xf32, #tpu.memory_space<vmem>>, vector<1x128xf32>
    %14 = vector.broadcast %13 : vector<1x128xf32> to vector<8x128xf32>
    %15 = arith.addf %12, %14 : vector<8x128xf32>
    %16 = arith.addf %7, %15 : vector<8x128xf32>
    %17 = vector.extract_strided_slice %0 {offsets = [0, 2], sizes = [8, 1], strides = [1, 1]} : vector<8x32xf32> to vector<8x1xf32>
    %18 = vector.broadcast %17 : vector<8x1xf32> to vector<8x128xf32>
    %19 = arith.mulf %16, %18 : vector<8x128xf32>
    %20 = vector.extract_strided_slice %0 {offsets = [0, 3], sizes = [8, 1], strides = [1, 1]} : vector<8x32xf32> to vector<8x1xf32>
    %21 = vector.broadcast %20 : vector<8x1xf32> to vector<8x128xf32>
    %22 = arith.addf %19, %21 : vector<8x128xf32>
    %cst_10 = arith.constant 0.000000e+00 : f32
    %23 = vector.broadcast %cst_10 : f32 to vector<8x128xf32>
    %24 = arith.maximumf %22, %23 : vector<8x128xf32>
    %25 = arith.truncf %24 : vector<8x128xf32> to vector<8x128xbf16>
    %c0_11 = arith.constant 0 : index
    %c0_12 = arith.constant 0 : index
    %26 = vector.load %arg9[%c0_11, %c0_12] : memref<128x128xbf16, #tpu.memory_space<vmem>>, vector<128x128xbf16>
    %cst_13 = arith.constant dense<0.000000e+00> : vector<8x128xf32>
    %27 = tpu.matmul %25, %26, %cst_13 {dimension_numbers = #tpu.dot_dimension_numbers<[1], [0], [0], [1], [0, 0, 1, 1], [], []>} : vector<8x128xbf16>, vector<128x128xbf16>, vector<8x128xf32> -> vector<8x128xf32>
    %c0_14 = arith.constant 0 : index
    %c0_15 = arith.constant 0 : index
    %28 = vector.load %arg10[%c0_14, %c0_15] : memref<128x128xbf16, #tpu.memory_space<vmem>>, vector<128x128xbf16>
    %cst_16 = arith.constant dense<0.000000e+00> : vector<8x128xf32>
    %29 = tpu.matmul %1, %28, %cst_16 {dimension_numbers = #tpu.dot_dimension_numbers<[1], [0], [0], [1], [0, 0, 1, 1], [], []>} : vector<8x128xbf16>, vector<128x128xbf16>, vector<8x128xf32> -> vector<8x128xf32>
    %30 = arith.addf %27, %29 : vector<8x128xf32>
    %c0_17 = arith.constant 0 : index
    %c256 = arith.constant 256 : index
    %31 = vector.load %arg7[%c0_17, %c256] : memref<1x2240xf32, #tpu.memory_space<vmem>>, vector<1x128xf32>
    %32 = vector.broadcast %31 : vector<1x128xf32> to vector<8x128xf32>
    %33 = arith.addf %30, %32 : vector<8x128xf32>
    %34 = vector.extract_strided_slice %0 {offsets = [0, 4], sizes = [8, 1], strides = [1, 1]} : vector<8x32xf32> to vector<8x1xf32>
    %35 = vector.broadcast %34 : vector<8x1xf32> to vector<8x128xf32>
    %36 = arith.mulf %33, %35 : vector<8x128xf32>
    %37 = vector.extract_strided_slice %0 {offsets = [0, 5], sizes = [8, 1], strides = [1, 1]} : vector<8x32xf32> to vector<8x1xf32>
    %38 = vector.broadcast %37 : vector<8x1xf32> to vector<8x128xf32>
    %39 = arith.addf %36, %38 : vector<8x128xf32>
    %cst_18 = arith.constant 0.000000e+00 : f32
    %40 = vector.broadcast %cst_18 : f32 to vector<8x128xf32>
    %41 = arith.maximumf %39, %40 : vector<8x128xf32>
    %42 = arith.truncf %41 : vector<8x128xf32> to vector<8x128xbf16>
    %c0_19 = arith.constant 0 : index
    %c0_20 = arith.constant 0 : index
    %43 = vector.load %arg11[%c0_19, %c0_20] : memref<128x128xbf16, #tpu.memory_space<vmem>>, vector<128x128xbf16>
    %cst_21 = arith.constant dense<0.000000e+00> : vector<8x128xf32>
    %44 = tpu.matmul %42, %43, %cst_21 {dimension_numbers = #tpu.dot_dimension_numbers<[1], [0], [0], [1], [0, 0, 1, 1], [], []>} : vector<8x128xbf16>, vector<128x128xbf16>, vector<8x128xf32> -> vector<8x128xf32>
    %c0_22 = arith.constant 0 : index
    %c384 = arith.constant 384 : index
    %45 = vector.load %arg7[%c0_22, %c384] : memref<1x2240xf32, #tpu.memory_space<vmem>>, vector<1x128xf32>
    %46 = vector.broadcast %45 : vector<1x128xf32> to vector<8x128xf32>
    %47 = arith.addf %44, %46 : vector<8x128xf32>
    %48 = vector.extract_strided_slice %0 {offsets = [0, 6], sizes = [8, 1], strides = [1, 1]} : vector<8x32xf32> to vector<8x1xf32>
    %49 = vector.broadcast %48 : vector<8x1xf32> to vector<8x128xf32>
    %50 = arith.mulf %47, %49 : vector<8x128xf32>
    %51 = vector.extract_strided_slice %0 {offsets = [0, 7], sizes = [8, 1], strides = [1, 1]} : vector<8x32xf32> to vector<8x1xf32>
    %52 = vector.broadcast %51 : vector<8x1xf32> to vector<8x128xf32>
    %53 = arith.addf %50, %52 : vector<8x128xf32>
    %cst_23 = arith.constant 0.000000e+00 : f32
    %54 = vector.broadcast %cst_23 : f32 to vector<8x128xf32>
    %55 = arith.maximumf %53, %54 : vector<8x128xf32>
    %56 = arith.truncf %55 : vector<8x128xf32> to vector<8x128xbf16>
    %c0_24 = arith.constant 0 : index
    %c0_25 = arith.constant 0 : index
    %57 = vector.load %arg12[%c0_24, %c0_25] : memref<128x128xbf16, #tpu.memory_space<vmem>>, vector<128x128xbf16>
    %cst_26 = arith.constant dense<0.000000e+00> : vector<8x128xf32>
    %58 = tpu.matmul %56, %57, %cst_26 {dimension_numbers = #tpu.dot_dimension_numbers<[1], [0], [0], [1], [0, 0, 1, 1], [], []>} : vector<8x128xbf16>, vector<128x128xbf16>, vector<8x128xf32> -> vector<8x128xf32>
    %c0_27 = arith.constant 0 : index
    %c512 = arith.constant 512 : index
    %59 = vector.load %arg7[%c0_27, %c512] : memref<1x2240xf32, #tpu.memory_space<vmem>>, vector<1x128xf32>
    %60 = vector.broadcast %59 : vector<1x128xf32> to vector<8x128xf32>
    %61 = arith.addf %58, %60 : vector<8x128xf32>
    %62 = vector.extract_strided_slice %0 {offsets = [0, 8], sizes = [8, 1], strides = [1, 1]} : vector<8x32xf32> to vector<8x1xf32>
    %63 = vector.broadcast %62 : vector<8x1xf32> to vector<8x128xf32>
    %64 = arith.mulf %61, %63 : vector<8x128xf32>
    %65 = vector.extract_strided_slice %0 {offsets = [0, 9], sizes = [8, 1], strides = [1, 1]} : vector<8x32xf32> to vector<8x1xf32>
    %66 = vector.broadcast %65 : vector<8x1xf32> to vector<8x128xf32>
    %67 = arith.addf %64, %66 : vector<8x128xf32>
    %68 = arith.addf %67, %41 : vector<8x128xf32>
    %cst_28 = arith.constant 0.000000e+00 : f32
    %69 = vector.broadcast %cst_28 : f32 to vector<8x128xf32>
    %70 = arith.maximumf %68, %69 : vector<8x128xf32>
    %71 = arith.truncf %70 : vector<8x128xf32> to vector<8x128xbf16>
    %c0_29 = arith.constant 0 : index
    %c0_30 = arith.constant 0 : index
    %72 = vector.load %arg13[%c0_29, %c0_30] : memref<128x128xbf16, #tpu.memory_space<vmem>>, vector<128x128xbf16>
    %cst_31 = arith.constant dense<0.000000e+00> : vector<8x128xf32>
    %73 = tpu.matmul %71, %72, %cst_31 {dimension_numbers = #tpu.dot_dimension_numbers<[1], [0], [0], [1], [0, 0, 1, 1], [], []>} : vector<8x128xbf16>, vector<128x128xbf16>, vector<8x128xf32> -> vector<8x128xf32>
    %c0_32 = arith.constant 0 : index
    %c640 = arith.constant 640 : index
    %74 = vector.load %arg7[%c0_32, %c640] : memref<1x2240xf32, #tpu.memory_space<vmem>>, vector<1x128xf32>
    %75 = vector.broadcast %74 : vector<1x128xf32> to vector<8x128xf32>
    %76 = arith.addf %73, %75 : vector<8x128xf32>
    %77 = vector.extract_strided_slice %0 {offsets = [0, 10], sizes = [8, 1], strides = [1, 1]} : vector<8x32xf32> to vector<8x1xf32>
    %78 = vector.broadcast %77 : vector<8x1xf32> to vector<8x128xf32>
    %79 = arith.mulf %76, %78 : vector<8x128xf32>
    %80 = vector.extract_strided_slice %0 {offsets = [0, 11], sizes = [8, 1], strides = [1, 1]} : vector<8x32xf32> to vector<8x1xf32>
    %81 = vector.broadcast %80 : vector<8x1xf32> to vector<8x128xf32>
    %82 = arith.addf %79, %81 : vector<8x128xf32>
    %cst_33 = arith.constant 0.000000e+00 : f32
    %83 = vector.broadcast %cst_33 : f32 to vector<8x128xf32>
    %84 = arith.maximumf %82, %83 : vector<8x128xf32>
    %85 = arith.truncf %84 : vector<8x128xf32> to vector<8x128xbf16>
    %c0_34 = arith.constant 0 : index
    %c0_35 = arith.constant 0 : index
    %86 = vector.load %arg14[%c0_34, %c0_35] : memref<128x128xbf16, #tpu.memory_space<vmem>>, vector<128x128xbf16>
    %cst_36 = arith.constant dense<0.000000e+00> : vector<8x128xf32>
    %87 = tpu.matmul %85, %86, %cst_36 {dimension_numbers = #tpu.dot_dimension_numbers<[1], [0], [0], [1], [0, 0, 1, 1], [], []>} : vector<8x128xbf16>, vector<128x128xbf16>, vector<8x128xf32> -> vector<8x128xf32>
    %c0_37 = arith.constant 0 : index
    %c768 = arith.constant 768 : index
    %88 = vector.load %arg7[%c0_37, %c768] : memref<1x2240xf32, #tpu.memory_space<vmem>>, vector<1x128xf32>
    %89 = vector.broadcast %88 : vector<1x128xf32> to vector<8x128xf32>
    %90 = arith.addf %87, %89 : vector<8x128xf32>
    %91 = vector.extract_strided_slice %0 {offsets = [0, 12], sizes = [8, 1], strides = [1, 1]} : vector<8x32xf32> to vector<8x1xf32>
    %92 = vector.broadcast %91 : vector<8x1xf32> to vector<8x128xf32>
    %93 = arith.mulf %90, %92 : vector<8x128xf32>
    %94 = vector.extract_strided_slice %0 {offsets = [0, 13], sizes = [8, 1], strides = [1, 1]} : vector<8x32xf32> to vector<8x1xf32>
    %95 = vector.broadcast %94 : vector<8x1xf32> to vector<8x128xf32>
    %96 = arith.addf %93, %95 : vector<8x128xf32>
    %97 = arith.addf %96, %70 : vector<8x128xf32>
    %cst_38 = arith.constant 0.000000e+00 : f32
    %98 = vector.broadcast %cst_38 : f32 to vector<8x128xf32>
    %99 = arith.maximumf %97, %98 : vector<8x128xf32>
    %100 = arith.truncf %99 : vector<8x128xf32> to vector<8x128xbf16>
    %c0_39 = arith.constant 0 : index
    %c0_40 = arith.constant 0 : index
    %101 = vector.load %arg15[%c0_39, %c0_40] : memref<128x64xbf16, #tpu.memory_space<vmem>>, vector<128x64xbf16>
    %cst_41 = arith.constant dense<0.000000e+00> : vector<8x64xf32>
    %102 = tpu.matmul %100, %101, %cst_41 {dimension_numbers = #tpu.dot_dimension_numbers<[1], [0], [0], [1], [0, 0, 1, 1], [], []>} : vector<8x128xbf16>, vector<128x64xbf16>, vector<8x64xf32> -> vector<8x64xf32>
    %c0_42 = arith.constant 0 : index
    %c2176 = arith.constant 2176 : index
    %103 = vector.load %arg7[%c0_42, %c2176] : memref<1x2240xf32, #tpu.memory_space<vmem>>, vector<1x64xf32>
    %104 = vector.broadcast %103 : vector<1x64xf32> to vector<8x64xf32>
    %105 = arith.addf %102, %104 : vector<8x64xf32>
    %c0_43 = arith.constant 0 : index
    %c0_44 = arith.constant 0 : index
    %106 = vector.load %arg29[%c0_43, %c0_44] : memref<8x64xf32, #tpu.memory_space<vmem>>, vector<8x64xf32>
    tpu.vector_store %arg29[%c0_43, %c0_44], %105 {strides = array<i32>} : memref<8x64xf32, #tpu.memory_space<vmem>>, vector<8x64xf32>,
    %107 = vector.extract_strided_slice %105 {offsets = [0, 0], sizes = [8, 32], strides = [1, 1]} : vector<8x64xf32> to vector<8x32xf32>
    %108 = vector.extract_strided_slice %105 {offsets = [0, 32], sizes = [8, 32], strides = [1, 1]} : vector<8x64xf32> to vector<8x32xf32>
    %c0_45 = arith.constant 0 : index
    %c0_46 = arith.constant 0 : index
    %109 = vector.load %arg5[%c0_45, %c0_46] : memref<8x32xf32, #tpu.memory_space<vmem>>, vector<8x32xf32>
    %cst_47 = arith.constant 5.000000e-01 : f32
    %110 = vector.broadcast %cst_47 : f32 to vector<8x32xf32>
    %111 = arith.mulf %110, %108 : vector<8x32xf32>
    %112 = math.exp %111 : vector<8x32xf32>
    %113 = arith.mulf %109, %112 : vector<8x32xf32>
    %114 = arith.addf %113, %107 : vector<8x32xf32>
    %115 = arith.truncf %114 : vector<8x32xf32> to vector<8x32xbf16>
    %c0_48 = arith.constant 0 : index
    %c0_49 = arith.constant 0 : index
    %116 = vector.load %arg16[%c0_48, %c0_49] : memref<32x128xbf16, #tpu.memory_space<vmem>>, vector<32x128xbf16>
    %cst_50 = arith.constant dense<0.000000e+00> : vector<8x128xf32>
    %117 = tpu.matmul %115, %116, %cst_50 {dimension_numbers = #tpu.dot_dimension_numbers<[1], [0], [0], [1], [0, 0, 1, 1], [], []>} : vector<8x32xbf16>, vector<32x128xbf16>, vector<8x128xf32> -> vector<8x128xf32>
    %c0_51 = arith.constant 0 : index
    %c896 = arith.constant 896 : index
    %118 = vector.load %arg7[%c0_51, %c896] : memref<1x2240xf32, #tpu.memory_space<vmem>>, vector<1x128xf32>
    %119 = vector.broadcast %118 : vector<1x128xf32> to vector<8x128xf32>
    %120 = arith.addf %117, %119 : vector<8x128xf32>
    %121 = vector.extract_strided_slice %0 {offsets = [0, 14], sizes = [8, 1], strides = [1, 1]} : vector<8x32xf32> to vector<8x1xf32>
    %122 = vector.broadcast %121 : vector<8x1xf32> to vector<8x128xf32>
    %123 = arith.mulf %120, %122 : vector<8x128xf32>
    %124 = vector.extract_strided_slice %0 {offsets = [0, 15], sizes = [8, 1], strides = [1, 1]} : vector<8x32xf32> to vector<8x1xf32>
    %125 = vector.broadcast %124 : vector<8x1xf32> to vector<8x128xf32>
    %126 = arith.addf %123, %125 : vector<8x128xf32>
    %cst_52 = arith.constant 0.000000e+00 : f32
    %127 = vector.broadcast %cst_52 : f32 to vector<8x128xf32>
    %128 = arith.maximumf %126, %127 : vector<8x128xf32>
    %129 = arith.truncf %128 : vector<8x128xf32> to vector<8x128xbf16>
    %c0_53 = arith.constant 0 : index
    %c0_54 = arith.constant 0 : index
    %130 = vector.load %arg17[%c0_53, %c0_54] : memref<128x128xbf16, #tpu.memory_space<vmem>>, vector<128x128xbf16>
    %cst_55 = arith.constant dense<0.000000e+00> : vector<8x128xf32>
    %131 = tpu.matmul %129, %130, %cst_55 {dimension_numbers = #tpu.dot_dimension_numbers<[1], [0], [0], [1], [0, 0, 1, 1], [], []>} : vector<8x128xbf16>, vector<128x128xbf16>, vector<8x128xf32> -> vector<8x128xf32>
    %c0_56 = arith.constant 0 : index
    %c0_57 = arith.constant 0 : index
    %132 = vector.load %arg18[%c0_56, %c0_57] : memref<128x128xbf16, #tpu.memory_space<vmem>>, vector<128x128xbf16>
    %cst_58 = arith.constant dense<0.000000e+00> : vector<8x128xf32>
    %133 = tpu.matmul %1, %132, %cst_58 {dimension_numbers = #tpu.dot_dimension_numbers<[1], [0], [0], [1], [0, 0, 1, 1], [], []>} : vector<8x128xbf16>, vector<128x128xbf16>, vector<8x128xf32> -> vector<8x128xf32>
    %134 = arith.addf %131, %133 : vector<8x128xf32>
    %c0_59 = arith.constant 0 : index
    %c1024 = arith.constant 1024 : index
    %135 = vector.load %arg7[%c0_59, %c1024] : memref<1x2240xf32, #tpu.memory_space<vmem>>, vector<1x128xf32>
    %136 = vector.broadcast %135 : vector<1x128xf32> to vector<8x128xf32>
    %137 = arith.addf %134, %136 : vector<8x128xf32>
    %138 = vector.extract_strided_slice %0 {offsets = [0, 16], sizes = [8, 1], strides = [1, 1]} : vector<8x32xf32> to vector<8x1xf32>
    %139 = vector.broadcast %138 : vector<8x1xf32> to vector<8x128xf32>
    %140 = arith.mulf %137, %139 : vector<8x128xf32>
    %141 = vector.extract_strided_slice %0 {offsets = [0, 17], sizes = [8, 1], strides = [1, 1]} : vector<8x32xf32> to vector<8x1xf32>
    %142 = vector.broadcast %141 : vector<8x1xf32> to vector<8x128xf32>
    %143 = arith.addf %140, %142 : vector<8x128xf32>
    %cst_60 = arith.constant 0.000000e+00 : f32
    %144 = vector.broadcast %cst_60 : f32 to vector<8x128xf32>
    %145 = arith.maximumf %143, %144 : vector<8x128xf32>
    %146 = arith.truncf %145 : vector<8x128xf32> to vector<8x128xbf16>
    %c0_61 = arith.constant 0 : index
    %c0_62 = arith.constant 0 : index
    %147 = vector.load %arg19[%c0_61, %c0_62] : memref<128x128xbf16, #tpu.memory_space<vmem>>, vector<128x128xbf16>
    %cst_63 = arith.constant dense<0.000000e+00> : vector<8x128xf32>
    %148 = tpu.matmul %146, %147, %cst_63 {dimension_numbers = #tpu.dot_dimension_numbers<[1], [0], [0], [1], [0, 0, 1, 1], [], []>} : vector<8x128xbf16>, vector<128x128xbf16>, vector<8x128xf32> -> vector<8x128xf32>
    %c0_64 = arith.constant 0 : index
    %c1152 = arith.constant 1152 : index
    %149 = vector.load %arg7[%c0_64, %c1152] : memref<1x2240xf32, #tpu.memory_space<vmem>>, vector<1x128xf32>
    %150 = vector.broadcast %149 : vector<1x128xf32> to vector<8x128xf32>
    %151 = arith.addf %148, %150 : vector<8x128xf32>
    %152 = vector.extract_strided_slice %0 {offsets = [0, 18], sizes = [8, 1], strides = [1, 1]} : vector<8x32xf32> to vector<8x1xf32>
    %153 = vector.broadcast %152 : vector<8x1xf32> to vector<8x128xf32>
    %154 = arith.mulf %151, %153 : vector<8x128xf32>
    %155 = vector.extract_strided_slice %0 {offsets = [0, 19], sizes = [8, 1], strides = [1, 1]} : vector<8x32xf32> to vector<8x1xf32>
    %156 = vector.broadcast %155 : vector<8x1xf32> to vector<8x128xf32>
    %157 = arith.addf %154, %156 : vector<8x128xf32>
    %cst_65 = arith.constant 0.000000e+00 : f32
    %158 = vector.broadcast %cst_65 : f32 to vector<8x128xf32>
    %159 = arith.maximumf %157, %158 : vector<8x128xf32>
    %160 = arith.truncf %159 : vector<8x128xf32> to vector<8x128xbf16>
    %c0_66 = arith.constant 0 : index
    %c0_67 = arith.constant 0 : index
    %161 = vector.load %arg20[%c0_66, %c0_67] : memref<128x128xbf16, #tpu.memory_space<vmem>>, vector<128x128xbf16>
    %cst_68 = arith.constant dense<0.000000e+00> : vector<8x128xf32>
    %162 = tpu.matmul %160, %161, %cst_68 {dimension_numbers = #tpu.dot_dimension_numbers<[1], [0], [0], [1], [0, 0, 1, 1], [], []>} : vector<8x128xbf16>, vector<128x128xbf16>, vector<8x128xf32> -> vector<8x128xf32>
    %c0_69 = arith.constant 0 : index
    %c1280 = arith.constant 1280 : index
    %163 = vector.load %arg7[%c0_69, %c1280] : memref<1x2240xf32, #tpu.memory_space<vmem>>, vector<1x128xf32>
    %164 = vector.broadcast %163 : vector<1x128xf32> to vector<8x128xf32>
    %165 = arith.addf %162, %164 : vector<8x128xf32>
    %166 = vector.extract_strided_slice %0 {offsets = [0, 20], sizes = [8, 1], strides = [1, 1]} : vector<8x32xf32> to vector<8x1xf32>
    %167 = vector.broadcast %166 : vector<8x1xf32> to vector<8x128xf32>
    %168 = arith.mulf %165, %167 : vector<8x128xf32>
    %169 = vector.extract_strided_slice %0 {offsets = [0, 21], sizes = [8, 1], strides = [1, 1]} : vector<8x32xf32> to vector<8x1xf32>
    %170 = vector.broadcast %169 : vector<8x1xf32> to vector<8x128xf32>
    %171 = arith.addf %168, %170 : vector<8x128xf32>
    %172 = arith.addf %171, %145 : vector<8x128xf32>
    %cst_70 = arith.constant 0.000000e+00 : f32
    %173 = vector.broadcast %cst_70 : f32 to vector<8x128xf32>
    %174 = arith.maximumf %172, %173 : vector<8x128xf32>
    %c0_71 = arith.constant 0 : index
    %c0_72 = arith.constant 0 : index
    %175 = vector.load %arg3[%c0_71, %c0_72] : memref<8x128xbf16, #tpu.memory_space<vmem>>, vector<8x128xbf16>
    %176 = arith.truncf %174 : vector<8x128xf32> to vector<8x128xbf16>
    %c0_73 = arith.constant 0 : index
    %c0_74 = arith.constant 0 : index
    %177 = vector.load %arg21[%c0_73, %c0_74] : memref<128x128xbf16, #tpu.memory_space<vmem>>, vector<128x128xbf16>
    %cst_75 = arith.constant dense<0.000000e+00> : vector<8x128xf32>
    %178 = tpu.matmul %176, %177, %cst_75 {dimension_numbers = #tpu.dot_dimension_numbers<[1], [0], [0], [1], [0, 0, 1, 1], [], []>} : vector<8x128xbf16>, vector<128x128xbf16>, vector<8x128xf32> -> vector<8x128xf32>
    %c0_76 = arith.constant 0 : index
    %c0_77 = arith.constant 0 : index
    %179 = vector.load %arg22[%c0_76, %c0_77] : memref<128x128xbf16, #tpu.memory_space<vmem>>, vector<128x128xbf16>
    %cst_78 = arith.constant dense<0.000000e+00> : vector<8x128xf32>
    %180 = tpu.matmul %175, %179, %cst_78 {dimension_numbers = #tpu.dot_dimension_numbers<[1], [0], [0], [1], [0, 0, 1, 1], [], []>} : vector<8x128xbf16>, vector<128x128xbf16>, vector<8x128xf32> -> vector<8x128xf32>
    %181 = arith.addf %178, %180 : vector<8x128xf32>
    %c0_79 = arith.constant 0 : index
    %c1408 = arith.constant 1408 : index
    %182 = vector.load %arg7[%c0_79, %c1408] : memref<1x2240xf32, #tpu.memory_space<vmem>>, vector<1x128xf32>
    %183 = vector.broadcast %182 : vector<1x128xf32> to vector<8x128xf32>
    %184 = arith.addf %181, %183 : vector<8x128xf32>
    %185 = vector.extract_strided_slice %0 {offsets = [0, 22], sizes = [8, 1], strides = [1, 1]} : vector<8x32xf32> to vector<8x1xf32>
    %186 = vector.broadcast %185 : vector<8x1xf32> to vector<8x128xf32>
    %187 = arith.mulf %184, %186 : vector<8x128xf32>
    %188 = vector.extract_strided_slice %0 {offsets = [0, 23], sizes = [8, 1], strides = [1, 1]} : vector<8x32xf32> to vector<8x1xf32>
    %189 = vector.broadcast %188 : vector<8x1xf32> to vector<8x128xf32>
    %190 = arith.addf %187, %189 : vector<8x128xf32>
    %cst_80 = arith.constant 0.000000e+00 : f32
    %191 = vector.broadcast %cst_80 : f32 to vector<8x128xf32>
    %192 = arith.maximumf %190, %191 : vector<8x128xf32>
    %193 = arith.truncf %192 : vector<8x128xf32> to vector<8x128xbf16>
    %c0_81 = arith.constant 0 : index
    %c0_82 = arith.constant 0 : index
    %194 = vector.load %arg23[%c0_81, %c0_82] : memref<128x128xbf16, #tpu.memory_space<vmem>>, vector<128x128xbf16>
    %cst_83 = arith.constant dense<0.000000e+00> : vector<8x128xf32>
    %195 = tpu.matmul %193, %194, %cst_83 {dimension_numbers = #tpu.dot_dimension_numbers<[1], [0], [0], [1], [0, 0, 1, 1], [], []>} : vector<8x128xbf16>, vector<128x128xbf16>, vector<8x128xf32> -> vector<8x128xf32>
    %c0_84 = arith.constant 0 : index
    %c1536 = arith.constant 1536 : index
    %196 = vector.load %arg7[%c0_84, %c1536] : memref<1x2240xf32, #tpu.memory_space<vmem>>, vector<1x128xf32>
    %197 = vector.broadcast %196 : vector<1x128xf32> to vector<8x128xf32>
    %198 = arith.addf %195, %197 : vector<8x128xf32>
    %199 = vector.extract_strided_slice %0 {offsets = [0, 24], sizes = [8, 1], strides = [1, 1]} : vector<8x32xf32> to vector<8x1xf32>
    %200 = vector.broadcast %199 : vector<8x1xf32> to vector<8x128xf32>
    %201 = arith.mulf %198, %200 : vector<8x128xf32>
    %202 = vector.extract_strided_slice %0 {offsets = [0, 25], sizes = [8, 1], strides = [1, 1]} : vector<8x32xf32> to vector<8x1xf32>
    %203 = vector.broadcast %202 : vector<8x1xf32> to vector<8x128xf32>
    %204 = arith.addf %201, %203 : vector<8x128xf32>
    %cst_85 = arith.constant 0.000000e+00 : f32
    %205 = vector.broadcast %cst_85 : f32 to vector<8x128xf32>
    %206 = arith.maximumf %204, %205 : vector<8x128xf32>
    %207 = arith.truncf %206 : vector<8x128xf32> to vector<8x128xbf16>
    %c0_86 = arith.constant 0 : index
    %c0_87 = arith.constant 0 : index
    %208 = vector.load %arg24[%c0_86, %c0_87] : memref<128x128xbf16, #tpu.memory_space<vmem>>, vector<128x128xbf16>
    %cst_88 = arith.constant dense<0.000000e+00> : vector<8x128xf32>
    %209 = tpu.matmul %207, %208, %cst_88 {dimension_numbers = #tpu.dot_dimension_numbers<[1], [0], [0], [1], [0, 0, 1, 1], [], []>} : vector<8x128xbf16>, vector<128x128xbf16>, vector<8x128xf32> -> vector<8x128xf32>
    %c0_89 = arith.constant 0 : index
    %c1664 = arith.constant 1664 : index
    %210 = vector.load %arg7[%c0_89, %c1664] : memref<1x2240xf32, #tpu.memory_space<vmem>>, vector<1x128xf32>
    %211 = vector.broadcast %210 : vector<1x128xf32> to vector<8x128xf32>
    %212 = arith.addf %209, %211 : vector<8x128xf32>
    %213 = vector.extract_strided_slice %0 {offsets = [0, 26], sizes = [8, 1], strides = [1, 1]} : vector<8x32xf32> to vector<8x1xf32>
    %214 = vector.broadcast %213 : vector<8x1xf32> to vector<8x128xf32>
    %215 = arith.mulf %212, %214 : vector<8x128xf32>
    %216 = vector.extract_strided_slice %0 {offsets = [0, 27], sizes = [8, 1], strides = [1, 1]} : vector<8x32xf32> to vector<8x1xf32>
    %217 = vector.broadcast %216 : vector<8x1xf32> to vector<8x128xf32>
    %218 = arith.addf %215, %217 : vector<8x128xf32>
    %219 = arith.addf %218, %192 : vector<8x128xf32>
    %cst_90 = arith.constant 0.000000e+00 : f32
    %220 = vector.broadcast %cst_90 : f32 to vector<8x128xf32>
    %221 = arith.maximumf %219, %220 : vector<8x128xf32>
    %c0_91 = arith.constant 0 : index
    %c0_92 = arith.constant 0 : index
    %222 = vector.load %arg4[%c0_91, %c0_92] : memref<8x128xbf16, #tpu.memory_space<vmem>>, vector<8x128xbf16>
    %223 = arith.truncf %221 : vector<8x128xf32> to vector<8x128xbf16>
    %c0_93 = arith.constant 0 : index
    %c0_94 = arith.constant 0 : index
    %224 = vector.load %arg25[%c0_93, %c0_94] : memref<128x128xbf16, #tpu.memory_space<vmem>>, vector<128x128xbf16>
    %cst_95 = arith.constant dense<0.000000e+00> : vector<8x128xf32>
    %225 = tpu.matmul %223, %224, %cst_95 {dimension_numbers = #tpu.dot_dimension_numbers<[1], [0], [0], [1], [0, 0, 1, 1], [], []>} : vector<8x128xbf16>, vector<128x128xbf16>, vector<8x128xf32> -> vector<8x128xf32>
    %c0_96 = arith.constant 0 : index
    %c0_97 = arith.constant 0 : index
    %226 = vector.load %arg26[%c0_96, %c0_97] : memref<128x128xbf16, #tpu.memory_space<vmem>>, vector<128x128xbf16>
    %cst_98 = arith.constant dense<0.000000e+00> : vector<8x128xf32>
    %227 = tpu.matmul %222, %226, %cst_98 {dimension_numbers = #tpu.dot_dimension_numbers<[1], [0], [0], [1], [0, 0, 1, 1], [], []>} : vector<8x128xbf16>, vector<128x128xbf16>, vector<8x128xf32> -> vector<8x128xf32>
    %228 = arith.addf %225, %227 : vector<8x128xf32>
    %c0_99 = arith.constant 0 : index
    %c1792 = arith.constant 1792 : index
    %229 = vector.load %arg7[%c0_99, %c1792] : memref<1x2240xf32, #tpu.memory_space<vmem>>, vector<1x128xf32>
    %230 = vector.broadcast %229 : vector<1x128xf32> to vector<8x128xf32>
    %231 = arith.addf %228, %230 : vector<8x128xf32>
    %232 = vector.extract_strided_slice %0 {offsets = [0, 28], sizes = [8, 1], strides = [1, 1]} : vector<8x32xf32> to vector<8x1xf32>
    %233 = vector.broadcast %232 : vector<8x1xf32> to vector<8x128xf32>
    %234 = arith.mulf %231, %233 : vector<8x128xf32>
    %235 = vector.extract_strided_slice %0 {offsets = [0, 29], sizes = [8, 1], strides = [1, 1]} : vector<8x32xf32> to vector<8x1xf32>
    %236 = vector.broadcast %235 : vector<8x1xf32> to vector<8x128xf32>
    %237 = arith.addf %234, %236 : vector<8x128xf32>
    %cst_100 = arith.constant 0.000000e+00 : f32
    %238 = vector.broadcast %cst_100 : f32 to vector<8x128xf32>
    %239 = arith.maximumf %237, %238 : vector<8x128xf32>
    %240 = arith.truncf %239 : vector<8x128xf32> to vector<8x128xbf16>
    %c0_101 = arith.constant 0 : index
    %c0_102 = arith.constant 0 : index
    %241 = vector.load %arg27[%c0_101, %c0_102] : memref<128x256xbf16, #tpu.memory_space<vmem>>, vector<128x256xbf16>
    %cst_103 = arith.constant dense<0.000000e+00> : vector<8x256xf32>
    %242 = tpu.matmul %240, %241, %cst_103 {dimension_numbers = #tpu.dot_dimension_numbers<[1], [0], [0], [1], [0, 0, 1, 1], [], []>} : vector<8x128xbf16>, vector<128x256xbf16>, vector<8x256xf32> -> vector<8x256xf32>
    %c0_104 = arith.constant 0 : index
    %c1920 = arith.constant 1920 : index
    %243 = vector.load %arg7[%c0_104, %c1920] : memref<1x2240xf32, #tpu.memory_space<vmem>>, vector<1x256xf32>
    %244 = vector.broadcast %243 : vector<1x256xf32> to vector<8x256xf32>
    %245 = arith.addf %242, %244 : vector<8x256xf32>
    %246 = vector.extract_strided_slice %0 {offsets = [0, 30], sizes = [8, 1], strides = [1, 1]} : vector<8x32xf32> to vector<8x1xf32>
    %247 = vector.broadcast %246 : vector<8x1xf32> to vector<8x256xf32>
    %248 = arith.mulf %245, %247 : vector<8x256xf32>
    %249 = vector.extract_strided_slice %0 {offsets = [0, 31], sizes = [8, 1], strides = [1, 1]} : vector<8x32xf32> to vector<8x1xf32>
    %250 = vector.broadcast %249 : vector<8x1xf32> to vector<8x256xf32>
    %251 = arith.addf %248, %250 : vector<8x256xf32>
    %cst_105 = arith.constant 0.000000e+00 : f32
    %252 = vector.broadcast %cst_105 : f32 to vector<8x256xf32>
    %253 = arith.maximumf %251, %252 : vector<8x256xf32>
    %254 = arith.truncf %253 : vector<8x256xf32> to vector<8x256xbf16>
    %c0_106 = arith.constant 0 : index
    %c0_107 = arith.constant 0 : index
    %255 = vector.load %arg28[%c0_106, %c0_107] : memref<8x256xbf16, #tpu.memory_space<vmem>>, vector<8x256xbf16>
    tpu.vector_store %arg28[%c0_106, %c0_107], %254 {strides = array<i32>} : memref<8x256xbf16, #tpu.memory_space<vmem>>, vector<8x256xbf16>,
    return
  }
  func.func @transform_0(%arg0: i32) -> (i32, i32) {
    %c0_i32 = arith.constant 0 : i32
    %c0_i32_0 = arith.constant 0 : i32
    return %arg0, %c0_i32 : i32, i32
  }
  func.func @transform_1(%arg0: i32) -> (i32, i32) {
    %c0_i32 = arith.constant 0 : i32
    %c0_i32_0 = arith.constant 0 : i32
    return %arg0, %c0_i32 : i32, i32
  }
  func.func @transform_2(%arg0: i32) -> (i32, i32) {
    %c0_i32 = arith.constant 0 : i32
    %c0_i32_0 = arith.constant 0 : i32
    return %arg0, %c0_i32 : i32, i32
  }
  func.func @transform_3(%arg0: i32) -> (i32, i32) {
    %c0_i32 = arith.constant 0 : i32
    %c0_i32_0 = arith.constant 0 : i32
    return %arg0, %c0_i32 : i32, i32
  }
  func.func @transform_4(%arg0: i32) -> (i32, i32) {
    %c0_i32 = arith.constant 0 : i32
    %c0_i32_0 = arith.constant 0 : i32
    return %arg0, %c0_i32 : i32, i32
  }
  func.func @transform_5(%arg0: i32) -> (i32, i32) {
    %c0_i32 = arith.constant 0 : i32
    %c0_i32_0 = arith.constant 0 : i32
    return %arg0, %c0_i32 : i32, i32
  }
  func.func @transform_6(%arg0: i32) -> (i32, i32) {
    %c0_i32 = arith.constant 0 : i32
    %c0_i32_0 = arith.constant 0 : i32
    %c0_i32_1 = arith.constant 0 : i32
    return %c0_i32, %c0_i32_0 : i32, i32
  }
  func.func @transform_7(%arg0: i32) -> (i32, i32) {
    %c0_i32 = arith.constant 0 : i32
    %c0_i32_0 = arith.constant 0 : i32
    %c0_i32_1 = arith.constant 0 : i32
    return %c0_i32, %c0_i32_0 : i32, i32
  }
  func.func @transform_8(%arg0: i32) -> (i32, i32) {
    %c0_i32 = arith.constant 0 : i32
    %c0_i32_0 = arith.constant 0 : i32
    %c0_i32_1 = arith.constant 0 : i32
    return %c0_i32, %c0_i32_0 : i32, i32
  }
  func.func @transform_9(%arg0: i32) -> (i32, i32) {
    %c0_i32 = arith.constant 0 : i32
    %c0_i32_0 = arith.constant 0 : i32
    %c0_i32_1 = arith.constant 0 : i32
    return %c0_i32, %c0_i32_0 : i32, i32
  }
  func.func @transform_10(%arg0: i32) -> (i32, i32) {
    %c0_i32 = arith.constant 0 : i32
    %c0_i32_0 = arith.constant 0 : i32
    %c0_i32_1 = arith.constant 0 : i32
    return %c0_i32, %c0_i32_0 : i32, i32
  }
  func.func @transform_11(%arg0: i32) -> (i32, i32) {
    %c0_i32 = arith.constant 0 : i32
    %c0_i32_0 = arith.constant 0 : i32
    %c0_i32_1 = arith.constant 0 : i32
    return %c0_i32, %c0_i32_0 : i32, i32
  }
  func.func @transform_12(%arg0: i32) -> (i32, i32) {
    %c0_i32 = arith.constant 0 : i32
    %c0_i32_0 = arith.constant 0 : i32
    %c0_i32_1 = arith.constant 0 : i32
    return %c0_i32, %c0_i32_0 : i32, i32
  }
  func.func @transform_13(%arg0: i32) -> (i32, i32) {
    %c0_i32 = arith.constant 0 : i32
    %c0_i32_0 = arith.constant 0 : i32
    %c0_i32_1 = arith.constant 0 : i32
    return %c0_i32, %c0_i32_0 : i32, i32
  }
  func.func @transform_14(%arg0: i32) -> (i32, i32) {
    %c0_i32 = arith.constant 0 : i32
    %c0_i32_0 = arith.constant 0 : i32
    %c0_i32_1 = arith.constant 0 : i32
    return %c0_i32, %c0_i32_0 : i32, i32
  }
  func.func @transform_15(%arg0: i32) -> (i32, i32) {
    %c0_i32 = arith.constant 0 : i32
    %c0_i32_0 = arith.constant 0 : i32
    %c0_i32_1 = arith.constant 0 : i32
    return %c0_i32, %c0_i32_0 : i32, i32
  }
  func.func @transform_16(%arg0: i32) -> (i32, i32) {
    %c0_i32 = arith.constant 0 : i32
    %c0_i32_0 = arith.constant 0 : i32
    %c0_i32_1 = arith.constant 0 : i32
    return %c0_i32, %c0_i32_0 : i32, i32
  }
  func.func @transform_17(%arg0: i32) -> (i32, i32) {
    %c0_i32 = arith.constant 0 : i32
    %c0_i32_0 = arith.constant 0 : i32
    %c0_i32_1 = arith.constant 0 : i32
    return %c0_i32, %c0_i32_0 : i32, i32
  }
  func.func @transform_18(%arg0: i32) -> (i32, i32) {
    %c0_i32 = arith.constant 0 : i32
    %c0_i32_0 = arith.constant 0 : i32
    %c0_i32_1 = arith.constant 0 : i32
    return %c0_i32, %c0_i32_0 : i32, i32
  }
  func.func @transform_19(%arg0: i32) -> (i32, i32) {
    %c0_i32 = arith.constant 0 : i32
    %c0_i32_0 = arith.constant 0 : i32
    %c0_i32_1 = arith.constant 0 : i32
    return %c0_i32, %c0_i32_0 : i32, i32
  }
  func.func @transform_20(%arg0: i32) -> (i32, i32) {
    %c0_i32 = arith.constant 0 : i32
    %c0_i32_0 = arith.constant 0 : i32
    %c0_i32_1 = arith.constant 0 : i32
    return %c0_i32, %c0_i32_0 : i32, i32
  }
  func.func @transform_21(%arg0: i32) -> (i32, i32) {
    %c0_i32 = arith.constant 0 : i32
    %c0_i32_0 = arith.constant 0 : i32
    %c0_i32_1 = arith.constant 0 : i32
    return %c0_i32, %c0_i32_0 : i32, i32
  }
  func.func @transform_22(%arg0: i32) -> (i32, i32) {
    %c0_i32 = arith.constant 0 : i32
    %c0_i32_0 = arith.constant 0 : i32
    %c0_i32_1 = arith.constant 0 : i32
    return %c0_i32, %c0_i32_0 : i32, i32
  }
  func.func @transform_23(%arg0: i32) -> (i32, i32) {
    %c0_i32 = arith.constant 0 : i32
    %c0_i32_0 = arith.constant 0 : i32
    %c0_i32_1 = arith.constant 0 : i32
    return %c0_i32, %c0_i32_0 : i32, i32
  }
  func.func @transform_24(%arg0: i32) -> (i32, i32) {
    %c0_i32 = arith.constant 0 : i32
    %c0_i32_0 = arith.constant 0 : i32
    %c0_i32_1 = arith.constant 0 : i32
    return %c0_i32, %c0_i32_0 : i32, i32
  }
  func.func @transform_25(%arg0: i32) -> (i32, i32) {
    %c0_i32 = arith.constant 0 : i32
    %c0_i32_0 = arith.constant 0 : i32
    %c0_i32_1 = arith.constant 0 : i32
    return %c0_i32, %c0_i32_0 : i32, i32
  }
  func.func @transform_26(%arg0: i32) -> (i32, i32) {
    %c0_i32 = arith.constant 0 : i32
    %c0_i32_0 = arith.constant 0 : i32
    %c0_i32_1 = arith.constant 0 : i32
    return %c0_i32, %c0_i32_0 : i32, i32
  }
  func.func @transform_27(%arg0: i32) -> (i32, i32) {
    %c0_i32 = arith.constant 0 : i32
    %c0_i32_0 = arith.constant 0 : i32
    return %arg0, %c0_i32 : i32, i32
  }
  func.func @transform_28(%arg0: i32) -> (i32, i32) {
    %c0_i32 = arith.constant 0 : i32
    %c0_i32_0 = arith.constant 0 : i32
    return %arg0, %c0_i32 : i32, i32
  }
}

</mosaic_0001>

<llo_original>
// kernel: tile.131
$region0: #{tile.131}
  #allocation0 [shape = 's32[1]{0}', space=sflag, size = 0x4, scoped, tag = 'scoped memory for tile.131']
  %s0 = inlined_call_operand.<no memory space> [shape: f32[], index: 0, kind: input, shape index: {}]
  %s1 = inlined_call_operand.vmem [shape: f32[2,1], index: 1, kind: output, shape index: {}]
  %v2 = vstv %s0
  %3 = vst [vmem:[%s1] sm:$0x3] %v2

// kernel: custom-call
$region0: #{custom-call}
  %s0 = inlined_call_operand.vmem [shape: f32[2240], index: 0, kind: output, shape index: {}]

// kernel: bps_cvae_forward.1
$region0: #{bps_cvae_forward.1}
  #allocation0 [shape = 'u32[]', space=smem, size = 0x4, offset = 0x4, fixed_abs, tag = 'smem constant byte address 0x4 - core index']
  #allocation1 [shape = 'u32[72,128]{1,0:T(1,128)}', space=vmem, size = 0x9000, scoped, tag = 'internal scratch']
  %s0 = inlined_call_operand.vmem [shape: bf16[8,256], index: 0, kind: input, shape index: {}]
  %s1 = inlined_call_operand.vmem [shape: bf16[8,128], index: 1, kind: input, shape index: {}]
  %s2 = inlined_call_operand.vmem [shape: bf16[8,128], index: 2, kind: input, shape index: {}]
  %s3 = inlined_call_operand.vmem [shape: bf16[8,128], index: 3, kind: input, shape index: {}]
  %s4 = inlined_call_operand.vmem [shape: f32[8,32], index: 4, kind: input, shape index: {}]
  %s5 = inlined_call_operand.vmem [shape: f32[8,32], index: 5, kind: input, shape index: {}]
  %s6 = inlined_call_operand.vmem [shape: f32[1,2240], index: 6, kind: input, shape index: {}]
  %s7 = inlined_call_operand.vmem [shape: bf16[256,128], index: 7, kind: input, shape index: {}]
  %s8 = inlined_call_operand.vmem [shape: bf16[128,128], index: 8, kind: input, shape index: {}]
  %s9 = inlined_call_operand.vmem [shape: bf16[128,128], index: 9, kind: input, shape index: {}]
  %s10 = inlined_call_operand.vmem [shape: bf16[128,128], index: 10, kind: input, shape index: {}]
  %s11 = inlined_call_operand.vmem [shape: bf16[128,128], index: 11, kind: input, shape index: {}]
  %s12 = inlined_call_operand.hbm [shape: bf16[128,128], index: 12, kind: input, shape index: {}]
  %s13 = inlined_call_operand.hbm [shape: bf16[128,128], index: 13, kind: input, shape index: {}]
  %s14 = inlined_call_operand.vmem [shape: bf16[128,64], index: 14, kind: input, shape index: {}]
  %s15 = inlined_call_operand.hbm [shape: bf16[32,128], index: 15, kind: input, shape index: {}]
  %s16 = inlined_call_operand.hbm [shape: bf16[128,128], index: 16, kind: input, shape index: {}]
  %s17 = inlined_call_operand.hbm [shape: bf16[128,128], index: 17, kind: input, shape index: {}]
  %s18 = inlined_call_operand.hbm [shape: bf16[128,128], index: 18, kind: input, shape index: {}]
  %s19 = inlined_call_operand.hbm [shape: bf16[128,128], index: 19, kind: input, shape index: {}]
  %s20 = inlined_call_operand.hbm [shape: bf16[128,128], index: 20, kind: input, shape index: {}]
  %s21 = inlined_call_operand.hbm [shape: bf16[128,128], index: 21, kind: input, shape index: {}]
  %s22 = inlined_call_operand.hbm [shape: bf16[128,128], index: 22, kind: input, shape index: {}]
  %s23 = inlined_call_operand.hbm [shape: bf16[128,128], index: 23, kind: input, shape index: {}]
  %s24 = inlined_call_operand.hbm [shape: bf16[128,128], index: 24, kind: input, shape index: {}]
  %s25 = inlined_call_operand.hbm [shape: bf16[128,128], index: 25, kind: input, shape index: {}]
  %s26 = inlined_call_operand.vmem [shape: bf16[128,256], index: 26, kind: input, shape index: {}]
  %s27 = inlined_call_operand.vmem [shape: bf16[8,256], index: 27, kind: output, shape index: {0}]
  %s28 = inlined_call_operand.vmem [shape: f32[8,64], index: 28, kind: output, shape index: {1}]
  %29 = xla_tuple %s27, %s28
  %s30 = sld [smem:[#allocation0]]
  $region178: #{bps_cvae_forward.1} parent=0
    _
  %s32 = ssub.s32 1, %s30
  %s33 = scalar_select 0, %s32, %s30
  $region1: #{bps_cvae_forward.1} parent=0
    #allocation2 [shape = 'u8[32768]{0}', space=vmem, size = 0x8000, scoped, tag = 'input window, operand 12, single buffered']
    #allocation3 [shape = 's32[1]{0}', space=sflag, size = 0x4, scoped, tag = 'scoped memory for bps_cvae_forward.1']
    #allocation4 [shape = 'u8[32768]{0}', space=vmem, size = 0x8000, scoped, tag = 'input window, operand 13, single buffered']
    #allocation5 [shape = 's32[1]{0}', space=sflag, size = 0x4, scoped, tag = 'scoped memory for bps_cvae_forward.1']
    #allocation6 [shape = 'u8[8192]{0}', space=vmem, size = 0x2000, scoped, tag = 'input window, operand 15, single buffered']
    #allocation7 [shape = 'u8[32768]{0}', space=vmem, size = 0x8000, scoped, tag = 'input window, operand 16, single buffered']
    #allocation8 [shape = 's32[1]{0}', space=sflag, size = 0x4, scoped, tag = 'scoped memory for bps_cvae_forward.1']
    #allocation9 [shape = 'u8[32768]{0}', space=vmem, size = 0x8000, scoped, tag = 'input window, operand 17, single buffered']
    #allocation10 [shape = 'u8[32768]{0}', space=vmem, size = 0x8000, scoped, tag = 'input window, operand 18, single buffered']
    #allocation11 [shape = 's32[1]{0}', space=sflag, size = 0x4, scoped, tag = 'scoped memory for bps_cvae_forward.1']
    #allocation12 [shape = 'u8[32768]{0}', space=vmem, size = 0x8000, scoped, tag = 'input window, operand 19, single buffered']
    #allocation13 [shape = 'u8[32768]{0}', space=vmem, size = 0x8000, scoped, tag = 'input window, operand 20, single buffered']
    #allocation14 [shape = 's32[1]{0}', space=sflag, size = 0x4, scoped, tag = 'scoped memory for bps_cvae_forward.1']
    #allocation15 [shape = 'u8[32768]{0}', space=vmem, size = 0x8000, scoped, tag = 'input window, operand 21, single buffered']
    #allocation16 [shape = 'u8[32768]{0}', space=vmem, size = 0x8000, scoped, tag = 'input window, operand 22, single buffered']
    #allocation17 [shape = 's32[1]{0}', space=sflag, size = 0x4, scoped, tag = 'scoped memory for bps_cvae_forward.1']
    #allocation18 [shape = 'u8[32768]{0}', space=vmem, size = 0x8000, scoped, tag = 'input window, operand 23, single buffered']
    #allocation19 [shape = 'u8[32768]{0}', space=vmem, size = 0x8000, scoped, tag = 'input window, operand 24, single buffered']
    #allocation20 [shape = 's32[1]{0}', space=sflag, size = 0x4, scoped, tag = 'scoped memory for bps_cvae_forward.1']
    #allocation21 [shape = 'u8[32768]{0}', space=vmem, size = 0x8000, scoped, tag = 'input window, operand 25, single buffered']
    %34 = vsyncpa [#allocation3], 0
    %35 = vsyncpa [#allocation5], 0
    %36 = vsyncpa [#allocation8], 0
    %37 = vsyncpa [#allocation11], 0
    %38 = vsyncpa [#allocation14], 0
    %39 = vsyncpa [#allocation17], 0
    %40 = vsyncpa [#allocation20], 0
    // Predicated region
    $region2: #{bps_cvae_forward.1} parent=1 // pred_check
      _
    $region3: #{bps_cvae_forward.1} parent=1 // pred_check_branch
      %42 = sbr.rel (0) target = $region5
    $region4: #{bps_cvae_forward.1} parent=1 // pred_region
      _
    $region5: #{bps_cvae_forward.1} parent=1 // pred_fallthru
      _
    // Predicated region
    $region6: #{bps_cvae_forward.1} parent=1 // pred_check
      _
    $region7: #{bps_cvae_forward.1} parent=1 // pred_check_branch
      %44 = sbr.rel (0) target = $region9
    $region8: #{bps_cvae_forward.1} parent=1 // pred_region
      _
    $region9: #{bps_cvae_forward.1} parent=1 // pred_fallthru
      _
    // Predicated region
    $region10: #{bps_cvae_forward.1} parent=1 // pred_check
      _
    $region11: #{bps_cvae_forward.1} parent=1 // pred_check_branch
      %46 = sbr.rel (0) target = $region13
    $region12: #{bps_cvae_forward.1} parent=1 // pred_region
      _
    $region13: #{bps_cvae_forward.1} parent=1 // pred_fallthru
      _
    // Predicated region
    $region14: #{bps_cvae_forward.1} parent=1 // pred_check
      _
    $region15: #{bps_cvae_forward.1} parent=1 // pred_check_branch
      %48 = sbr.rel (0) target = $region17
    $region16: #{bps_cvae_forward.1} parent=1 // pred_region
      _
    $region17: #{bps_cvae_forward.1} parent=1 // pred_fallthru
      _
    // Predicated region
    $region18: #{bps_cvae_forward.1} parent=1 // pred_check
      _
    $region19: #{bps_cvae_forward.1} parent=1 // pred_check_branch
      %50 = sbr.rel (0) target = $region21
    $region20: #{bps_cvae_forward.1} parent=1 // pred_region
      _
    $region21: #{bps_cvae_forward.1} parent=1 // pred_fallthru
      _
    // Predicated region
    $region22: #{bps_cvae_forward.1} parent=1 // pred_check
      _
    $region23: #{bps_cvae_forward.1} parent=1 // pred_check_branch
      %52 = sbr.rel (0) target = $region25
    $region24: #{bps_cvae_forward.1} parent=1 // pred_region
      _
    $region25: #{bps_cvae_forward.1} parent=1 // pred_fallthru
      _
    // Predicated region
    $region26: #{bps_cvae_forward.1} parent=1 // pred_check
      _
    $region27: #{bps_cvae_forward.1} parent=1 // pred_check_branch
      %54 = sbr.rel (0) target = $region29
    $region28: #{bps_cvae_forward.1} parent=1 // pred_region
      _
    $region29: #{bps_cvae_forward.1} parent=1 // pred_fallthru
      _
    // Predicated region
    $region30: #{bps_cvae_forward.1} parent=1 // pred_check
      _
    $region31: #{bps_cvae_forward.1} parent=1 // pred_check_branch
      %56 = sbr.rel (0) target = $region33
    $region32: #{bps_cvae_forward.1} parent=1 // pred_region
      _
    $region33: #{bps_cvae_forward.1} parent=1 // pred_fallthru
      _
    // Predicated region
    $region34: #{bps_cvae_forward.1} parent=1 // pred_check
      _
    $region35: #{bps_cvae_forward.1} parent=1 // pred_check_branch
      %58 = sbr.rel (0) target = $region37
    $region36: #{bps_cvae_forward.1} parent=1 // pred_region
      _
    $region37: #{bps_cvae_forward.1} parent=1 // pred_fallthru
      _
    // Predicated region
    $region38: #{bps_cvae_forward.1} parent=1 // pred_check
      _
    $region39: #{bps_cvae_forward.1} parent=1 // pred_check_branch
      %60 = sbr.rel (0) target = $region41
    $region40: #{bps_cvae_forward.1} parent=1 // pred_region
      _
    $region41: #{bps_cvae_forward.1} parent=1 // pred_fallthru
      _
    // Predicated region
    $region42: #{bps_cvae_forward.1} parent=1 // pred_check
      _
    $region43: #{bps_cvae_forward.1} parent=1 // pred_check_branch
      %62 = sbr.rel (0) target = $region45
    $region44: #{bps_cvae_forward.1} parent=1 // pred_region
      _
    $region45: #{bps_cvae_forward.1} parent=1 // pred_fallthru
      _
    // Predicated region
    $region46: #{bps_cvae_forward.1} parent=1 // pred_check
      _
    $region47: #{bps_cvae_forward.1} parent=1 // pred_check_branch
      %64 = sbr.rel (0) target = $region49
    $region48: #{bps_cvae_forward.1} parent=1 // pred_region
      _
    $region49: #{bps_cvae_forward.1} parent=1 // pred_fallthru
      _
    // Predicated region
    $region50: #{bps_cvae_forward.1} parent=1 // pred_check
      _
    $region51: #{bps_cvae_forward.1} parent=1 // pred_check_branch
      %66 = sbr.rel (0) target = $region53
    $region52: #{bps_cvae_forward.1} parent=1 // pred_region
      %68 = vsyncadd [#allocation3], 0
      %s69 = sshll.u32 %s12, 4
      %s70 = int_to_ptr.hbm [resolvable:$true] %s69
      %s71 = sshll.u32 [#allocation2], 4
      %s72 = int_to_ptr.vmem [resolvable:$true] %s71
      %77 = dma.hbm_to_vmem [thread:$0]  %s70, 1024, %s72, [#allocation3], 64, 64, 4
    $region53: #{bps_cvae_forward.1} parent=1 // pred_fallthru
      _
    // Predicated region
    $region54: #{bps_cvae_forward.1} parent=1 // pred_check
      _
    $region55: #{bps_cvae_forward.1} parent=1 // pred_check_branch
      %79 = sbr.rel (0) target = $region57
    $region56: #{bps_cvae_forward.1} parent=1 // pred_region
      %81 = vsyncadd [#allocation5], 0
      %s82 = sshll.u32 %s13, 4
      %s83 = int_to_ptr.hbm [resolvable:$true] %s82
      %s84 = sshll.u32 [#allocation4], 4
      %s85 = int_to_ptr.vmem [resolvable:$true] %s84
      %90 = dma.hbm_to_vmem [thread:$0]  %s83, 1024, %s85, [#allocation5], 64, 64, 4
    $region57: #{bps_cvae_forward.1} parent=1 // pred_fallthru
      _
    // Predicated region
    $region58: #{bps_cvae_forward.1} parent=1 // pred_check
      _
    $region59: #{bps_cvae_forward.1} parent=1 // pred_check_branch
      %92 = sbr.rel (0) target = $region61
    $region60: #{bps_cvae_forward.1} parent=1 // pred_region
      _
    $region61: #{bps_cvae_forward.1} parent=1 // pred_fallthru
      _
    // Predicated region
    $region62: #{bps_cvae_forward.1} parent=1 // pred_check
      _
    $region63: #{bps_cvae_forward.1} parent=1 // pred_check_branch
      %94 = sbr.rel (0) target = $region65
    $region64: #{bps_cvae_forward.1} parent=1 // pred_region
      %96 = vsyncadd [#allocation5], 0
      %s97 = sshll.u32 %s15, 4
      %s98 = int_to_ptr.hbm [resolvable:$true] %s97
      %s99 = sshll.u32 [#allocation6], 4
      %s100 = int_to_ptr.vmem [resolvable:$true] %s99
      %105 = dma.hbm_to_vmem [thread:$0]  %s98, 256, %s100, [#allocation5], 64, 64, 4
    $region65: #{bps_cvae_forward.1} parent=1 // pred_fallthru
      _
    // Predicated region
    $region66: #{bps_cvae_forward.1} parent=1 // pred_check
      _
    $region67: #{bps_cvae_forward.1} parent=1 // pred_check_branch
      %107 = sbr.rel (0) target = $region69
    $region68: #{bps_cvae_forward.1} parent=1 // pred_region
      %109 = vsyncadd [#allocation8], 0
      %s110 = sshll.u32 %s16, 4
      %s111 = int_to_ptr.hbm [resolvable:$true] %s110
      %s112 = sshll.u32 [#allocation7], 4
      %s113 = int_to_ptr.vmem [resolvable:$true] %s112
      %118 = dma.hbm_to_vmem [thread:$0]  %s111, 1024, %s113, [#allocation8], 64, 64, 4
    $region69: #{bps_cvae_forward.1} parent=1 // pred_fallthru
      _
    // Predicated region
    $region70: #{bps_cvae_forward.1} parent=1 // pred_check
      _
    $region71: #{bps_cvae_forward.1} parent=1 // pred_check_branch
      %120 = sbr.rel (0) target = $region73
    $region72: #{bps_cvae_forward.1} parent=1 // pred_region
      %122 = vsyncadd [#allocation8], 0
      %s123 = sshll.u32 %s17, 4
      %s124 = int_to_ptr.hbm [resolvable:$true] %s123
      %s125 = sshll.u32 [#allocation9], 4
      %s126 = int_to_ptr.vmem [resolvable:$true] %s125
      %131 = dma.hbm_to_vmem [thread:$0]  %s124, 1024, %s126, [#allocation8], 64, 64, 4
    $region73: #{bps_cvae_forward.1} parent=1 // pred_fallthru
      _
    // Predicated region
    $region74: #{bps_cvae_forward.1} parent=1 // pred_check
      _
    $region75: #{bps_cvae_forward.1} parent=1 // pred_check_branch
      %133 = sbr.rel (0) target = $region77
    $region76: #{bps_cvae_forward.1} parent=1 // pred_region
      %135 = vsyncadd [#allocation11], 0
      %s136 = sshll.u32 %s18, 4
      %s137 = int_to_ptr.hbm [resolvable:$true] %s136
      %s138 = sshll.u32 [#allocation10], 4
      %s139 = int_to_ptr.vmem [resolvable:$true] %s138
      %144 = dma.hbm_to_vmem [thread:$0]  %s137, 1024, %s139, [#allocation11], 64, 64, 4
    $region77: #{bps_cvae_forward.1} parent=1 // pred_fallthru
      _
    // Predicated region
    $region78: #{bps_cvae_forward.1} parent=1 // pred_check
      _
    $region79: #{bps_cvae_forward.1} parent=1 // pred_check_branch
      %146 = sbr.rel (0) target = $region81
    $region80: #{bps_cvae_forward.1} parent=1 // pred_region
      %148 = vsyncadd [#allocation11], 0
      %s149 = sshll.u32 %s19, 4
      %s150 = int_to_ptr.hbm [resolvable:$true] %s149
      %s151 = sshll.u32 [#allocation12], 4
      %s152 = int_to_ptr.vmem [resolvable:$true] %s151
      %157 = dma.hbm_to_vmem [thread:$0]  %s150, 1024, %s152, [#allocation11], 64, 64, 4
    $region81: #{bps_cvae_forward.1} parent=1 // pred_fallthru
      _
    // Predicated region
    $region82: #{bps_cvae_forward.1} parent=1 // pred_check
      _
    $region83: #{bps_cvae_forward.1} parent=1 // pred_check_branch
      %159 = sbr.rel (0) target = $region85
    $region84: #{bps_cvae_forward.1} parent=1 // pred_region
      %161 = vsyncadd [#allocation14], 0
      %s162 = sshll.u32 %s20, 4
      %s163 = int_to_ptr.hbm [resolvable:$true] %s162
      %s164 = sshll.u32 [#allocation13], 4
      %s165 = int_to_ptr.vmem [resolvable:$true] %s164
      %170 = dma.hbm_to_vmem [thread:$0]  %s163, 1024, %s165, [#allocation14], 64, 64, 4
    $region85: #{bps_cvae_forward.1} parent=1 // pred_fallthru
      _
    // Predicated region
    $region86: #{bps_cvae_forward.1} parent=1 // pred_check
      _
    $region87: #{bps_cvae_forward.1} parent=1 // pred_check_branch
      %172 = sbr.rel (0) target = $region89
    $region88: #{bps_cvae_forward.1} parent=1 // pred_region
      %174 = vsyncadd [#allocation14], 0
      %s175 = sshll.u32 %s21, 4
      %s176 = int_to_ptr.hbm [resolvable:$true] %s175
      %s177 = sshll.u32 [#allocation15], 4
      %s178 = int_to_ptr.vmem [resolvable:$true] %s177
      %183 = dma.hbm_to_vmem [thread:$0]  %s176, 1024, %s178, [#allocation14], 64, 64, 4
    $region89: #{bps_cvae_forward.1} parent=1 // pred_fallthru
      _
    // Predicated region
    $region90: #{bps_cvae_forward.1} parent=1 // pred_check
      _
    $region91: #{bps_cvae_forward.1} parent=1 // pred_check_branch
      %185 = sbr.rel (0) target = $region93
    $region92: #{bps_cvae_forward.1} parent=1 // pred_region
      %187 = vsyncadd [#allocation17], 0
      %s188 = sshll.u32 %s22, 4
      %s189 = int_to_ptr.hbm [resolvable:$true] %s188
      %s190 = sshll.u32 [#allocation16], 4
      %s191 = int_to_ptr.vmem [resolvable:$true] %s190
      %196 = dma.hbm_to_vmem [thread:$0]  %s189, 1024, %s191, [#allocation17], 64, 64, 4
    $region93: #{bps_cvae_forward.1} parent=1 // pred_fallthru
      _
    // Predicated region
    $region94: #{bps_cvae_forward.1} parent=1 // pred_check
      _
    $region95: #{bps_cvae_forward.1} parent=1 // pred_check_branch
      %198 = sbr.rel (0) target = $region97
    $region96: #{bps_cvae_forward.1} parent=1 // pred_region
      %200 = vsyncadd [#allocation17], 0
      %s201 = sshll.u32 %s23, 4
      %s202 = int_to_ptr.hbm [resolvable:$true] %s201
      %s203 = sshll.u32 [#allocation18], 4
      %s204 = int_to_ptr.vmem [resolvable:$true] %s203
      %209 = dma.hbm_to_vmem [thread:$0]  %s202, 1024, %s204, [#allocation17], 64, 64, 4
    $region97: #{bps_cvae_forward.1} parent=1 // pred_fallthru
      _
    // Predicated region
    $region98: #{bps_cvae_forward.1} parent=1 // pred_check
      _
    $region99: #{bps_cvae_forward.1} parent=1 // pred_check_branch
      %211 = sbr.rel (0) target = $region101
    $region100: #{bps_cvae_forward.1} parent=1 // pred_region
      %213 = vsyncadd [#allocation20], 0
      %s214 = sshll.u32 %s24, 4
      %s215 = int_to_ptr.hbm [resolvable:$true] %s214
      %s216 = sshll.u32 [#allocation19], 4
      %s217 = int_to_ptr.vmem [resolvable:$true] %s216
      %222 = dma.hbm_to_vmem [thread:$0]  %s215, 1024, %s217, [#allocation20], 64, 64, 4
    $region101: #{bps_cvae_forward.1} parent=1 // pred_fallthru
      _
    // Predicated region
    $region102: #{bps_cvae_forward.1} parent=1 // pred_check
      _
    $region103: #{bps_cvae_forward.1} parent=1 // pred_check_branch
      %224 = sbr.rel (0) target = $region105
    $region104: #{bps_cvae_forward.1} parent=1 // pred_region
      %226 = vsyncadd [#allocation20], 0
      %s227 = sshll.u32 %s25, 4
      %s228 = int_to_ptr.hbm [resolvable:$true] %s227
      %s229 = sshll.u32 [#allocation21], 4
      %s230 = int_to_ptr.vmem [resolvable:$true] %s229
      %235 = dma.hbm_to_vmem [thread:$0]  %s228, 1024, %s230, [#allocation20], 64, 64, 4
    $region105: #{bps_cvae_forward.1} parent=1 // pred_fallthru
      _
    // Predicated region
    $region106: #{bps_cvae_forward.1} parent=1 // pred_check
      _
    $region107: #{bps_cvae_forward.1} parent=1 // pred_check_branch
      %237 = sbr.rel (0) target = $region109
    $region108: #{bps_cvae_forward.1} parent=1 // pred_region
      _
    $region109: #{bps_cvae_forward.1} parent=1 // pred_fallthru
      _
    // Predicated region
    $region110: #{bps_cvae_forward.1} parent=1 // pred_check
      _
    $region111: #{bps_cvae_forward.1} parent=1 // pred_check_branch
      %239 = sbr.rel (0) target = $region113
    $region112: #{bps_cvae_forward.1} parent=1 // pred_region
      %241 = dma.done [#allocation3], 1024
    $region113: #{bps_cvae_forward.1} parent=1 // pred_fallthru
      _
    // Predicated region
    $region114: #{bps_cvae_forward.1} parent=1 // pred_check
      _
    $region115: #{bps_cvae_forward.1} parent=1 // pred_check_branch
      %243 = sbr.rel (0) target = $region117
    $region116: #{bps_cvae_forward.1} parent=1 // pred_region
      %245 = dma.done [#allocation5], 1024
    $region117: #{bps_cvae_forward.1} parent=1 // pred_fallthru
      _
    // Predicated region
    $region118: #{bps_cvae_forward.1} parent=1 // pred_check
      _
    $region119: #{bps_cvae_forward.1} parent=1 // pred_check_branch
      %247 = sbr.rel (0) target = $region121
    $region120: #{bps_cvae_forward.1} parent=1 // pred_region
      %249 = dma.done [#allocation5], 256
    $region121: #{bps_cvae_forward.1} parent=1 // pred_fallthru
      _
    // Predicated region
    $region122: #{bps_cvae_forward.1} parent=1 // pred_check
      _
    $region123: #{bps_cvae_forward.1} parent=1 // pred_check_branch
      %251 = sbr.rel (0) target = $region125
    $region124: #{bps_cvae_forward.1} parent=1 // pred_region
      %253 = dma.done [#allocation8], 1024
    $region125: #{bps_cvae_forward.1} parent=1 // pred_fallthru
      _
    // Predicated region
    $region126: #{bps_cvae_forward.1} parent=1 // pred_check
      _
    $region127: #{bps_cvae_forward.1} parent=1 // pred_check_branch
      %255 = sbr.rel (0) target = $region129
    $region128: #{bps_cvae_forward.1} parent=1 // pred_region
      %257 = dma.done [#allocation8], 1024
    $region129: #{bps_cvae_forward.1} parent=1 // pred_fallthru
      _
    // Predicated region
    $region130: #{bps_cvae_forward.1} parent=1 // pred_check
      _
    $region131: #{bps_cvae_forward.1} parent=1 // pred_check_branch
      %259 = sbr.rel (0) target = $region133
    $region132: #{bps_cvae_forward.1} parent=1 // pred_region
      %261 = dma.done [#allocation11], 1024
    $region133: #{bps_cvae_forward.1} parent=1 // pred_fallthru
      _
    // Predicated region
    $region134: #{bps_cvae_forward.1} parent=1 // pred_check
      _
    $region135: #{bps_cvae_forward.1} parent=1 // pred_check_branch
      %263 = sbr.rel (0) target = $region137
    $region136: #{bps_cvae_forward.1} parent=1 // pred_region
      %265 = dma.done [#allocation11], 1024
    $region137: #{bps_cvae_forward.1} parent=1 // pred_fallthru
      _
    // Predicated region
    $region138: #{bps_cvae_forward.1} parent=1 // pred_check
      _
    $region139: #{bps_cvae_forward.1} parent=1 // pred_check_branch
      %267 = sbr.rel (0) target = $region141
    $region140: #{bps_cvae_forward.1} parent=1 // pred_region
      %269 = dma.done [#allocation14], 1024
    $region141: #{bps_cvae_forward.1} parent=1 // pred_fallthru
      _
    // Predicated region
    $region142: #{bps_cvae_forward.1} parent=1 // pred_check
      _
    $region143: #{bps_cvae_forward.1} parent=1 // pred_check_branch
      %271 = sbr.rel (0) target = $region145
    $region144: #{bps_cvae_forward.1} parent=1 // pred_region
      %273 = dma.done [#allocation14], 1024
    $region145: #{bps_cvae_forward.1} parent=1 // pred_fallthru
      _
    // Predicated region
    $region146: #{bps_cvae_forward.1} parent=1 // pred_check
      _
    $region147: #{bps_cvae_forward.1} parent=1 // pred_check_branch
      %275 = sbr.rel (0) target = $region149
    $region148: #{bps_cvae_forward.1} parent=1 // pred_region
      %277 = dma.done [#allocation17], 1024
    $region149: #{bps_cvae_forward.1} parent=1 // pred_fallthru
      _
    // Predicated region
    $region150: #{bps_cvae_forward.1} parent=1 // pred_check
      _
    $region151: #{bps_cvae_forward.1} parent=1 // pred_check_branch
      %279 = sbr.rel (0) target = $region153
    $region152: #{bps_cvae_forward.1} parent=1 // pred_region
      %281 = dma.done [#allocation17], 1024
    $region153: #{bps_cvae_forward.1} parent=1 // pred_fallthru
      _
    // Predicated region
    $region154: #{bps_cvae_forward.1} parent=1 // pred_check
      _
    $region155: #{bps_cvae_forward.1} parent=1 // pred_check_branch
      %283 = sbr.rel (0) target = $region157
    $region156: #{bps_cvae_forward.1} parent=1 // pred_region
      %285 = dma.done [#allocation20], 1024
    $region157: #{bps_cvae_forward.1} parent=1 // pred_fallthru
      _
    // Predicated region
    $region158: #{bps_cvae_forward.1} parent=1 // pred_check
      _
    $region159: #{bps_cvae_forward.1} parent=1 // pred_check_branch
      %287 = sbr.rel (0) target = $region161
    $region160: #{bps_cvae_forward.1} parent=1 // pred_region
      %289 = dma.done [#allocation20], 1024
    $region161: #{bps_cvae_forward.1} parent=1 // pred_fallthru
      _
    %v291 = vld [vmem:[%s5] sm:$0xff]
    %v292 = vld [vmem:[%s1] sm:$0xf]
    %v293 = vld [vmem:[%s0] sm:$0xff]
    %v294 = vld [vmem:[%s7] sm:$0xf]
    %v295 = vld [vmem:[%s7 + $0x4] sm:$0xf]
    %v296 = vld [vmem:[%s7 + $0x8] sm:$0xf]
    %v297 = vld [vmem:[%s7 + $0xc] sm:$0xf]
    %v298 = vld [vmem:[%s7 + $0x10] sm:$0xf]
    %v299 = vld [vmem:[%s7 + $0x14] sm:$0xf]
    %v300 = vld [vmem:[%s7 + $0x18] sm:$0xf]
    %v301 = vld [vmem:[%s7 + $0x1c] sm:$0xf]
    %v302 = vld [vmem:[%s7 + $0x20] sm:$0xf]
    %v303 = vld [vmem:[%s7 + $0x24] sm:$0xf]
    %v304 = vld [vmem:[%s7 + $0x28] sm:$0xf]
    %v305 = vld [vmem:[%s7 + $0x2c] sm:$0xf]
    %v306 = vld [vmem:[%s7 + $0x30] sm:$0xf]
    %v307 = vld [vmem:[%s7 + $0x34] sm:$0xf]
    %v308 = vld [vmem:[%s7 + $0x38] sm:$0xf]
    %v309 = vld [vmem:[%s7 + $0x3c] sm:$0xf]
    %v310 = vld [vmem:[%s7 + $0x40] sm:$0xf]
    %v311 = vld [vmem:[%s7 + $0x44] sm:$0xf]
    %v312 = vld [vmem:[%s7 + $0x48] sm:$0xf]
    %v313 = vld [vmem:[%s7 + $0x4c] sm:$0xf]
    %v314 = vld [vmem:[%s7 + $0x50] sm:$0xf]
    %v315 = vld [vmem:[%s7 + $0x54] sm:$0xf]
    %v316 = vld [vmem:[%s7 + $0x58] sm:$0xf]
    %v317 = vld [vmem:[%s7 + $0x5c] sm:$0xf]
    %v318 = vld [vmem:[%s7 + $0x60] sm:$0xf]
    %v319 = vld [vmem:[%s7 + $0x64] sm:$0xf]
    %v320 = vld [vmem:[%s7 + $0x68] sm:$0xf]
    %v321 = vld [vmem:[%s7 + $0x6c] sm:$0xf]
    %v322 = vld [vmem:[%s7 + $0x70] sm:$0xf]
    %v323 = vld [vmem:[%s7 + $0x74] sm:$0xf]
    %v324 = vld [vmem:[%s7 + $0x78] sm:$0xf]
    %v325 = vld [vmem:[%s7 + $0x7c] sm:$0xf]
    %v327 = vunpack.c.l.b16 %v293
    %v328 = vunpack.c.h.b16 %v293
    %v329 = vpack.c.b16 %v327, %v327
    %v330 = vpack.c.b16 %v328, %v328
    %v365 = vunpack.c.l.b16 %v294
    %v366 = vunpack.c.l.b16 %v295
    %v367 = vunpack.c.l.b16 %v296
    %v368 = vunpack.c.l.b16 %v297
    %v369 = vunpack.c.l.b16 %v298
    %v370 = vunpack.c.l.b16 %v299
    %v371 = vunpack.c.l.b16 %v300
    %v372 = vunpack.c.l.b16 %v301
    %v373 = vunpack.c.l.b16 %v302
    %v374 = vunpack.c.l.b16 %v303
    %v375 = vunpack.c.l.b16 %v304
    %v376 = vunpack.c.l.b16 %v305
    %v377 = vunpack.c.l.b16 %v306
    %v378 = vunpack.c.l.b16 %v307
    %v379 = vunpack.c.l.b16 %v308
    %v380 = vunpack.c.l.b16 %v309
    %v381 = vunpack.c.l.b16 %v310
    %v382 = vunpack.c.l.b16 %v311
    %v383 = vunpack.c.l.b16 %v312
    %v384 = vunpack.c.l.b16 %v313
    %v385 = vunpack.c.l.b16 %v314
    %v386 = vunpack.c.l.b16 %v315
    %v387 = vunpack.c.l.b16 %v316
    %v388 = vunpack.c.l.b16 %v317
    %v389 = vunpack.c.l.b16 %v318
    %v390 = vunpack.c.l.b16 %v319
    %v391 = vunpack.c.l.b16 %v320
    %v392 = vunpack.c.l.b16 %v321
    %v393 = vunpack.c.l.b16 %v322
    %v394 = vunpack.c.l.b16 %v323
    %v395 = vunpack.c.l.b16 %v324
    %v396 = vunpack.c.l.b16 %v325
    %v397 = vpack.c.b16 %v366, %v365
    %v398 = vpack.c.b16 %v368, %v367
    %v399 = vpack.c.b16 %v370, %v369
    %v400 = vpack.c.b16 %v372, %v371
    %v401 = vpack.c.b16 %v374, %v373
    %v402 = vpack.c.b16 %v376, %v375
    %v403 = vpack.c.b16 %v378, %v377
    %v404 = vpack.c.b16 %v380, %v379
    %v405 = vpack.c.b16 %v382, %v381
    %v406 = vpack.c.b16 %v384, %v383
    %v407 = vpack.c.b16 %v386, %v385
    %v408 = vpack.c.b16 %v388, %v387
    %v409 = vpack.c.b16 %v390, %v389
    %v410 = vpack.c.b16 %v392, %v391
    %v411 = vpack.c.b16 %v394, %v393
    %v412 = vpack.c.b16 %v396, %v395
    %429 = vmatpush.bf16.msra.mxu0 %v404
    %430 = vmatpush.bf16.msra.mxu0 %v403
    %431 = vmatpush.bf16.msra.mxu0 %v402
    %432 = vmatpush.bf16.msra.mxu0 %v401
    %433 = vmatpush.bf16.msra.mxu0 %v400
    %434 = vmatpush.bf16.msra.mxu0 %v399
    %435 = vmatpush.bf16.msra.mxu0 %v398
    %436 = vmatpush.bf16.msra.mxu0 %v397
    %437 = vmatmul.bf16.gmra.mxu0 %v329
    %v438 = vpop.f32.mrf.mxu0
    %v439 = vadd.f32 0.0, %v438
    %v440 = vpop.f32.mrf.mxu0
    %441 = vdwg.mxu0
    %442 = vmatpush.bf16.msra.mxu0 %v412
    %443 = vmatpush.bf16.msra.mxu0 %v411
    %444 = vmatpush.bf16.msra.mxu0 %v410
    %445 = vmatpush.bf16.msra.mxu0 %v409
    %446 = vmatpush.bf16.msra.mxu0 %v408
    %447 = vmatpush.bf16.msra.mxu0 %v407
    %448 = vmatpush.bf16.msra.mxu0 %v406
    %449 = vmatpush.bf16.msra.mxu0 %v405
    %450 = vmatmul.bf16.gmra.mxu0 %v330
    %v451 = vpop.f32.mrf.mxu0
    %v452 = vadd.f32 %v439, %v451
    %v453 = vpop.f32.mrf.mxu0
    %454 = vdwg.mxu0
    %456 = vset.pattern.permute.xlu0 0
    %457 = vperm.xlu0 %456, %v291
    %v458 = vpop.permute.xlu0 %457
    %v460 = vmul.f32 %v452, %v458
    %v461 = vld [vmem:[%s6 + $0x1] sm:$0x1]
    %462 = vset.pattern.permute.xlu0 1
    %463 = vperm.xlu0 %462, %v291
    %v464 = vpop.permute.xlu0 %463
    %v467 = vperm.slane %v461, 0
    %v469 = vmul.f32 %v464, %v467
    %v470 = vld [vmem:[%s6] sm:$0x1]
    %v472 = vperm.slane %v470, 0
    %v474 = vadd.f32 %v469, %v472
    %v475 = vadd.f32 %v460, %v474
    %476 = vset.pattern.permute.xlu0 2
    %477 = vperm.xlu0 %476, %v291
    %v478 = vpop.permute.xlu0 %477
    %v480 = vmul.f32 %v475, %v478
    %481 = vset.pattern.permute.xlu0 3
    %482 = vperm.xlu0 %481, %v291
    %v483 = vpop.permute.xlu0 %482
    %v485 = vadd.f32 %v480, %v483
    %v486 = vmax.f32 %v485, 0.0
    %v487 = vpack.c.bf16 %v486, %v486
    %v488 = vld [vmem:[%s8] sm:$0xf]
    %v489 = vld [vmem:[%s8 + $0x4] sm:$0xf]
    %v490 = vld [vmem:[%s8 + $0x8] sm:$0xf]
    %v491 = vld [vmem:[%s8 + $0xc] sm:$0xf]
    %v492 = vld [vmem:[%s8 + $0x10] sm:$0xf]
    %v493 = vld [vmem:[%s8 + $0x14] sm:$0xf]
    %v494 = vld [vmem:[%s8 + $0x18] sm:$0xf]
    %v495 = vld [vmem:[%s8 + $0x1c] sm:$0xf]
    %v496 = vld [vmem:[%s8 + $0x20] sm:$0xf]
    %v497 = vld [vmem:[%s8 + $0x24] sm:$0xf]
    %v498 = vld [vmem:[%s8 + $0x28] sm:$0xf]
    %v499 = vld [vmem:[%s8 + $0x2c] sm:$0xf]
    %v500 = vld [vmem:[%s8 + $0x30] sm:$0xf]
    %v501 = vld [vmem:[%s8 + $0x34] sm:$0xf]
    %v502 = vld [vmem:[%s8 + $0x38] sm:$0xf]
    %v503 = vld [vmem:[%s8 + $0x3c] sm:$0xf]
    %v504 = vld [vmem:[%s9] sm:$0xf]
    %v505 = vld [vmem:[%s9 + $0x4] sm:$0xf]
    %v506 = vld [vmem:[%s9 + $0x8] sm:$0xf]
    %v507 = vld [vmem:[%s9 + $0xc] sm:$0xf]
    %v508 = vld [vmem:[%s9 + $0x10] sm:$0xf]
    %v509 = vld [vmem:[%s9 + $0x14] sm:$0xf]
    %v510 = vld [vmem:[%s9 + $0x18] sm:$0xf]
    %v511 = vld [vmem:[%s9 + $0x1c] sm:$0xf]
    %v512 = vld [vmem:[%s9 + $0x20] sm:$0xf]
    %v513 = vld [vmem:[%s9 + $0x24] sm:$0xf]
    %v514 = vld [vmem:[%s9 + $0x28] sm:$0xf]
    %v515 = vld [vmem:[%s9 + $0x2c] sm:$0xf]
    %v516 = vld [vmem:[%s9 + $0x30] sm:$0xf]
    %v517 = vld [vmem:[%s9 + $0x34] sm:$0xf]
    %v518 = vld [vmem:[%s9 + $0x38] sm:$0xf]
    %v519 = vld [vmem:[%s9 + $0x3c] sm:$0xf]
    %v536 = vunpack.c.l.b16 %v504
    %v537 = vunpack.c.l.b16 %v505
    %v538 = vunpack.c.l.b16 %v506
    %v539 = vunpack.c.l.b16 %v507
    %v540 = vunpack.c.l.b16 %v508
    %v541 = vunpack.c.l.b16 %v509
    %v542 = vunpack.c.l.b16 %v510
    %v543 = vunpack.c.l.b16 %v511
    %v544 = vunpack.c.l.b16 %v512
    %v545 = vunpack.c.l.b16 %v513
    %v546 = vunpack.c.l.b16 %v514
    %v547 = vunpack.c.l.b16 %v515
    %v548 = vunpack.c.l.b16 %v516
    %v549 = vunpack.c.l.b16 %v517
    %v550 = vunpack.c.l.b16 %v518
    %v551 = vunpack.c.l.b16 %v519
    %v552 = vpack.c.b16 %v537, %v536
    %v553 = vpack.c.b16 %v539, %v538
    %v554 = vpack.c.b16 %v541, %v540
    %v555 = vpack.c.b16 %v543, %v542
    %v556 = vpack.c.b16 %v545, %v544
    %v557 = vpack.c.b16 %v547, %v546
    %v558 = vpack.c.b16 %v549, %v548
    %v559 = vpack.c.b16 %v551, %v550
    %568 = vmatpush.bf16.msra.mxu0 %v559
    %569 = vmatpush.bf16.msra.mxu0 %v558
    %570 = vmatpush.bf16.msra.mxu0 %v557
    %571 = vmatpush.bf16.msra.mxu0 %v556
    %572 = vmatpush.bf16.msra.mxu0 %v555
    %573 = vmatpush.bf16.msra.mxu0 %v554
    %574 = vmatpush.bf16.msra.mxu0 %v553
    %575 = vmatpush.bf16.msra.mxu0 %v552
    %576 = vmatmul.bf16.gmra.mxu0 %v292
    %v577 = vpop.f32.mrf.mxu0
    %v578 = vadd.f32 0.0, %v577
    %v579 = vpop.f32.mrf.mxu0
    %580 = vdwg.mxu0
    %v597 = vunpack.c.l.b16 %v488
    %v598 = vunpack.c.l.b16 %v489
    %v599 = vunpack.c.l.b16 %v490
    %v600 = vunpack.c.l.b16 %v491
    %v601 = vunpack.c.l.b16 %v492
    %v602 = vunpack.c.l.b16 %v493
    %v603 = vunpack.c.l.b16 %v494
    %v604 = vunpack.c.l.b16 %v495
    %v605 = vunpack.c.l.b16 %v496
    %v606 = vunpack.c.l.b16 %v497
    %v607 = vunpack.c.l.b16 %v498
    %v608 = vunpack.c.l.b16 %v499
    %v609 = vunpack.c.l.b16 %v500
    %v610 = vunpack.c.l.b16 %v501
    %v611 = vunpack.c.l.b16 %v502
    %v612 = vunpack.c.l.b16 %v503
    %v613 = vpack.c.b16 %v598, %v597
    %v614 = vpack.c.b16 %v600, %v599
    %v615 = vpack.c.b16 %v602, %v601
    %v616 = vpack.c.b16 %v604, %v603
    %v617 = vpack.c.b16 %v606, %v605
    %v618 = vpack.c.b16 %v608, %v607
    %v619 = vpack.c.b16 %v610, %v609
    %v620 = vpack.c.b16 %v612, %v611
    %629 = vmatpush.bf16.msra.mxu0 %v620
    %630 = vmatpush.bf16.msra.mxu0 %v619
    %631 = vmatpush.bf16.msra.mxu0 %v618
    %632 = vmatpush.bf16.msra.mxu0 %v617
    %633 = vmatpush.bf16.msra.mxu0 %v616
    %634 = vmatpush.bf16.msra.mxu0 %v615
    %635 = vmatpush.bf16.msra.mxu0 %v614
    %636 = vmatpush.bf16.msra.mxu0 %v613
    %637 = vmatmul.bf16.gmra.mxu0 %v487
    %v638 = vpop.f32.mrf.mxu0
    %v639 = vadd.f32 %v578, %v638
    %v640 = vpop.f32.mrf.mxu0
    %641 = vdwg.mxu0
    %v642 = vld [vmem:[%s6 + $0x2] sm:$0x1]
    %v644 = vperm.slane %v642, 0
    %v646 = vadd.f32 %v639, %v644
    %647 = vset.pattern.permute.xlu0 4
    %648 = vperm.xlu0 %647, %v291
    %v649 = vpop.permute.xlu0 %648
    %v651 = vmul.f32 %v646, %v649
    %652 = vset.pattern.permute.xlu0 5
    %653 = vperm.xlu0 %652, %v291
    %v654 = vpop.permute.xlu0 %653
    %v656 = vadd.f32 %v651, %v654
    %v657 = vmax.f32 %v656, 0.0
    %v658 = vpack.c.bf16 %v657, %v657
    %v659 = vld [vmem:[%s10] sm:$0xf]
    %v660 = vld [vmem:[%s10 + $0x4] sm:$0xf]
    %v661 = vld [vmem:[%s10 + $0x8] sm:$0xf]
    %v662 = vld [vmem:[%s10 + $0xc] sm:$0xf]
    %v663 = vld [vmem:[%s10 + $0x10] sm:$0xf]
    %v664 = vld [vmem:[%s10 + $0x14] sm:$0xf]
    %v665 = vld [vmem:[%s10 + $0x18] sm:$0xf]
    %v666 = vld [vmem:[%s10 + $0x1c] sm:$0xf]
    %v667 = vld [vmem:[%s10 + $0x20] sm:$0xf]
    %v668 = vld [vmem:[%s10 + $0x24] sm:$0xf]
    %v669 = vld [vmem:[%s10 + $0x28] sm:$0xf]
    %v670 = vld [vmem:[%s10 + $0x2c] sm:$0xf]
    %v671 = vld [vmem:[%s10 + $0x30] sm:$0xf]
    %v672 = vld [vmem:[%s10 + $0x34] sm:$0xf]
    %v673 = vld [vmem:[%s10 + $0x38] sm:$0xf]
    %v674 = vld [vmem:[%s10 + $0x3c] sm:$0xf]
    %v675 = vld [vmem:[%s6 + $0x3] sm:$0x1]
    %v677 = vperm.slane %v675, 0
    %v695 = vunpack.c.l.b16 %v659
    %v696 = vunpack.c.l.b16 %v660
    %v697 = vunpack.c.l.b16 %v661
    %v698 = vunpack.c.l.b16 %v662
    %v699 = vunpack.c.l.b16 %v663
    %v700 = vunpack.c.l.b16 %v664
    %v701 = vunpack.c.l.b16 %v665
    %v702 = vunpack.c.l.b16 %v666
    %v703 = vunpack.c.l.b16 %v667
    %v704 = vunpack.c.l.b16 %v668
    %v705 = vunpack.c.l.b16 %v669
    %v706 = vunpack.c.l.b16 %v670
    %v707 = vunpack.c.l.b16 %v671
    %v708 = vunpack.c.l.b16 %v672
    %v709 = vunpack.c.l.b16 %v673
    %v710 = vunpack.c.l.b16 %v674
    %v711 = vpack.c.b16 %v696, %v695
    %v712 = vpack.c.b16 %v698, %v697
    %v713 = vpack.c.b16 %v700, %v699
    %v714 = vpack.c.b16 %v702, %v701
    %v715 = vpack.c.b16 %v704, %v703
    %v716 = vpack.c.b16 %v706, %v705
    %v717 = vpack.c.b16 %v708, %v707
    %v718 = vpack.c.b16 %v710, %v709
    %727 = vmatpush.bf16.msra.mxu0 %v718
    %728 = vmatpush.bf16.msra.mxu0 %v717
    %729 = vmatpush.bf16.msra.mxu0 %v716
    %730 = vmatpush.bf16.msra.mxu0 %v715
    %731 = vmatpush.bf16.msra.mxu0 %v714
    %732 = vmatpush.bf16.msra.mxu0 %v713
    %733 = vmatpush.bf16.msra.mxu0 %v712
    %734 = vmatpush.bf16.msra.mxu0 %v711
    %735 = vmatmul.bf16.gmra.mxu0 %v658
    %v736 = vpop.f32.mrf.mxu0
    %v737 = vadd.f32 %v677, %v736
    %v738 = vpop.f32.mrf.mxu0
    %739 = vdwg.mxu0
    %740 = vset.pattern.permute.xlu0 6
    %741 = vperm.xlu0 %740, %v291
    %v742 = vpop.permute.xlu0 %741
    %v744 = vmul.f32 %v737, %v742
    %745 = vset.pattern.permute.xlu0 7
    %746 = vperm.xlu0 %745, %v291
    %v747 = vpop.permute.xlu0 %746
    %v749 = vadd.f32 %v744, %v747
    %v750 = vmax.f32 %v749, 0.0
    %v751 = vpack.c.bf16 %v750, %v750
    %v752 = vld [vmem:[%s11] sm:$0xf]
    %v753 = vld [vmem:[%s11 + $0x4] sm:$0xf]
    %v754 = vld [vmem:[%s11 + $0x8] sm:$0xf]
    %v755 = vld [vmem:[%s11 + $0xc] sm:$0xf]
    %v756 = vld [vmem:[%s11 + $0x10] sm:$0xf]
    %v757 = vld [vmem:[%s11 + $0x14] sm:$0xf]
    %v758 = vld [vmem:[%s11 + $0x18] sm:$0xf]
    %v759 = vld [vmem:[%s11 + $0x1c] sm:$0xf]
    %v760 = vld [vmem:[%s11 + $0x20] sm:$0xf]
    %v761 = vld [vmem:[%s11 + $0x24] sm:$0xf]
    %v762 = vld [vmem:[%s11 + $0x28] sm:$0xf]
    %v763 = vld [vmem:[%s11 + $0x2c] sm:$0xf]
    %v764 = vld [vmem:[%s11 + $0x30] sm:$0xf]
    %v765 = vld [vmem:[%s11 + $0x34] sm:$0xf]
    %v766 = vld [vmem:[%s11 + $0x38] sm:$0xf]
    %v767 = vld [vmem:[%s11 + $0x3c] sm:$0xf]
    %v768 = vld [vmem:[%s6 + $0x4] sm:$0x1]
    %v770 = vperm.slane %v768, 0
    %v788 = vunpack.c.l.b16 %v752
    %v789 = vunpack.c.l.b16 %v753
    %v790 = vunpack.c.l.b16 %v754
    %v791 = vunpack.c.l.b16 %v755
    %v792 = vunpack.c.l.b16 %v756
    %v793 = vunpack.c.l.b16 %v757
    %v794 = vunpack.c.l.b16 %v758
    %v795 = vunpack.c.l.b16 %v759
    %v796 = vunpack.c.l.b16 %v760
    %v797 = vunpack.c.l.b16 %v761
    %v798 = vunpack.c.l.b16 %v762
    %v799 = vunpack.c.l.b16 %v763
    %v800 = vunpack.c.l.b16 %v764
    %v801 = vunpack.c.l.b16 %v765
    %v802 = vunpack.c.l.b16 %v766
    %v803 = vunpack.c.l.b16 %v767
    %v804 = vpack.c.b16 %v789, %v788
    %v805 = vpack.c.b16 %v791, %v790
    %v806 = vpack.c.b16 %v793, %v792
    %v807 = vpack.c.b16 %v795, %v794
    %v808 = vpack.c.b16 %v797, %v796
    %v809 = vpack.c.b16 %v799, %v798
    %v810 = vpack.c.b16 %v801, %v800
    %v811 = vpack.c.b16 %v803, %v802
    %820 = vmatpush.bf16.msra.mxu0 %v811
    %821 = vmatpush.bf16.msra.mxu0 %v810
    %822 = vmatpush.bf16.msra.mxu0 %v809
    %823 = vmatpush.bf16.msra.mxu0 %v808
    %824 = vmatpush.bf16.msra.mxu0 %v807
    %825 = vmatpush.bf16.msra.mxu0 %v806
    %826 = vmatpush.bf16.msra.mxu0 %v805
    %827 = vmatpush.bf16.msra.mxu0 %v804
    %828 = vmatmul.bf16.gmra.mxu0 %v751
    %v829 = vpop.f32.mrf.mxu0
    %v830 = vadd.f32 %v770, %v829
    %v831 = vpop.f32.mrf.mxu0
    %832 = vdwg.mxu0
    %833 = vset.pattern.permute.xlu0 8
    %834 = vperm.xlu0 %833, %v291
    %v835 = vpop.permute.xlu0 %834
    %v837 = vmul.f32 %v830, %v835
    %838 = vset.pattern.permute.xlu0 9
    %839 = vperm.xlu0 %838, %v291
    %v840 = vpop.permute.xlu0 %839
    %v842 = vadd.f32 %v837, %v840
    %v843 = vadd.f32 %v842, %v657
    %v844 = vmax.f32 %v843, 0.0
    %v845 = vpack.c.bf16 %v844, %v844
    %v846 = vld [vmem:[#allocation2] sm:$0xf]
    %v847 = vld [vmem:[#allocation2 + $0x4] sm:$0xf]
    %v848 = vld [vmem:[#allocation2 + $0x8] sm:$0xf]
    %v849 = vld [vmem:[#allocation2 + $0xc] sm:$0xf]
    %v850 = vld [vmem:[#allocation2 + $0x10] sm:$0xf]
    %v851 = vld [vmem:[#allocation2 + $0x14] sm:$0xf]
    %v852 = vld [vmem:[#allocation2 + $0x18] sm:$0xf]
    %v853 = vld [vmem:[#allocation2 + $0x1c] sm:$0xf]
    %v854 = vld [vmem:[#allocation2 + $0x20] sm:$0xf]
    %v855 = vld [vmem:[#allocation2 + $0x24] sm:$0xf]
    %v856 = vld [vmem:[#allocation2 + $0x28] sm:$0xf]
    %v857 = vld [vmem:[#allocation2 + $0x2c] sm:$0xf]
    %v858 = vld [vmem:[#allocation2 + $0x30] sm:$0xf]
    %v859 = vld [vmem:[#allocation2 + $0x34] sm:$0xf]
    %v860 = vld [vmem:[#allocation2 + $0x38] sm:$0xf]
    %v861 = vld [vmem:[#allocation2 + $0x3c] sm:$0xf]
    %v862 = vld [vmem:[%s6 + $0x5] sm:$0x1]
    %v864 = vperm.slane %v862, 0
    %v882 = vunpack.c.l.b16 %v846
    %v883 = vunpack.c.l.b16 %v847
    %v884 = vunpack.c.l.b16 %v848
    %v885 = vunpack.c.l.b16 %v849
    %v886 = vunpack.c.l.b16 %v850
    %v887 = vunpack.c.l.b16 %v851
    %v888 = vunpack.c.l.b16 %v852
    %v889 = vunpack.c.l.b16 %v853
    %v890 = vunpack.c.l.b16 %v854
    %v891 = vunpack.c.l.b16 %v855
    %v892 = vunpack.c.l.b16 %v856
    %v893 = vunpack.c.l.b16 %v857
    %v894 = vunpack.c.l.b16 %v858
    %v895 = vunpack.c.l.b16 %v859
    %v896 = vunpack.c.l.b16 %v860
    %v897 = vunpack.c.l.b16 %v861
    %v898 = vpack.c.b16 %v883, %v882
    %v899 = vpack.c.b16 %v885, %v884
    %v900 = vpack.c.b16 %v887, %v886
    %v901 = vpack.c.b16 %v889, %v888
    %v902 = vpack.c.b16 %v891, %v890
    %v903 = vpack.c.b16 %v893, %v892
    %v904 = vpack.c.b16 %v895, %v894
    %v905 = vpack.c.b16 %v897, %v896
    %914 = vmatpush.bf16.msra.mxu0 %v905
    %915 = vmatpush.bf16.msra.mxu0 %v904
    %916 = vmatpush.bf16.msra.mxu0 %v903
    %917 = vmatpush.bf16.msra.mxu0 %v902
    %918 = vmatpush.bf16.msra.mxu0 %v901
    %919 = vmatpush.bf16.msra.mxu0 %v900
    %920 = vmatpush.bf16.msra.mxu0 %v899
    %921 = vmatpush.bf16.msra.mxu0 %v898
    %922 = vmatmul.bf16.gmra.mxu0 %v845
    %v923 = vpop.f32.mrf.mxu0
    %v924 = vadd.f32 %v864, %v923
    %v925 = vpop.f32.mrf.mxu0
    %926 = vdwg.mxu0
    %927 = vset.pattern.permute.xlu0 10
    %928 = vperm.xlu0 %927, %v291
    %v929 = vpop.permute.xlu0 %928
    %v931 = vmul.f32 %v924, %v929
    %932 = vset.pattern.permute.xlu0 11
    %933 = vperm.xlu0 %932, %v291
    %v934 = vpop.permute.xlu0 %933
    %v936 = vadd.f32 %v931, %v934
    %v937 = vmax.f32 %v936, 0.0
    %v938 = vpack.c.bf16 %v937, %v937
    %v939 = vld [vmem:[#allocation4] sm:$0xf]
    %v940 = vld [vmem:[#allocation4 + $0x4] sm:$0xf]
    %v941 = vld [vmem:[#allocation4 + $0x8] sm:$0xf]
    %v942 = vld [vmem:[#allocation4 + $0xc] sm:$0xf]
    %v943 = vld [vmem:[#allocation4 + $0x10] sm:$0xf]
    %v944 = vld [vmem:[#allocation4 + $0x14] sm:$0xf]
    %v945 = vld [vmem:[#allocation4 + $0x18] sm:$0xf]
    %v946 = vld [vmem:[#allocation4 + $0x1c] sm:$0xf]
    %v947 = vld [vmem:[#allocation4 + $0x20] sm:$0xf]
    %v948 = vld [vmem:[#allocation4 + $0x24] sm:$0xf]
    %v949 = vld [vmem:[#allocation4 + $0x28] sm:$0xf]
    %v950 = vld [vmem:[#allocation4 + $0x2c] sm:$0xf]
    %v951 = vld [vmem:[#allocation4 + $0x30] sm:$0xf]
    %v952 = vld [vmem:[#allocation4 + $0x34] sm:$0xf]
    %v953 = vld [vmem:[#allocation4 + $0x38] sm:$0xf]
    %v954 = vld [vmem:[#allocation4 + $0x3c] sm:$0xf]
    %v955 = vld [vmem:[%s6 + $0x6] sm:$0x1]
    %v957 = vperm.slane %v955, 0
    %v975 = vunpack.c.l.b16 %v939
    %v976 = vunpack.c.l.b16 %v940
    %v977 = vunpack.c.l.b16 %v941
    %v978 = vunpack.c.l.b16 %v942
    %v979 = vunpack.c.l.b16 %v943
    %v980 = vunpack.c.l.b16 %v944
    %v981 = vunpack.c.l.b16 %v945
    %v982 = vunpack.c.l.b16 %v946
    %v983 = vunpack.c.l.b16 %v947
    %v984 = vunpack.c.l.b16 %v948
    %v985 = vunpack.c.l.b16 %v949
    %v986 = vunpack.c.l.b16 %v950
    %v987 = vunpack.c.l.b16 %v951
    %v988 = vunpack.c.l.b16 %v952
    %v989 = vunpack.c.l.b16 %v953
    %v990 = vunpack.c.l.b16 %v954
    %v991 = vpack.c.b16 %v976, %v975
    %v992 = vpack.c.b16 %v978, %v977
    %v993 = vpack.c.b16 %v980, %v979
    %v994 = vpack.c.b16 %v982, %v981
    %v995 = vpack.c.b16 %v984, %v983
    %v996 = vpack.c.b16 %v986, %v985
    %v997 = vpack.c.b16 %v988, %v987
    %v998 = vpack.c.b16 %v990, %v989
    %1007 = vmatpush.bf16.msra.mxu0 %v998
    %1008 = vmatpush.bf16.msra.mxu0 %v997
    %1009 = vmatpush.bf16.msra.mxu0 %v996
    %1010 = vmatpush.bf16.msra.mxu0 %v995
    %1011 = vmatpush.bf16.msra.mxu0 %v994
    %1012 = vmatpush.bf16.msra.mxu0 %v993
    %1013 = vmatpush.bf16.msra.mxu0 %v992
    %1014 = vmatpush.bf16.msra.mxu0 %v991
    %1015 = vmatmul.bf16.gmra.mxu0 %v938
    %v1016 = vpop.f32.mrf.mxu0
    %v1017 = vadd.f32 %v957, %v1016
    %v1018 = vpop.f32.mrf.mxu0
    %1019 = vdwg.mxu0
    %1020 = vset.pattern.permute.xlu0 12
    %1021 = vperm.xlu0 %1020, %v291
    %v1022 = vpop.permute.xlu0 %1021
    %v1024 = vmul.f32 %v1017, %v1022
    %1025 = vset.pattern.permute.xlu0 13
    %1026 = vperm.xlu0 %1025, %v291
    %v1027 = vpop.permute.xlu0 %1026
    %v1029 = vadd.f32 %v1024, %v1027
    %v1030 = vadd.f32 %v1029, %v844
    %v1031 = vmax.f32 %v1030, 0.0
    %v1032 = vpack.c.bf16 %v1031, %v1031
    %v1033 = vld [vmem:[%s14] sm:$0xf]
    %v1034 = vld [vmem:[%s14 + $0x4] sm:$0xf]
    %v1035 = vld [vmem:[%s14 + $0x8] sm:$0xf]
    %v1036 = vld [vmem:[%s14 + $0xc] sm:$0xf]
    %v1037 = vld [vmem:[%s14 + $0x10] sm:$0xf]
    %v1038 = vld [vmem:[%s14 + $0x14] sm:$0xf]
    %v1039 = vld [vmem:[%s14 + $0x18] sm:$0xf]
    %v1040 = vld [vmem:[%s14 + $0x1c] sm:$0xf]
    %v1041 = vld [vmem:[%s14 + $0x20] sm:$0xf]
    %v1042 = vld [vmem:[%s14 + $0x24] sm:$0xf]
    %v1043 = vld [vmem:[%s14 + $0x28] sm:$0xf]
    %v1044 = vld [vmem:[%s14 + $0x2c] sm:$0xf]
    %v1045 = vld [vmem:[%s14 + $0x30] sm:$0xf]
    %v1046 = vld [vmem:[%s14 + $0x34] sm:$0xf]
    %v1047 = vld [vmem:[%s14 + $0x38] sm:$0xf]
    %v1048 = vld [vmem:[%s14 + $0x3c] sm:$0xf]
    %v1049 = vld [vmem:[%s6 + $0x11] sm:$0x1]
    %v1051 = vperm.slane %v1049, 0
    %v1069 = vunpack.c.l.b16 %v1033
    %v1070 = vunpack.c.l.b16 %v1034
    %v1071 = vunpack.c.l.b16 %v1035
    %v1072 = vunpack.c.l.b16 %v1036
    %v1073 = vunpack.c.l.b16 %v1037
    %v1074 = vunpack.c.l.b16 %v1038
    %v1075 = vunpack.c.l.b16 %v1039
    %v1076 = vunpack.c.l.b16 %v1040
    %v1077 = vunpack.c.l.b16 %v1041
    %v1078 = vunpack.c.l.b16 %v1042
    %v1079 = vunpack.c.l.b16 %v1043
    %v1080 = vunpack.c.l.b16 %v1044
    %v1081 = vunpack.c.l.b16 %v1045
    %v1082 = vunpack.c.l.b16 %v1046
    %v1083 = vunpack.c.l.b16 %v1047
    %v1084 = vunpack.c.l.b16 %v1048
    %v1085 = vpack.c.b16 %v1070, %v1069
    %v1086 = vpack.c.b16 %v1072, %v1071
    %v1087 = vpack.c.b16 %v1074, %v1073
    %v1088 = vpack.c.b16 %v1076, %v1075
    %v1089 = vpack.c.b16 %v1078, %v1077
    %v1090 = vpack.c.b16 %v1080, %v1079
    %v1091 = vpack.c.b16 %v1082, %v1081
    %v1092 = vpack.c.b16 %v1084, %v1083
    %1101 = vmatpush.bf16.msra.mxu0 %v1092
    %1102 = vmatpush.bf16.msra.mxu0 %v1091
    %1103 = vmatpush.bf16.msra.mxu0 %v1090
    %1104 = vmatpush.bf16.msra.mxu0 %v1089
    %1105 = vmatpush.bf16.msra.mxu0 %v1088
    %1106 = vmatpush.bf16.msra.mxu0 %v1087
    %1107 = vmatpush.bf16.msra.mxu0 %v1086
    %1108 = vmatpush.bf16.msra.mxu0 %v1085
    %1109 = vmatmul.bf16.gmra.mxu0 %v1032
    %v1110 = vpop.f32.mrf.mxu0
    %v1111 = vadd.f32 %v1051, %v1110
    %v1112 = vpop.f32.mrf.mxu0
    %1113 = vdwg.mxu0
    %vm1114 = vcmask 523264
    %1115 = vst.msk [vmem:[%s28] sm:$0xff] %vm1114, %v1111
    %v1116 = vld [vmem:[%s4] sm:$0xff]
    %v1117 = vmul.f32 %v1111, 0.5
    %v1118 = vmul.f32 %v1117, 1.442695
    %v1119 = vpow.pop %v1118
    %1121 = vrot.lane.b32.xlu0 %v1119, 96
    %v1122 = vpop.permute.xlu0 %1121
    %v1124 = vmul.f32 %v1116, %v1122
    %v1125 = vadd.f32 %v1124, %v1111
    %v1126 = vpack.c.bf16 %v1125, %v1125
    %v1127 = vld [vmem:[#allocation6] sm:$0xf]
    %v1128 = vld [vmem:[#allocation6 + $0x4] sm:$0xf]
    %v1129 = vld [vmem:[#allocation6 + $0x8] sm:$0xf]
    %v1130 = vld [vmem:[#allocation6 + $0xc] sm:$0xf]
    %v1131 = vld [vmem:[%s6 + $0x7] sm:$0x1]
    %v1133 = vperm.slane %v1131, 0
    %v1139 = vunpack.c.l.b16 %v1127
    %v1140 = vunpack.c.l.b16 %v1128
    %v1141 = vunpack.c.l.b16 %v1129
    %v1142 = vunpack.c.l.b16 %v1130
    %v1143 = vpack.c.b16 %v1140, %v1139
    %v1144 = vpack.c.b16 %v1142, %v1141
    %vm1147 = vcmask 261120
    %v1149 = vsel %vm1147, %v1126, 0
    %1151 = vmatpush.bf16.msra.mxu0 0
    %1152 = vmatpush.bf16.msra.mxu0 0
    %1153 = vmatpush.bf16.msra.mxu0 0
    %1154 = vmatpush.bf16.msra.mxu0 0
    %1155 = vmatpush.bf16.msra.mxu0 0
    %1156 = vmatpush.bf16.msra.mxu0 0
    %1157 = vmatpush.bf16.msra.mxu0 %v1144
    %1158 = vmatpush.bf16.msra.mxu0 %v1143
    %1159 = vmatmul.bf16.gmra.mxu0 %v1149
    %v1160 = vpop.f32.mrf.mxu0
    %v1161 = vadd.f32 %v1133, %v1160
    %v1162 = vpop.f32.mrf.mxu0
    %1163 = vdwg.mxu0
    %1164 = vset.pattern.permute.xlu0 14
    %1165 = vperm.xlu0 %1164, %v291
    %v1166 = vpop.permute.xlu0 %1165
    %v1168 = vmul.f32 %v1161, %v1166
    %1169 = vset.pattern.permute.xlu0 15
    %1170 = vperm.xlu0 %1169, %v291
    %v1171 = vpop.permute.xlu0 %1170
    %v1173 = vadd.f32 %v1168, %v1171
    %v1174 = vmax.f32 %v1173, 0.0
    %v1175 = vpack.c.bf16 %v1174, %v1174
    %v1176 = vld [vmem:[#allocation7] sm:$0xf]
    %v1177 = vld [vmem:[#allocation7 + $0x4] sm:$0xf]
    %v1178 = vld [vmem:[#allocation7 + $0x8] sm:$0xf]
    %v1179 = vld [vmem:[#allocation7 + $0xc] sm:$0xf]
    %v1180 = vld [vmem:[#allocation7 + $0x10] sm:$0xf]
    %v1181 = vld [vmem:[#allocation7 + $0x14] sm:$0xf]
    %v1182 = vld [vmem:[#allocation7 + $0x18] sm:$0xf]
    %v1183 = vld [vmem:[#allocation7 + $0x1c] sm:$0xf]
    %v1184 = vld [vmem:[#allocation7 + $0x20] sm:$0xf]
    %v1185 = vld [vmem:[#allocation7 + $0x24] sm:$0xf]
    %v1186 = vld [vmem:[#allocation7 + $0x28] sm:$0xf]
    %v1187 = vld [vmem:[#allocation7 + $0x2c] sm:$0xf]
    %v1188 = vld [vmem:[#allocation7 + $0x30] sm:$0xf]
    %v1189 = vld [vmem:[#allocation7 + $0x34] sm:$0xf]
    %v1190 = vld [vmem:[#allocation7 + $0x38] sm:$0xf]
    %v1191 = vld [vmem:[#allocation7 + $0x3c] sm:$0xf]
    %v1192 = vld [vmem:[#allocation9] sm:$0xf]
    %v1193 = vld [vmem:[#allocation9 + $0x4] sm:$0xf]
    %v1194 = vld [vmem:[#allocation9 + $0x8] sm:$0xf]
    %v1195 = vld [vmem:[#allocation9 + $0xc] sm:$0xf]
    %v1196 = vld [vmem:[#allocation9 + $0x10] sm:$0xf]
    %v1197 = vld [vmem:[#allocation9 + $0x14] sm:$0xf]
    %v1198 = vld [vmem:[#allocation9 + $0x18] sm:$0xf]
    %v1199 = vld [vmem:[#allocation9 + $0x1c] sm:$0xf]
    %v1200 = vld [vmem:[#allocation9 + $0x20] sm:$0xf]
    %v1201 = vld [vmem:[#allocation9 + $0x24] sm:$0xf]
    %v1202 = vld [vmem:[#allocation9 + $0x28] sm:$0xf]
    %v1203 = vld [vmem:[#allocation9 + $0x2c] sm:$0xf]
    %v1204 = vld [vmem:[#allocation9 + $0x30] sm:$0xf]
    %v1205 = vld [vmem:[#allocation9 + $0x34] sm:$0xf]
    %v1206 = vld [vmem:[#allocation9 + $0x38] sm:$0xf]
    %v1207 = vld [vmem:[#allocation9 + $0x3c] sm:$0xf]
    %v1224 = vunpack.c.l.b16 %v1192
    %v1225 = vunpack.c.l.b16 %v1193
    %v1226 = vunpack.c.l.b16 %v1194
    %v1227 = vunpack.c.l.b16 %v1195
    %v1228 = vunpack.c.l.b16 %v1196
    %v1229 = vunpack.c.l.b16 %v1197
    %v1230 = vunpack.c.l.b16 %v1198
    %v1231 = vunpack.c.l.b16 %v1199
    %v1232 = vunpack.c.l.b16 %v1200
    %v1233 = vunpack.c.l.b16 %v1201
    %v1234 = vunpack.c.l.b16 %v1202
    %v1235 = vunpack.c.l.b16 %v1203
    %v1236 = vunpack.c.l.b16 %v1204
    %v1237 = vunpack.c.l.b16 %v1205
    %v1238 = vunpack.c.l.b16 %v1206
    %v1239 = vunpack.c.l.b16 %v1207
    %v1240 = vpack.c.b16 %v1225, %v1224
    %v1241 = vpack.c.b16 %v1227, %v1226
    %v1242 = vpack.c.b16 %v1229, %v1228
    %v1243 = vpack.c.b16 %v1231, %v1230
    %v1244 = vpack.c.b16 %v1233, %v1232
    %v1245 = vpack.c.b16 %v1235, %v1234
    %v1246 = vpack.c.b16 %v1237, %v1236
    %v1247 = vpack.c.b16 %v1239, %v1238
    %1256 = vmatpush.bf16.msra.mxu0 %v1247
    %1257 = vmatpush.bf16.msra.mxu0 %v1246
    %1258 = vmatpush.bf16.msra.mxu0 %v1245
    %1259 = vmatpush.bf16.msra.mxu0 %v1244
    %1260 = vmatpush.bf16.msra.mxu0 %v1243
    %1261 = vmatpush.bf16.msra.mxu0 %v1242
    %1262 = vmatpush.bf16.msra.mxu0 %v1241
    %1263 = vmatpush.bf16.msra.mxu0 %v1240
    %1264 = vmatmul.bf16.gmra.mxu0 %v292
    %v1265 = vpop.f32.mrf.mxu0
    %v1266 = vadd.f32 0.0, %v1265
    %v1267 = vpop.f32.mrf.mxu0
    %1268 = vdwg.mxu0
    %v1285 = vunpack.c.l.b16 %v1176
    %v1286 = vunpack.c.l.b16 %v1177
    %v1287 = vunpack.c.l.b16 %v1178
    %v1288 = vunpack.c.l.b16 %v1179
    %v1289 = vunpack.c.l.b16 %v1180
    %v1290 = vunpack.c.l.b16 %v1181
    %v1291 = vunpack.c.l.b16 %v1182
    %v1292 = vunpack.c.l.b16 %v1183
    %v1293 = vunpack.c.l.b16 %v1184
    %v1294 = vunpack.c.l.b16 %v1185
    %v1295 = vunpack.c.l.b16 %v1186
    %v1296 = vunpack.c.l.b16 %v1187
    %v1297 = vunpack.c.l.b16 %v1188
    %v1298 = vunpack.c.l.b16 %v1189
    %v1299 = vunpack.c.l.b16 %v1190
    %v1300 = vunpack.c.l.b16 %v1191
    %v1301 = vpack.c.b16 %v1286, %v1285
    %v1302 = vpack.c.b16 %v1288, %v1287
    %v1303 = vpack.c.b16 %v1290, %v1289
    %v1304 = vpack.c.b16 %v1292, %v1291
    %v1305 = vpack.c.b16 %v1294, %v1293
    %v1306 = vpack.c.b16 %v1296, %v1295
    %v1307 = vpack.c.b16 %v1298, %v1297
    %v1308 = vpack.c.b16 %v1300, %v1299
    %1317 = vmatpush.bf16.msra.mxu0 %v1308
    %1318 = vmatpush.bf16.msra.mxu0 %v1307
    %1319 = vmatpush.bf16.msra.mxu0 %v1306
    %1320 = vmatpush.bf16.msra.mxu0 %v1305
    %1321 = vmatpush.bf16.msra.mxu0 %v1304
    %1322 = vmatpush.bf16.msra.mxu0 %v1303
    %1323 = vmatpush.bf16.msra.mxu0 %v1302
    %1324 = vmatpush.bf16.msra.mxu0 %v1301
    %1325 = vmatmul.bf16.gmra.mxu0 %v1175
    %v1326 = vpop.f32.mrf.mxu0
    %v1327 = vadd.f32 %v1266, %v1326
    %v1328 = vpop.f32.mrf.mxu0
    %1329 = vdwg.mxu0
    %v1330 = vld [vmem:[%s6 + $0x8] sm:$0x1]
    %v1332 = vperm.slane %v1330, 0
    %v1334 = vadd.f32 %v1327, %v1332
    %1335 = vset.pattern.permute.xlu0 16
    %1336 = vperm.xlu0 %1335, %v291
    %v1337 = vpop.permute.xlu0 %1336
    %v1339 = vmul.f32 %v1334, %v1337
    %1340 = vset.pattern.permute.xlu0 17
    %1341 = vperm.xlu0 %1340, %v291
    %v1342 = vpop.permute.xlu0 %1341
    %v1344 = vadd.f32 %v1339, %v1342
    %v1345 = vmax.f32 %v1344, 0.0
    %v1346 = vpack.c.bf16 %v1345, %v1345
    %v1347 = vld [vmem:[#allocation10] sm:$0xf]
    %v1348 = vld [vmem:[#allocation10 + $0x4] sm:$0xf]
    %v1349 = vld [vmem:[#allocation10 + $0x8] sm:$0xf]
    %v1350 = vld [vmem:[#allocation10 + $0xc] sm:$0xf]
    %v1351 = vld [vmem:[#allocation10 + $0x10] sm:$0xf]
    %v1352 = vld [vmem:[#allocation10 + $0x14] sm:$0xf]
    %v1353 = vld [vmem:[#allocation10 + $0x18] sm:$0xf]
    %v1354 = vld [vmem:[#allocation10 + $0x1c] sm:$0xf]
    %v1355 = vld [vmem:[#allocation10 + $0x20] sm:$0xf]
    %v1356 = vld [vmem:[#allocation10 + $0x24] sm:$0xf]
    %v1357 = vld [vmem:[#allocation10 + $0x28] sm:$0xf]
    %v1358 = vld [vmem:[#allocation10 + $0x2c] sm:$0xf]
    %v1359 = vld [vmem:[#allocation10 + $0x30] sm:$0xf]
    %v1360 = vld [vmem:[#allocation10 + $0x34] sm:$0xf]
    %v1361 = vld [vmem:[#allocation10 + $0x38] sm:$0xf]
    %v1362 = vld [vmem:[#allocation10 + $0x3c] sm:$0xf]
    %v1363 = vld [vmem:[%s6 + $0x9] sm:$0x1]
    %v1365 = vperm.slane %v1363, 0
    %v1383 = vunpack.c.l.b16 %v1347
    %v1384 = vunpack.c.l.b16 %v1348
    %v1385 = vunpack.c.l.b16 %v1349
    %v1386 = vunpack.c.l.b16 %v1350
    %v1387 = vunpack.c.l.b16 %v1351
    %v1388 = vunpack.c.l.b16 %v1352
    %v1389 = vunpack.c.l.b16 %v1353
    %v1390 = vunpack.c.l.b16 %v1354
    %v1391 = vunpack.c.l.b16 %v1355
    %v1392 = vunpack.c.l.b16 %v1356
    %v1393 = vunpack.c.l.b16 %v1357
    %v1394 = vunpack.c.l.b16 %v1358
    %v1395 = vunpack.c.l.b16 %v1359
    %v1396 = vunpack.c.l.b16 %v1360
    %v1397 = vunpack.c.l.b16 %v1361
    %v1398 = vunpack.c.l.b16 %v1362
    %v1399 = vpack.c.b16 %v1384, %v1383
    %v1400 = vpack.c.b16 %v1386, %v1385
    %v1401 = vpack.c.b16 %v1388, %v1387
    %v1402 = vpack.c.b16 %v1390, %v1389
    %v1403 = vpack.c.b16 %v1392, %v1391
    %v1404 = vpack.c.b16 %v1394, %v1393
    %v1405 = vpack.c.b16 %v1396, %v1395
    %v1406 = vpack.c.b16 %v1398, %v1397
    %1415 = vmatpush.bf16.msra.mxu0 %v1406
    %1416 = vmatpush.bf16.msra.mxu0 %v1405
    %1417 = vmatpush.bf16.msra.mxu0 %v1404
    %1418 = vmatpush.bf16.msra.mxu0 %v1403
    %1419 = vmatpush.bf16.msra.mxu0 %v1402
    %1420 = vmatpush.bf16.msra.mxu0 %v1401
    %1421 = vmatpush.bf16.msra.mxu0 %v1400
    %1422 = vmatpush.bf16.msra.mxu0 %v1399
    %1423 = vmatmul.bf16.gmra.mxu0 %v1346
    %v1424 = vpop.f32.mrf.mxu0
    %v1425 = vadd.f32 %v1365, %v1424
    %v1426 = vpop.f32.mrf.mxu0
    %1427 = vdwg.mxu0
    %1428 = vset.pattern.permute.xlu0 18
    %1429 = vperm.xlu0 %1428, %v291
    %v1430 = vpop.permute.xlu0 %1429
    %v1432 = vmul.f32 %v1425, %v1430
    %1433 = vset.pattern.permute.xlu0 19
    %1434 = vperm.xlu0 %1433, %v291
    %v1435 = vpop.permute.xlu0 %1434
    %v1437 = vadd.f32 %v1432, %v1435
    %v1438 = vmax.f32 %v1437, 0.0
    %v1439 = vpack.c.bf16 %v1438, %v1438
    %v1440 = vld [vmem:[#allocation12] sm:$0xf]
    %v1441 = vld [vmem:[#allocation12 + $0x4] sm:$0xf]
    %v1442 = vld [vmem:[#allocation12 + $0x8] sm:$0xf]
    %v1443 = vld [vmem:[#allocation12 + $0xc] sm:$0xf]
    %v1444 = vld [vmem:[#allocation12 + $0x10] sm:$0xf]
    %v1445 = vld [vmem:[#allocation12 + $0x14] sm:$0xf]
    %v1446 = vld [vmem:[#allocation12 + $0x18] sm:$0xf]
    %v1447 = vld [vmem:[#allocation12 + $0x1c] sm:$0xf]
    %v1448 = vld [vmem:[#allocation12 + $0x20] sm:$0xf]
    %v1449 = vld [vmem:[#allocation12 + $0x24] sm:$0xf]
    %v1450 = vld [vmem:[#allocation12 + $0x28] sm:$0xf]
    %v1451 = vld [vmem:[#allocation12 + $0x2c] sm:$0xf]
    %v1452 = vld [vmem:[#allocation12 + $0x30] sm:$0xf]
    %v1453 = vld [vmem:[#allocation12 + $0x34] sm:$0xf]
    %v1454 = vld [vmem:[#allocation12 + $0x38] sm:$0xf]
    %v1455 = vld [vmem:[#allocation12 + $0x3c] sm:$0xf]
    %v1456 = vld [vmem:[%s6 + $0xa] sm:$0x1]
    %v1458 = vperm.slane %v1456, 0
    %v1476 = vunpack.c.l.b16 %v1440
    %v1477 = vunpack.c.l.b16 %v1441
    %v1478 = vunpack.c.l.b16 %v1442
    %v1479 = vunpack.c.l.b16 %v1443
    %v1480 = vunpack.c.l.b16 %v1444
    %v1481 = vunpack.c.l.b16 %v1445
    %v1482 = vunpack.c.l.b16 %v1446
    %v1483 = vunpack.c.l.b16 %v1447
    %v1484 = vunpack.c.l.b16 %v1448
    %v1485 = vunpack.c.l.b16 %v1449
    %v1486 = vunpack.c.l.b16 %v1450
    %v1487 = vunpack.c.l.b16 %v1451
    %v1488 = vunpack.c.l.b16 %v1452
    %v1489 = vunpack.c.l.b16 %v1453
    %v1490 = vunpack.c.l.b16 %v1454
    %v1491 = vunpack.c.l.b16 %v1455
    %v1492 = vpack.c.b16 %v1477, %v1476
    %v1493 = vpack.c.b16 %v1479, %v1478
    %v1494 = vpack.c.b16 %v1481, %v1480
    %v1495 = vpack.c.b16 %v1483, %v1482
    %v1496 = vpack.c.b16 %v1485, %v1484
    %v1497 = vpack.c.b16 %v1487, %v1486
    %v1498 = vpack.c.b16 %v1489, %v1488
    %v1499 = vpack.c.b16 %v1491, %v1490
    %1508 = vmatpush.bf16.msra.mxu0 %v1499
    %1509 = vmatpush.bf16.msra.mxu0 %v1498
    %1510 = vmatpush.bf16.msra.mxu0 %v1497
    %1511 = vmatpush.bf16.msra.mxu0 %v1496
    %1512 = vmatpush.bf16.msra.mxu0 %v1495
    %1513 = vmatpush.bf16.msra.mxu0 %v1494
    %1514 = vmatpush.bf16.msra.mxu0 %v1493
    %1515 = vmatpush.bf16.msra.mxu0 %v1492
    %1516 = vmatmul.bf16.gmra.mxu0 %v1439
    %v1517 = vpop.f32.mrf.mxu0
    %v1518 = vadd.f32 %v1458, %v1517
    %v1519 = vpop.f32.mrf.mxu0
    %1520 = vdwg.mxu0
    %1521 = vset.pattern.permute.xlu0 20
    %1522 = vperm.xlu0 %1521, %v291
    %v1523 = vpop.permute.xlu0 %1522
    %v1525 = vmul.f32 %v1518, %v1523
    %1526 = vset.pattern.permute.xlu0 21
    %1527 = vperm.xlu0 %1526, %v291
    %v1528 = vpop.permute.xlu0 %1527
    %v1530 = vadd.f32 %v1525, %v1528
    %v1531 = vadd.f32 %v1530, %v1345
    %v1532 = vmax.f32 %v1531, 0.0
    %v1533 = vld [vmem:[%s2] sm:$0xf]
    %v1534 = vpack.c.bf16 %v1532, %v1532
    %v1535 = vld [vmem:[#allocation13] sm:$0xf]
    %v1536 = vld [vmem:[#allocation13 + $0x4] sm:$0xf]
    %v1537 = vld [vmem:[#allocation13 + $0x8] sm:$0xf]
    %v1538 = vld [vmem:[#allocation13 + $0xc] sm:$0xf]
    %v1539 = vld [vmem:[#allocation13 + $0x10] sm:$0xf]
    %v1540 = vld [vmem:[#allocation13 + $0x14] sm:$0xf]
    %v1541 = vld [vmem:[#allocation13 + $0x18] sm:$0xf]
    %v1542 = vld [vmem:[#allocation13 + $0x1c] sm:$0xf]
    %v1543 = vld [vmem:[#allocation13 + $0x20] sm:$0xf]
    %v1544 = vld [vmem:[#allocation13 + $0x24] sm:$0xf]
    %v1545 = vld [vmem:[#allocation13 + $0x28] sm:$0xf]
    %v1546 = vld [vmem:[#allocation13 + $0x2c] sm:$0xf]
    %v1547 = vld [vmem:[#allocation13 + $0x30] sm:$0xf]
    %v1548 = vld [vmem:[#allocation13 + $0x34] sm:$0xf]
    %v1549 = vld [vmem:[#allocation13 + $0x38] sm:$0xf]
    %v1550 = vld [vmem:[#allocation13 + $0x3c] sm:$0xf]
    %v1551 = vld [vmem:[#allocation15] sm:$0xf]
    %v1552 = vld [vmem:[#allocation15 + $0x4] sm:$0xf]
    %v1553 = vld [vmem:[#allocation15 + $0x8] sm:$0xf]
    %v1554 = vld [vmem:[#allocation15 + $0xc] sm:$0xf]
    %v1555 = vld [vmem:[#allocation15 + $0x10] sm:$0xf]
    %v1556 = vld [vmem:[#allocation15 + $0x14] sm:$0xf]
    %v1557 = vld [vmem:[#allocation15 + $0x18] sm:$0xf]
    %v1558 = vld [vmem:[#allocation15 + $0x1c] sm:$0xf]
    %v1559 = vld [vmem:[#allocation15 + $0x20] sm:$0xf]
    %v1560 = vld [vmem:[#allocation15 + $0x24] sm:$0xf]
    %v1561 = vld [vmem:[#allocation15 + $0x28] sm:$0xf]
    %v1562 = vld [vmem:[#allocation15 + $0x2c] sm:$0xf]
    %v1563 = vld [vmem:[#allocation15 + $0x30] sm:$0xf]
    %v1564 = vld [vmem:[#allocation15 + $0x34] sm:$0xf]
    %v1565 = vld [vmem:[#allocation15 + $0x38] sm:$0xf]
    %v1566 = vld [vmem:[#allocation15 + $0x3c] sm:$0xf]
    %v1583 = vunpack.c.l.b16 %v1551
    %v1584 = vunpack.c.l.b16 %v1552
    %v1585 = vunpack.c.l.b16 %v1553
    %v1586 = vunpack.c.l.b16 %v1554
    %v1587 = vunpack.c.l.b16 %v1555
    %v1588 = vunpack.c.l.b16 %v1556
    %v1589 = vunpack.c.l.b16 %v1557
    %v1590 = vunpack.c.l.b16 %v1558
    %v1591 = vunpack.c.l.b16 %v1559
    %v1592 = vunpack.c.l.b16 %v1560
    %v1593 = vunpack.c.l.b16 %v1561
    %v1594 = vunpack.c.l.b16 %v1562
    %v1595 = vunpack.c.l.b16 %v1563
    %v1596 = vunpack.c.l.b16 %v1564
    %v1597 = vunpack.c.l.b16 %v1565
    %v1598 = vunpack.c.l.b16 %v1566
    %v1599 = vpack.c.b16 %v1584, %v1583
    %v1600 = vpack.c.b16 %v1586, %v1585
    %v1601 = vpack.c.b16 %v1588, %v1587
    %v1602 = vpack.c.b16 %v1590, %v1589
    %v1603 = vpack.c.b16 %v1592, %v1591
    %v1604 = vpack.c.b16 %v1594, %v1593
    %v1605 = vpack.c.b16 %v1596, %v1595
    %v1606 = vpack.c.b16 %v1598, %v1597
    %1615 = vmatpush.bf16.msra.mxu0 %v1606
    %1616 = vmatpush.bf16.msra.mxu0 %v1605
    %1617 = vmatpush.bf16.msra.mxu0 %v1604
    %1618 = vmatpush.bf16.msra.mxu0 %v1603
    %1619 = vmatpush.bf16.msra.mxu0 %v1602
    %1620 = vmatpush.bf16.msra.mxu0 %v1601
    %1621 = vmatpush.bf16.msra.mxu0 %v1600
    %1622 = vmatpush.bf16.msra.mxu0 %v1599
    %1623 = vmatmul.bf16.gmra.mxu0 %v1533
    %v1624 = vpop.f32.mrf.mxu0
    %v1625 = vadd.f32 0.0, %v1624
    %v1626 = vpop.f32.mrf.mxu0
    %1627 = vdwg.mxu0
    %v1644 = vunpack.c.l.b16 %v1535
    %v1645 = vunpack.c.l.b16 %v1536
    %v1646 = vunpack.c.l.b16 %v1537
    %v1647 = vunpack.c.l.b16 %v1538
    %v1648 = vunpack.c.l.b16 %v1539
    %v1649 = vunpack.c.l.b16 %v1540
    %v1650 = vunpack.c.l.b16 %v1541
    %v1651 = vunpack.c.l.b16 %v1542
    %v1652 = vunpack.c.l.b16 %v1543
    %v1653 = vunpack.c.l.b16 %v1544
    %v1654 = vunpack.c.l.b16 %v1545
    %v1655 = vunpack.c.l.b16 %v1546
    %v1656 = vunpack.c.l.b16 %v1547
    %v1657 = vunpack.c.l.b16 %v1548
    %v1658 = vunpack.c.l.b16 %v1549
    %v1659 = vunpack.c.l.b16 %v1550
    %v1660 = vpack.c.b16 %v1645, %v1644
    %v1661 = vpack.c.b16 %v1647, %v1646
    %v1662 = vpack.c.b16 %v1649, %v1648
    %v1663 = vpack.c.b16 %v1651, %v1650
    %v1664 = vpack.c.b16 %v1653, %v1652
    %v1665 = vpack.c.b16 %v1655, %v1654
    %v1666 = vpack.c.b16 %v1657, %v1656
    %v1667 = vpack.c.b16 %v1659, %v1658
    %1676 = vmatpush.bf16.msra.mxu0 %v1667
    %1677 = vmatpush.bf16.msra.mxu0 %v1666
    %1678 = vmatpush.bf16.msra.mxu0 %v1665
    %1679 = vmatpush.bf16.msra.mxu0 %v1664
    %1680 = vmatpush.bf16.msra.mxu0 %v1663
    %1681 = vmatpush.bf16.msra.mxu0 %v1662
    %1682 = vmatpush.bf16.msra.mxu0 %v1661
    %1683 = vmatpush.bf16.msra.mxu0 %v1660
    %1684 = vmatmul.bf16.gmra.mxu0 %v1534
    %v1685 = vpop.f32.mrf.mxu0
    %v1686 = vadd.f32 %v1625, %v1685
    %v1687 = vpop.f32.mrf.mxu0
    %1688 = vdwg.mxu0
    %v1689 = vld [vmem:[%s6 + $0xb] sm:$0x1]
    %v1691 = vperm.slane %v1689, 0
    %v1693 = vadd.f32 %v1686, %v1691
    %1694 = vset.pattern.permute.xlu0 22
    %1695 = vperm.xlu0 %1694, %v291
    %v1696 = vpop.permute.xlu0 %1695
    %v1698 = vmul.f32 %v1693, %v1696
    %1699 = vset.pattern.permute.xlu0 23
    %1700 = vperm.xlu0 %1699, %v291
    %v1701 = vpop.permute.xlu0 %1700
    %v1703 = vadd.f32 %v1698, %v1701
    %v1704 = vmax.f32 %v1703, 0.0
    %v1705 = vpack.c.bf16 %v1704, %v1704
    %v1706 = vld [vmem:[#allocation16] sm:$0xf]
    %v1707 = vld [vmem:[#allocation16 + $0x4] sm:$0xf]
    %v1708 = vld [vmem:[#allocation16 + $0x8] sm:$0xf]
    %v1709 = vld [vmem:[#allocation16 + $0xc] sm:$0xf]
    %v1710 = vld [vmem:[#allocation16 + $0x10] sm:$0xf]
    %v1711 = vld [vmem:[#allocation16 + $0x14] sm:$0xf]
    %v1712 = vld [vmem:[#allocation16 + $0x18] sm:$0xf]
    %v1713 = vld [vmem:[#allocation16 + $0x1c] sm:$0xf]
    %v1714 = vld [vmem:[#allocation16 + $0x20] sm:$0xf]
    %v1715 = vld [vmem:[#allocation16 + $0x24] sm:$0xf]
    %v1716 = vld [vmem:[#allocation16 + $0x28] sm:$0xf]
    %v1717 = vld [vmem:[#allocation16 + $0x2c] sm:$0xf]
    %v1718 = vld [vmem:[#allocation16 + $0x30] sm:$0xf]
    %v1719 = vld [vmem:[#allocation16 + $0x34] sm:$0xf]
    %v1720 = vld [vmem:[#allocation16 + $0x38] sm:$0xf]
    %v1721 = vld [vmem:[#allocation16 + $0x3c] sm:$0xf]
    %v1722 = vld [vmem:[%s6 + $0xc] sm:$0x1]
    %v1724 = vperm.slane %v1722, 0
    %v1742 = vunpack.c.l.b16 %v1706
    %v1743 = vunpack.c.l.b16 %v1707
    %v1744 = vunpack.c.l.b16 %v1708
    %v1745 = vunpack.c.l.b16 %v1709
    %v1746 = vunpack.c.l.b16 %v1710
    %v1747 = vunpack.c.l.b16 %v1711
    %v1748 = vunpack.c.l.b16 %v1712
    %v1749 = vunpack.c.l.b16 %v1713
    %v1750 = vunpack.c.l.b16 %v1714
    %v1751 = vunpack.c.l.b16 %v1715
    %v1752 = vunpack.c.l.b16 %v1716
    %v1753 = vunpack.c.l.b16 %v1717
    %v1754 = vunpack.c.l.b16 %v1718
    %v1755 = vunpack.c.l.b16 %v1719
    %v1756 = vunpack.c.l.b16 %v1720
    %v1757 = vunpack.c.l.b16 %v1721
    %v1758 = vpack.c.b16 %v1743, %v1742
    %v1759 = vpack.c.b16 %v1745, %v1744
    %v1760 = vpack.c.b16 %v1747, %v1746
    %v1761 = vpack.c.b16 %v1749, %v1748
    %v1762 = vpack.c.b16 %v1751, %v1750
    %v1763 = vpack.c.b16 %v1753, %v1752
    %v1764 = vpack.c.b16 %v1755, %v1754
    %v1765 = vpack.c.b16 %v1757, %v1756
    %1774 = vmatpush.bf16.msra.mxu0 %v1765
    %1775 = vmatpush.bf16.msra.mxu0 %v1764
    %1776 = vmatpush.bf16.msra.mxu0 %v1763
    %1777 = vmatpush.bf16.msra.mxu0 %v1762
    %1778 = vmatpush.bf16.msra.mxu0 %v1761
    %1779 = vmatpush.bf16.msra.mxu0 %v1760
    %1780 = vmatpush.bf16.msra.mxu0 %v1759
    %1781 = vmatpush.bf16.msra.mxu0 %v1758
    %1782 = vmatmul.bf16.gmra.mxu0 %v1705
    %v1783 = vpop.f32.mrf.mxu0
    %v1784 = vadd.f32 %v1724, %v1783
    %v1785 = vpop.f32.mrf.mxu0
    %1786 = vdwg.mxu0
    %1787 = vset.pattern.permute.xlu0 24
    %1788 = vperm.xlu0 %1787, %v291
    %v1789 = vpop.permute.xlu0 %1788
    %v1791 = vmul.f32 %v1784, %v1789
    %1792 = vset.pattern.permute.xlu0 25
    %1793 = vperm.xlu0 %1792, %v291
    %v1794 = vpop.permute.xlu0 %1793
    %v1796 = vadd.f32 %v1791, %v1794
    %v1797 = vmax.f32 %v1796, 0.0
    %v1798 = vpack.c.bf16 %v1797, %v1797
    %v1799 = vld [vmem:[#allocation18] sm:$0xf]
    %v1800 = vld [vmem:[#allocation18 + $0x4] sm:$0xf]
    %v1801 = vld [vmem:[#allocation18 + $0x8] sm:$0xf]
    %v1802 = vld [vmem:[#allocation18 + $0xc] sm:$0xf]
    %v1803 = vld [vmem:[#allocation18 + $0x10] sm:$0xf]
    %v1804 = vld [vmem:[#allocation18 + $0x14] sm:$0xf]
    %v1805 = vld [vmem:[#allocation18 + $0x18] sm:$0xf]
    %v1806 = vld [vmem:[#allocation18 + $0x1c] sm:$0xf]
    %v1807 = vld [vmem:[#allocation18 + $0x20] sm:$0xf]
    %v1808 = vld [vmem:[#allocation18 + $0x24] sm:$0xf]
    %v1809 = vld [vmem:[#allocation18 + $0x28] sm:$0xf]
    %v1810 = vld [vmem:[#allocation18 + $0x2c] sm:$0xf]
    %v1811 = vld [vmem:[#allocation18 + $0x30] sm:$0xf]
    %v1812 = vld [vmem:[#allocation18 + $0x34] sm:$0xf]
    %v1813 = vld [vmem:[#allocation18 + $0x38] sm:$0xf]
    %v1814 = vld [vmem:[#allocation18 + $0x3c] sm:$0xf]
    %v1815 = vld [vmem:[%s6 + $0xd] sm:$0x1]
    %v1817 = vperm.slane %v1815, 0
    %v1835 = vunpack.c.l.b16 %v1799
    %v1836 = vunpack.c.l.b16 %v1800
    %v1837 = vunpack.c.l.b16 %v1801
    %v1838 = vunpack.c.l.b16 %v1802
    %v1839 = vunpack.c.l.b16 %v1803
    %v1840 = vunpack.c.l.b16 %v1804
    %v1841 = vunpack.c.l.b16 %v1805
    %v1842 = vunpack.c.l.b16 %v1806
    %v1843 = vunpack.c.l.b16 %v1807
    %v1844 = vunpack.c.l.b16 %v1808
    %v1845 = vunpack.c.l.b16 %v1809
    %v1846 = vunpack.c.l.b16 %v1810
    %v1847 = vunpack.c.l.b16 %v1811
    %v1848 = vunpack.c.l.b16 %v1812
    %v1849 = vunpack.c.l.b16 %v1813
    %v1850 = vunpack.c.l.b16 %v1814
    %v1851 = vpack.c.b16 %v1836, %v1835
    %v1852 = vpack.c.b16 %v1838, %v1837
    %v1853 = vpack.c.b16 %v1840, %v1839
    %v1854 = vpack.c.b16 %v1842, %v1841
    %v1855 = vpack.c.b16 %v1844, %v1843
    %v1856 = vpack.c.b16 %v1846, %v1845
    %v1857 = vpack.c.b16 %v1848, %v1847
    %v1858 = vpack.c.b16 %v1850, %v1849
    %1867 = vmatpush.bf16.msra.mxu0 %v1858
    %1868 = vmatpush.bf16.msra.mxu0 %v1857
    %1869 = vmatpush.bf16.msra.mxu0 %v1856
    %1870 = vmatpush.bf16.msra.mxu0 %v1855
    %1871 = vmatpush.bf16.msra.mxu0 %v1854
    %1872 = vmatpush.bf16.msra.mxu0 %v1853
    %1873 = vmatpush.bf16.msra.mxu0 %v1852
    %1874 = vmatpush.bf16.msra.mxu0 %v1851
    %1875 = vmatmul.bf16.gmra.mxu0 %v1798
    %v1876 = vpop.f32.mrf.mxu0
    %v1877 = vadd.f32 %v1817, %v1876
    %v1878 = vpop.f32.mrf.mxu0
    %1879 = vdwg.mxu0
    %1880 = vset.pattern.permute.xlu0 26
    %1881 = vperm.xlu0 %1880, %v291
    %v1882 = vpop.permute.xlu0 %1881
    %v1884 = vmul.f32 %v1877, %v1882
    %1885 = vset.pattern.permute.xlu0 27
    %1886 = vperm.xlu0 %1885, %v291
    %v1887 = vpop.permute.xlu0 %1886
    %v1889 = vadd.f32 %v1884, %v1887
    %v1890 = vadd.f32 %v1889, %v1704
    %v1891 = vmax.f32 %v1890, 0.0
    %v1892 = vld [vmem:[%s3] sm:$0xf]
    %v1893 = vpack.c.bf16 %v1891, %v1891
    %v1894 = vld [vmem:[#allocation19] sm:$0xf]
    %v1895 = vld [vmem:[#allocation19 + $0x4] sm:$0xf]
    %v1896 = vld [vmem:[#allocation19 + $0x8] sm:$0xf]
    %v1897 = vld [vmem:[#allocation19 + $0xc] sm:$0xf]
    %v1898 = vld [vmem:[#allocation19 + $0x10] sm:$0xf]
    %v1899 = vld [vmem:[#allocation19 + $0x14] sm:$0xf]
    %v1900 = vld [vmem:[#allocation19 + $0x18] sm:$0xf]
    %v1901 = vld [vmem:[#allocation19 + $0x1c] sm:$0xf]
    %v1902 = vld [vmem:[#allocation19 + $0x20] sm:$0xf]
    %v1903 = vld [vmem:[#allocation19 + $0x24] sm:$0xf]
    %v1904 = vld [vmem:[#allocation19 + $0x28] sm:$0xf]
    %v1905 = vld [vmem:[#allocation19 + $0x2c] sm:$0xf]
    %v1906 = vld [vmem:[#allocation19 + $0x30] sm:$0xf]
    %v1907 = vld [vmem:[#allocation19 + $0x34] sm:$0xf]
    %v1908 = vld [vmem:[#allocation19 + $0x38] sm:$0xf]
    %v1909 = vld [vmem:[#allocation19 + $0x3c] sm:$0xf]
    %v1910 = vld [vmem:[#allocation21] sm:$0xf]
    %v1911 = vld [vmem:[#allocation21 + $0x4] sm:$0xf]
    %v1912 = vld [vmem:[#allocation21 + $0x8] sm:$0xf]
    %v1913 = vld [vmem:[#allocation21 + $0xc] sm:$0xf]
    %v1914 = vld [vmem:[#allocation21 + $0x10] sm:$0xf]
    %v1915 = vld [vmem:[#allocation21 + $0x14] sm:$0xf]
    %v1916 = vld [vmem:[#allocation21 + $0x18] sm:$0xf]
    %v1917 = vld [vmem:[#allocation21 + $0x1c] sm:$0xf]
    %v1918 = vld [vmem:[#allocation21 + $0x20] sm:$0xf]
    %v1919 = vld [vmem:[#allocation21 + $0x24] sm:$0xf]
    %v1920 = vld [vmem:[#allocation21 + $0x28] sm:$0xf]
    %v1921 = vld [vmem:[#allocation21 + $0x2c] sm:$0xf]
    %v1922 = vld [vmem:[#allocation21 + $0x30] sm:$0xf]
    %v1923 = vld [vmem:[#allocation21 + $0x34] sm:$0xf]
    %v1924 = vld [vmem:[#allocation21 + $0x38] sm:$0xf]
    %v1925 = vld [vmem:[#allocation21 + $0x3c] sm:$0xf]
    %v1942 = vunpack.c.l.b16 %v1910
    %v1943 = vunpack.c.l.b16 %v1911
    %v1944 = vunpack.c.l.b16 %v1912
    %v1945 = vunpack.c.l.b16 %v1913
    %v1946 = vunpack.c.l.b16 %v1914
    %v1947 = vunpack.c.l.b16 %v1915
    %v1948 = vunpack.c.l.b16 %v1916
    %v1949 = vunpack.c.l.b16 %v1917
    %v1950 = vunpack.c.l.b16 %v1918
    %v1951 = vunpack.c.l.b16 %v1919
    %v1952 = vunpack.c.l.b16 %v1920
    %v1953 = vunpack.c.l.b16 %v1921
    %v1954 = vunpack.c.l.b16 %v1922
    %v1955 = vunpack.c.l.b16 %v1923
    %v1956 = vunpack.c.l.b16 %v1924
    %v1957 = vunpack.c.l.b16 %v1925
    %v1958 = vpack.c.b16 %v1943, %v1942
    %v1959 = vpack.c.b16 %v1945, %v1944
    %v1960 = vpack.c.b16 %v1947, %v1946
    %v1961 = vpack.c.b16 %v1949, %v1948
    %v1962 = vpack.c.b16 %v1951, %v1950
    %v1963 = vpack.c.b16 %v1953, %v1952
    %v1964 = vpack.c.b16 %v1955, %v1954
    %v1965 = vpack.c.b16 %v1957, %v1956
    %1974 = vmatpush.bf16.msra.mxu0 %v1965
    %1975 = vmatpush.bf16.msra.mxu0 %v1964
    %1976 = vmatpush.bf16.msra.mxu0 %v1963
    %1977 = vmatpush.bf16.msra.mxu0 %v1962
    %1978 = vmatpush.bf16.msra.mxu0 %v1961
    %1979 = vmatpush.bf16.msra.mxu0 %v1960
    %1980 = vmatpush.bf16.msra.mxu0 %v1959
    %1981 = vmatpush.bf16.msra.mxu0 %v1958
    %1982 = vmatmul.bf16.gmra.mxu0 %v1892
    %v1983 = vpop.f32.mrf.mxu0
    %v1984 = vadd.f32 0.0, %v1983
    %v1985 = vpop.f32.mrf.mxu0
    %1986 = vdwg.mxu0
    %v2003 = vunpack.c.l.b16 %v1894
    %v2004 = vunpack.c.l.b16 %v1895
    %v2005 = vunpack.c.l.b16 %v1896
    %v2006 = vunpack.c.l.b16 %v1897
    %v2007 = vunpack.c.l.b16 %v1898
    %v2008 = vunpack.c.l.b16 %v1899
    %v2009 = vunpack.c.l.b16 %v1900
    %v2010 = vunpack.c.l.b16 %v1901
    %v2011 = vunpack.c.l.b16 %v1902
    %v2012 = vunpack.c.l.b16 %v1903
    %v2013 = vunpack.c.l.b16 %v1904
    %v2014 = vunpack.c.l.b16 %v1905
    %v2015 = vunpack.c.l.b16 %v1906
    %v2016 = vunpack.c.l.b16 %v1907
    %v2017 = vunpack.c.l.b16 %v1908
    %v2018 = vunpack.c.l.b16 %v1909
    %v2019 = vpack.c.b16 %v2004, %v2003
    %v2020 = vpack.c.b16 %v2006, %v2005
    %v2021 = vpack.c.b16 %v2008, %v2007
    %v2022 = vpack.c.b16 %v2010, %v2009
    %v2023 = vpack.c.b16 %v2012, %v2011
    %v2024 = vpack.c.b16 %v2014, %v2013
    %v2025 = vpack.c.b16 %v2016, %v2015
    %v2026 = vpack.c.b16 %v2018, %v2017
    %2035 = vmatpush.bf16.msra.mxu0 %v2026
    %2036 = vmatpush.bf16.msra.mxu0 %v2025
    %2037 = vmatpush.bf16.msra.mxu0 %v2024
    %2038 = vmatpush.bf16.msra.mxu0 %v2023
    %2039 = vmatpush.bf16.msra.mxu0 %v2022
    %2040 = vmatpush.bf16.msra.mxu0 %v2021
    %2041 = vmatpush.bf16.msra.mxu0 %v2020
    %2042 = vmatpush.bf16.msra.mxu0 %v2019
    %2043 = vmatmul.bf16.gmra.mxu0 %v1893
    %v2044 = vpop.f32.mrf.mxu0
    %v2045 = vadd.f32 %v1984, %v2044
    %v2046 = vpop.f32.mrf.mxu0
    %2047 = vdwg.mxu0
    %v2048 = vld [vmem:[%s6 + $0xe] sm:$0x1]
    %v2050 = vperm.slane %v2048, 0
    %v2052 = vadd.f32 %v2045, %v2050
    %2053 = vset.pattern.permute.xlu0 28
    %2054 = vperm.xlu0 %2053, %v291
    %v2055 = vpop.permute.xlu0 %2054
    %v2057 = vmul.f32 %v2052, %v2055
    %2058 = vset.pattern.permute.xlu0 29
    %2059 = vperm.xlu0 %2058, %v291
    %v2060 = vpop.permute.xlu0 %2059
    %v2062 = vadd.f32 %v2057, %v2060
    %v2063 = vmax.f32 %v2062, 0.0
    %v2064 = vpack.c.bf16 %v2063, %v2063
    %v2065 = vld [vmem:[%s26] sm:$0xff]
    %v2066 = vld [vmem:[%s26 + $0x8] sm:$0xff]
    %v2067 = vld [vmem:[%s26 + $0x10] sm:$0xff]
    %v2068 = vld [vmem:[%s26 + $0x18] sm:$0xff]
    %v2069 = vld [vmem:[%s26 + $0x20] sm:$0xff]
    %v2070 = vld [vmem:[%s26 + $0x28] sm:$0xff]
    %v2071 = vld [vmem:[%s26 + $0x30] sm:$0xff]
    %v2072 = vld [vmem:[%s26 + $0x38] sm:$0xff]
    %v2073 = vld [vmem:[%s26 + $0x40] sm:$0xff]
    %v2074 = vld [vmem:[%s26 + $0x48] sm:$0xff]
    %v2075 = vld [vmem:[%s26 + $0x50] sm:$0xff]
    %v2076 = vld [vmem:[%s26 + $0x58] sm:$0xff]
    %v2077 = vld [vmem:[%s26 + $0x60] sm:$0xff]
    %v2078 = vld [vmem:[%s26 + $0x68] sm:$0xff]
    %v2079 = vld [vmem:[%s26 + $0x70] sm:$0xff]
    %v2080 = vld [vmem:[%s26 + $0x78] sm:$0xff]
    %v2081 = vld [vmem:[%s6 + $0xf] sm:$0x3]
    %v2083 = vperm.slane %v2081, 0
    %v2084 = vperm.slane %v2081, 1
    %v2103 = vunpack.c.l.b16 %v2065
    %v2104 = vunpack.c.h.b16 %v2065
    %v2105 = vunpack.c.l.b16 %v2066
    %v2106 = vunpack.c.h.b16 %v2066
    %v2107 = vunpack.c.l.b16 %v2067
    %v2108 = vunpack.c.h.b16 %v2067
    %v2109 = vunpack.c.l.b16 %v2068
    %v2110 = vunpack.c.h.b16 %v2068
    %v2111 = vunpack.c.l.b16 %v2069
    %v2112 = vunpack.c.h.b16 %v2069
    %v2113 = vunpack.c.l.b16 %v2070
    %v2114 = vunpack.c.h.b16 %v2070
    %v2115 = vunpack.c.l.b16 %v2071
    %v2116 = vunpack.c.h.b16 %v2071
    %v2117 = vunpack.c.l.b16 %v2072
    %v2118 = vunpack.c.h.b16 %v2072
    %v2119 = vunpack.c.l.b16 %v2073
    %v2120 = vunpack.c.h.b16 %v2073
    %v2121 = vunpack.c.l.b16 %v2074
    %v2122 = vunpack.c.h.b16 %v2074
    %v2123 = vunpack.c.l.b16 %v2075
    %v2124 = vunpack.c.h.b16 %v2075
    %v2125 = vunpack.c.l.b16 %v2076
    %v2126 = vunpack.c.h.b16 %v2076
    %v2127 = vunpack.c.l.b16 %v2077
    %v2128 = vunpack.c.h.b16 %v2077
    %v2129 = vunpack.c.l.b16 %v2078
    %v2130 = vunpack.c.h.b16 %v2078
    %v2131 = vunpack.c.l.b16 %v2079
    %v2132 = vunpack.c.h.b16 %v2079
    %v2133 = vunpack.c.l.b16 %v2080
    %v2134 = vunpack.c.h.b16 %v2080
    %v2135 = vpack.c.b16 %v2105, %v2103
    %v2136 = vpack.c.b16 %v2106, %v2104
    %v2137 = vpack.c.b16 %v2109, %v2107
    %v2138 = vpack.c.b16 %v2110, %v2108
    %v2139 = vpack.c.b16 %v2113, %v2111
    %v2140 = vpack.c.b16 %v2114, %v2112
    %v2141 = vpack.c.b16 %v2117, %v2115
    %v2142 = vpack.c.b16 %v2118, %v2116
    %v2143 = vpack.c.b16 %v2121, %v2119
    %v2144 = vpack.c.b16 %v2122, %v2120
    %v2145 = vpack.c.b16 %v2125, %v2123
    %v2146 = vpack.c.b16 %v2126, %v2124
    %v2147 = vpack.c.b16 %v2129, %v2127
    %v2148 = vpack.c.b16 %v2130, %v2128
    %v2149 = vpack.c.b16 %v2133, %v2131
    %v2150 = vpack.c.b16 %v2134, %v2132
    %2167 = vmatpush.bf16.msra.mxu0 %v2149
    %2168 = vmatpush.bf16.msra.mxu0 %v2147
    %2169 = vmatpush.bf16.msra.mxu0 %v2145
    %2170 = vmatpush.bf16.msra.mxu0 %v2143
    %2171 = vmatpush.bf16.msra.mxu0 %v2141
    %2172 = vmatpush.bf16.msra.mxu0 %v2139
    %2173 = vmatpush.bf16.msra.mxu0 %v2137
    %2174 = vmatpush.bf16.msra.mxu0 %v2135
    %2175 = vmatmul.bf16.gmra.mxu0 %v2064
    %v2176 = vpop.f32.mrf.mxu0
    %v2177 = vadd.f32 %v2083, %v2176
    %v2178 = vpop.f32.mrf.mxu0
    %2179 = vdwg.mxu0
    %2180 = vmatpush.bf16.msra.mxu0 %v2150
    %2181 = vmatpush.bf16.msra.mxu0 %v2148
    %2182 = vmatpush.bf16.msra.mxu0 %v2146
    %2183 = vmatpush.bf16.msra.mxu0 %v2144
    %2184 = vmatpush.bf16.msra.mxu0 %v2142
    %2185 = vmatpush.bf16.msra.mxu0 %v2140
    %2186 = vmatpush.bf16.msra.mxu0 %v2138
    %2187 = vmatpush.bf16.msra.mxu0 %v2136
    %2188 = vmatmul.bf16.gmra.mxu0 %v2064
    %v2189 = vpop.f32.mrf.mxu0
    %v2190 = vadd.f32 %v2084, %v2189
    %v2191 = vpop.f32.mrf.mxu0
    %2192 = vdwg.mxu0
    %2193 = vset.pattern.permute.xlu0 30
    %2194 = vperm.xlu0 %2193, %v291
    %v2195 = vpop.permute.xlu0 %2194
    %v2197 = vmul.f32 %v2177, %v2195
    %v2198 = vmul.f32 %v2190, %v2195
    %2199 = vset.pattern.permute.xlu0 31
    %2200 = vperm.xlu0 %2199, %v291
    %v2201 = vpop.permute.xlu0 %2200
    %v2203 = vadd.f32 %v2197, %v2201
    %v2204 = vadd.f32 %v2198, %v2201
    %v2205 = vmax.f32 %v2203, 0.0
    %v2206 = vmax.f32 %v2204, 0.0
    %v2207 = vpack.c.bf16 %v2206, %v2205
    %2208 = vst [vmem:[%s27] sm:$0xff] %v2207
    // Predicated region
    $region162: #{bps_cvae_forward.1} parent=1 // pred_check
      _
    $region163: #{bps_cvae_forward.1} parent=1 // pred_check_branch
      %2210 = sbr.rel (0) target = $region165
    $region164: #{bps_cvae_forward.1} parent=1 // pred_region
      _
    $region165: #{bps_cvae_forward.1} parent=1 // pred_fallthru
      _
    // Predicated region
    $region166: #{bps_cvae_forward.1} parent=1 // pred_check
      _
    $region167: #{bps_cvae_forward.1} parent=1 // pred_check_branch
      %2212 = sbr.rel (0) target = $region169
    $region168: #{bps_cvae_forward.1} parent=1 // pred_region
      _
    $region169: #{bps_cvae_forward.1} parent=1 // pred_fallthru
      _
    // Predicated region
    $region170: #{bps_cvae_forward.1} parent=1 // pred_check
      _
    $region171: #{bps_cvae_forward.1} parent=1 // pred_check_branch
      %2214 = sbr.rel (0) target = $region173
    $region172: #{bps_cvae_forward.1} parent=1 // pred_region
      _
    $region173: #{bps_cvae_forward.1} parent=1 // pred_fallthru
      _
    // Predicated region
    $region174: #{bps_cvae_forward.1} parent=1 // pred_check
      _
    $region175: #{bps_cvae_forward.1} parent=1 // pred_check_branch
      %2216 = sbr.rel (0) target = $region177
    $region176: #{bps_cvae_forward.1} parent=1 // pred_region
      _
    $region177: #{bps_cvae_forward.1} parent=1 // pred_fallthru
      _
    %2217 = vsyncpa [#allocation3], 1
    %2218 = vsyncpa [#allocation5], 1
    %2219 = vsyncpa [#allocation8], 1
    %2220 = vsyncpa [#allocation11], 1
    %2221 = vsyncpa [#allocation14], 1
    %2222 = vsyncpa [#allocation17], 1
    %2223 = vsyncpa [#allocation20], 1

// kernel: tile.131
$region0: #{tile.131}
  #allocation0 [shape = 's32[1]{0}', space=sflag, size = 0x4, scoped, tag = 'scoped memory for tile.131']
  %s0 = inlined_call_operand.<no memory space> [shape: f32[], index: 0, kind: input, shape index: {}]
  %s1 = inlined_call_operand.vmem [shape: f32[2,1], index: 1, kind: output, shape index: {}]
  %v2 = vstv %s0
  %3 = vst [vmem:[%s1] sm:$0x3] %v2

// kernel: custom-call
$region0: #{custom-call}
  %s0 = inlined_call_operand.vmem [shape: f32[2240], index: 0, kind: output, shape index: {}]

// kernel: bps_cvae_forward.1
$region0: #{bps_cvae_forward.1}
  #allocation0 [shape = 'u32[]', space=smem, size = 0x4, offset = 0x4, fixed_abs, tag = 'smem constant byte address 0x4 - core index']
  #allocation1 [shape = 'u32[72,128]{1,0:T(1,128)}', space=vmem, size = 0x9000, scoped, tag = 'internal scratch']
  %s0 = inlined_call_operand.vmem [shape: bf16[8,256], index: 0, kind: input, shape index: {}]
  %s1 = inlined_call_operand.vmem [shape: bf16[8,128], index: 1, kind: input, shape index: {}]
  %s2 = inlined_call_operand.vmem [shape: bf16[8,128], index: 2, kind: input, shape index: {}]
  %s3 = inlined_call_operand.vmem [shape: bf16[8,128], index: 3, kind: input, shape index: {}]
  %s4 = inlined_call_operand.vmem [shape: f32[8,32], index: 4, kind: input, shape index: {}]
  %s5 = inlined_call_operand.vmem [shape: f32[8,32], index: 5, kind: input, shape index: {}]
  %s6 = inlined_call_operand.vmem [shape: f32[1,2240], index: 6, kind: input, shape index: {}]
  %s7 = inlined_call_operand.vmem [shape: bf16[256,128], index: 7, kind: input, shape index: {}]
  %s8 = inlined_call_operand.vmem [shape: bf16[128,128], index: 8, kind: input, shape index: {}]
  %s9 = inlined_call_operand.vmem [shape: bf16[128,128], index: 9, kind: input, shape index: {}]
  %s10 = inlined_call_operand.vmem [shape: bf16[128,128], index: 10, kind: input, shape index: {}]
  %s11 = inlined_call_operand.vmem [shape: bf16[128,128], index: 11, kind: input, shape index: {}]
  %s12 = inlined_call_operand.hbm [shape: bf16[128,128], index: 12, kind: input, shape index: {}]
  %s13 = inlined_call_operand.hbm [shape: bf16[128,128], index: 13, kind: input, shape index: {}]
  %s14 = inlined_call_operand.vmem [shape: bf16[128,64], index: 14, kind: input, shape index: {}]
  %s15 = inlined_call_operand.hbm [shape: bf16[32,128], index: 15, kind: input, shape index: {}]
  %s16 = inlined_call_operand.hbm [shape: bf16[128,128], index: 16, kind: input, shape index: {}]
  %s17 = inlined_call_operand.hbm [shape: bf16[128,128], index: 17, kind: input, shape index: {}]
  %s18 = inlined_call_operand.hbm [shape: bf16[128,128], index: 18, kind: input, shape index: {}]
  %s19 = inlined_call_operand.hbm [shape: bf16[128,128], index: 19, kind: input, shape index: {}]
  %s20 = inlined_call_operand.hbm [shape: bf16[128,128], index: 20, kind: input, shape index: {}]
  %s21 = inlined_call_operand.hbm [shape: bf16[128,128], index: 21, kind: input, shape index: {}]
  %s22 = inlined_call_operand.hbm [shape: bf16[128,128], index: 22, kind: input, shape index: {}]
  %s23 = inlined_call_operand.hbm [shape: bf16[128,128], index: 23, kind: input, shape index: {}]
  %s24 = inlined_call_operand.hbm [shape: bf16[128,128], index: 24, kind: input, shape index: {}]
  %s25 = inlined_call_operand.hbm [shape: bf16[128,128], index: 25, kind: input, shape index: {}]
  %s26 = inlined_call_operand.vmem [shape: bf16[128,256], index: 26, kind: input, shape index: {}]
  %s27 = inlined_call_operand.vmem [shape: bf16[8,256], index: 27, kind: output, shape index: {0}]
  %s28 = inlined_call_operand.vmem [shape: f32[8,64], index: 28, kind: output, shape index: {1}]
  %29 = xla_tuple %s27, %s28
  %s30 = sld [smem:[#allocation0]]
  $region178: #{bps_cvae_forward.1} parent=0
    _
  %s32 = ssub.s32 1, %s30
  %s33 = scalar_select 0, %s32, %s30
  $region1: #{bps_cvae_forward.1} parent=0
    #allocation2 [shape = 'u8[32768]{0}', space=vmem, size = 0x8000, scoped, tag = 'input window, operand 12, single buffered']
    #allocation3 [shape = 's32[1]{0}', space=sflag, size = 0x4, scoped, tag = 'scoped memory for bps_cvae_forward.1']
    #allocation4 [shape = 'u8[32768]{0}', space=vmem, size = 0x8000, scoped, tag = 'input window, operand 13, single buffered']
    #allocation5 [shape = 's32[1]{0}', space=sflag, size = 0x4, scoped, tag = 'scoped memory for bps_cvae_forward.1']
    #allocation6 [shape = 'u8[8192]{0}', space=vmem, size = 0x2000, scoped, tag = 'input window, operand 15, single buffered']
    #allocation7 [shape = 'u8[32768]{0}', space=vmem, size = 0x8000, scoped, tag = 'input window, operand 16, single buffered']
    #allocation8 [shape = 's32[1]{0}', space=sflag, size = 0x4, scoped, tag = 'scoped memory for bps_cvae_forward.1']
    #allocation9 [shape = 'u8[32768]{0}', space=vmem, size = 0x8000, scoped, tag = 'input window, operand 17, single buffered']
    #allocation10 [shape = 'u8[32768]{0}', space=vmem, size = 0x8000, scoped, tag = 'input window, operand 18, single buffered']
    #allocation11 [shape = 's32[1]{0}', space=sflag, size = 0x4, scoped, tag = 'scoped memory for bps_cvae_forward.1']
    #allocation12 [shape = 'u8[32768]{0}', space=vmem, size = 0x8000, scoped, tag = 'input window, operand 19, single buffered']
    #allocation13 [shape = 'u8[32768]{0}', space=vmem, size = 0x8000, scoped, tag = 'input window, operand 20, single buffered']
    #allocation14 [shape = 's32[1]{0}', space=sflag, size = 0x4, scoped, tag = 'scoped memory for bps_cvae_forward.1']
    #allocation15 [shape = 'u8[32768]{0}', space=vmem, size = 0x8000, scoped, tag = 'input window, operand 21, single buffered']
    #allocation16 [shape = 'u8[32768]{0}', space=vmem, size = 0x8000, scoped, tag = 'input window, operand 22, single buffered']
    #allocation17 [shape = 's32[1]{0}', space=sflag, size = 0x4, scoped, tag = 'scoped memory for bps_cvae_forward.1']
    #allocation18 [shape = 'u8[32768]{0}', space=vmem, size = 0x8000, scoped, tag = 'input window, operand 23, single buffered']
    #allocation19 [shape = 'u8[32768]{0}', space=vmem, size = 0x8000, scoped, tag = 'input window, operand 24, single buffered']
    #allocation20 [shape = 's32[1]{0}', space=sflag, size = 0x4, scoped, tag = 'scoped memory for bps_cvae_forward.1']
    #allocation21 [shape = 'u8[32768]{0}', space=vmem, size = 0x8000, scoped, tag = 'input window, operand 25, single buffered']
    %34 = vsyncpa [#allocation3], 0
    %35 = vsyncpa [#allocation5], 0
    %36 = vsyncpa [#allocation8], 0
    %37 = vsyncpa [#allocation11], 0
    %38 = vsyncpa [#allocation14], 0
    %39 = vsyncpa [#allocation17], 0
    %40 = vsyncpa [#allocation20], 0
    // Predicated region
    $region2: #{bps_cvae_forward.1} parent=1 // pred_check
      _
    $region3: #{bps_cvae_forward.1} parent=1 // pred_check_branch
      %42 = sbr.rel (0) target = $region5
    $region4: #{bps_cvae_forward.1} parent=1 // pred_region
      _
    $region5: #{bps_cvae_forward.1} parent=1 // pred_fallthru
      _
    // Predicated region
    $region6: #{bps_cvae_forward.1} parent=1 // pred_check
      _
    $region7: #{bps_cvae_forward.1} parent=1 // pred_check_branch
      %44 = sbr.rel (0) target = $region9
    $region8: #{bps_cvae_forward.1} parent=1 // pred_region
      _
    $region9: #{bps_cvae_forward.1} parent=1 // pred_fallthru
      _
    // Predicated region
    $region10: #{bps_cvae_forward.1} parent=1 // pred_check
      _
    $region11: #{bps_cvae_forward.1} parent=1 // pred_check_branch
      %46 = sbr.rel (0) target = $region13
    $region12: #{bps_cvae_forward.1} parent=1 // pred_region
      _
    $region13: #{bps_cvae_forward.1} parent=1 // pred_fallthru
      _
    // Predicated region
    $region14: #{bps_cvae_forward.1} parent=1 // pred_check
      _
    $region15: #{bps_cvae_forward.1} parent=1 // pred_check_branch
      %48 = sbr.rel (0) target = $region17
    $region16: #{bps_cvae_forward.1} parent=1 // pred_region
      _
    $region17: #{bps_cvae_forward.1} parent=1 // pred_fallthru
      _
    // Predicated region
    $region18: #{bps_cvae_forward.1} parent=1 // pred_check
      _
    $region19: #{bps_cvae_forward.1} parent=1 // pred_check_branch
      %50 = sbr.rel (0) target = $region21
    $region20: #{bps_cvae_forward.1} parent=1 // pred_region
      _
    $region21: #{bps_cvae_forward.1} parent=1 // pred_fallthru
      _
    // Predicated region
    $region22: #{bps_cvae_forward.1} parent=1 // pred_check
      _
    $region23: #{bps_cvae_forward.1} parent=1 // pred_check_branch
      %52 = sbr.rel (0) target = $region25
    $region24: #{bps_cvae_forward.1} parent=1 // pred_region
      _
    $region25: #{bps_cvae_forward.1} parent=1 // pred_fallthru
      _
    // Predicated region
    $region26: #{bps_cvae_forward.1} parent=1 // pred_check
      _
    $region27: #{bps_cvae_forward.1} parent=1 // pred_check_branch
      %54 = sbr.rel (0) target = $region29
    $region28: #{bps_cvae_forward.1} parent=1 // pred_region
      _
    $region29: #{bps_cvae_forward.1} parent=1 // pred_fallthru
      _
    // Predicated region
    $region30: #{bps_cvae_forward.1} parent=1 // pred_check
      _
    $region31: #{bps_cvae_forward.1} parent=1 // pred_check_branch
      %56 = sbr.rel (0) target = $region33
    $region32: #{bps_cvae_forward.1} parent=1 // pred_region
      _
    $region33: #{bps_cvae_forward.1} parent=1 // pred_fallthru
      _
    // Predicated region
    $region34: #{bps_cvae_forward.1} parent=1 // pred_check
      _
    $region35: #{bps_cvae_forward.1} parent=1 // pred_check_branch
      %58 = sbr.rel (0) target = $region37
    $region36: #{bps_cvae_forward.1} parent=1 // pred_region
      _
    $region37: #{bps_cvae_forward.1} parent=1 // pred_fallthru
      _
    // Predicated region
    $region38: #{bps_cvae_forward.1} parent=1 // pred_check
      _
    $region39: #{bps_cvae_forward.1} parent=1 // pred_check_branch
      %60 = sbr.rel (0) target = $region41
    $region40: #{bps_cvae_forward.1} parent=1 // pred_region
      _
    $region41: #{bps_cvae_forward.1} parent=1 // pred_fallthru
      _
    // Predicated region
    $region42: #{bps_cvae_forward.1} parent=1 // pred_check
      _
    $region43: #{bps_cvae_forward.1} parent=1 // pred_check_branch
      %62 = sbr.rel (0) target = $region45
    $region44: #{bps_cvae_forward.1} parent=1 // pred_region
      _
    $region45: #{bps_cvae_forward.1} parent=1 // pred_fallthru
      _
    // Predicated region
    $region46: #{bps_cvae_forward.1} parent=1 // pred_check
      _
    $region47: #{bps_cvae_forward.1} parent=1 // pred_check_branch
      %64 = sbr.rel (0) target = $region49
    $region48: #{bps_cvae_forward.1} parent=1 // pred_region
      _
    $region49: #{bps_cvae_forward.1} parent=1 // pred_fallthru
      _
    // Predicated region
    $region50: #{bps_cvae_forward.1} parent=1 // pred_check
      _
    $region51: #{bps_cvae_forward.1} parent=1 // pred_check_branch
      %66 = sbr.rel (0) target = $region53
    $region52: #{bps_cvae_forward.1} parent=1 // pred_region
      %68 = vsyncadd [#allocation3], 0
      %s69 = sshll.u32 %s12, 4
      %s70 = int_to_ptr.hbm [resolvable:$true] %s69
      %s71 = sshll.u32 [#allocation2], 4
      %s72 = int_to_ptr.vmem [resolvable:$true] %s71
      %77 = dma.hbm_to_vmem [thread:$0]  %s70, 1024, %s72, [#allocation3], 64, 64, 4
    $region53: #{bps_cvae_forward.1} parent=1 // pred_fallthru
      _
    // Predicated region
    $region54: #{bps_cvae_forward.1} parent=1 // pred_check
      _
    $region55: #{bps_cvae_forward.1} parent=1 // pred_check_branch
      %79 = sbr.rel (0) target = $region57
    $region56: #{bps_cvae_forward.1} parent=1 // pred_region
      %81 = vsyncadd [#allocation5], 0
      %s82 = sshll.u32 %s13, 4
      %s83 = int_to_ptr.hbm [resolvable:$true] %s82
      %s84 = sshll.u32 [#allocation4], 4
      %s85 = int_to_ptr.vmem [resolvable:$true] %s84
      %90 = dma.hbm_to_vmem [thread:$0]  %s83, 1024, %s85, [#allocation5], 64, 64, 4
    $region57: #{bps_cvae_forward.1} parent=1 // pred_fallthru
      _
    // Predicated region
    $region58: #{bps_cvae_forward.1} parent=1 // pred_check
      _
    $region59: #{bps_cvae_forward.1} parent=1 // pred_check_branch
      %92 = sbr.rel (0) target = $region61
    $region60: #{bps_cvae_forward.1} parent=1 // pred_region
      _
    $region61: #{bps_cvae_forward.1} parent=1 // pred_fallthru
      _
    // Predicated region
    $region62: #{bps_cvae_forward.1} parent=1 // pred_check
      _
    $region63: #{bps_cvae_forward.1} parent=1 // pred_check_branch
      %94 = sbr.rel (0) target = $region65
    $region64: #{bps_cvae_forward.1} parent=1 // pred_region
      %96 = vsyncadd [#allocation5], 0
      %s97 = sshll.u32 %s15, 4
      %s98 = int_to_ptr.hbm [resolvable:$true] %s97
      %s99 = sshll.u32 [#allocation6], 4
      %s100 = int_to_ptr.vmem [resolvable:$true] %s99
      %105 = dma.hbm_to_vmem [thread:$0]  %s98, 256, %s100, [#allocation5], 64, 64, 4
    $region65: #{bps_cvae_forward.1} parent=1 // pred_fallthru
      _
    // Predicated region
    $region66: #{bps_cvae_forward.1} parent=1 // pred_check
      _
    $region67: #{bps_cvae_forward.1} parent=1 // pred_check_branch
      %107 = sbr.rel (0) target = $region69
    $region68: #{bps_cvae_forward.1} parent=1 // pred_region
      %109 = vsyncadd [#allocation8], 0
      %s110 = sshll.u32 %s16, 4
      %s111 = int_to_ptr.hbm [resolvable:$true] %s110
      %s112 = sshll.u32 [#allocation7], 4
      %s113 = int_to_ptr.vmem [resolvable:$true] %s112
      %118 = dma.hbm_to_vmem [thread:$0]  %s111, 1024, %s113, [#allocation8], 64, 64, 4
    $region69: #{bps_cvae_forward.1} parent=1 // pred_fallthru
      _
    // Predicated region
    $region70: #{bps_cvae_forward.1} parent=1 // pred_check
      _
    $region71: #{bps_cvae_forward.1} parent=1 // pred_check_branch
      %120 = sbr.rel (0) target = $region73
    $region72: #{bps_cvae_forward.1} parent=1 // pred_region
      %122 = vsyncadd [#allocation8], 0
      %s123 = sshll.u32 %s17, 4
      %s124 = int_to_ptr.hbm [resolvable:$true] %s123
      %s125 = sshll.u32 [#allocation9], 4
      %s126 = int_to_ptr.vmem [resolvable:$true] %s125
      %131 = dma.hbm_to_vmem [thread:$0]  %s124, 1024, %s126, [#allocation8], 64, 64, 4
    $region73: #{bps_cvae_forward.1} parent=1 // pred_fallthru
      _
    // Predicated region
    $region74: #{bps_cvae_forward.1} parent=1 // pred_check
      _
    $region75: #{bps_cvae_forward.1} parent=1 // pred_check_branch
      %133 = sbr.rel (0) target = $region77
    $region76: #{bps_cvae_forward.1} parent=1 // pred_region
      %135 = vsyncadd [#allocation11], 0
      %s136 = sshll.u32 %s18, 4
      %s137 = int_to_ptr.hbm [resolvable:$true] %s136
      %s138 = sshll.u32 [#allocation10], 4
      %s139 = int_to_ptr.vmem [resolvable:$true] %s138
      %144 = dma.hbm_to_vmem [thread:$0]  %s137, 1024, %s139, [#allocation11], 64, 64, 4
    $region77: #{bps_cvae_forward.1} parent=1 // pred_fallthru
      _
    // Predicated region
    $region78: #{bps_cvae_forward.1} parent=1 // pred_check
      _
    $region79: #{bps_cvae_forward.1} parent=1 // pred_check_branch
      %146 = sbr.rel (0) target = $region81
    $region80: #{bps_cvae_forward.1} parent=1 // pred_region
      %148 = vsyncadd [#allocation11], 0
      %s149 = sshll.u32 %s19, 4
      %s150 = int_to_ptr.hbm [resolvable:$true] %s149
      %s151 = sshll.u32 [#allocation12], 4
      %s152 = int_to_ptr.vmem [resolvable:$true] %s151
      %157 = dma.hbm_to_vmem [thread:$0]  %s150, 1024, %s152, [#allocation11], 64, 64, 4
    $region81: #{bps_cvae_forward.1} parent=1 // pred_fallthru
      _
    // Predicated region
    $region82: #{bps_cvae_forward.1} parent=1 // pred_check
      _
    $region83: #{bps_cvae_forward.1} parent=1 // pred_check_branch
      %159 = sbr.rel (0) target = $region85
    $region84: #{bps_cvae_forward.1} parent=1 // pred_region
      %161 = vsyncadd [#allocation14], 0
      %s162 = sshll.u32 %s20, 4
      %s163 = int_to_ptr.hbm [resolvable:$true] %s162
      %s164 = sshll.u32 [#allocation13], 4
      %s165 = int_to_ptr.vmem [resolvable:$true] %s164
      %170 = dma.hbm_to_vmem [thread:$0]  %s163, 1024, %s165, [#allocation14], 64, 64, 4
    $region85: #{bps_cvae_forward.1} parent=1 // pred_fallthru
      _
    // Predicated region
    $region86: #{bps_cvae_forward.1} parent=1 // pred_check
      _
    $region87: #{bps_cvae_forward.1} parent=1 // pred_check_branch
      %172 = sbr.rel (0) target = $region89
    $region88: #{bps_cvae_forward.1} parent=1 // pred_region
      %174 = vsyncadd [#allocation14], 0
      %s175 = sshll.u32 %s21, 4
      %s176 = int_to_ptr.hbm [resolvable:$true] %s175
      %s177 = sshll.u32 [#allocation15], 4
      %s178 = int_to_ptr.vmem [resolvable:$true] %s177
      %183 = dma.hbm_to_vmem [thread:$0]  %s176, 1024, %s178, [#allocation14], 64, 64, 4
    $region89: #{bps_cvae_forward.1} parent=1 // pred_fallthru
      _
    // Predicated region
    $region90: #{bps_cvae_forward.1} parent=1 // pred_check
      _
    $region91: #{bps_cvae_forward.1} parent=1 // pred_check_branch
      %185 = sbr.rel (0) target = $region93
    $region92: #{bps_cvae_forward.1} parent=1 // pred_region
      %187 = vsyncadd [#allocation17], 0
      %s188 = sshll.u32 %s22, 4
      %s189 = int_to_ptr.hbm [resolvable:$true] %s188
      %s190 = sshll.u32 [#allocation16], 4
      %s191 = int_to_ptr.vmem [resolvable:$true] %s190
      %196 = dma.hbm_to_vmem [thread:$0]  %s189, 1024, %s191, [#allocation17], 64, 64, 4
    $region93: #{bps_cvae_forward.1} parent=1 // pred_fallthru
      _
    // Predicated region
    $region94: #{bps_cvae_forward.1} parent=1 // pred_check
      _
    $region95: #{bps_cvae_forward.1} parent=1 // pred_check_branch
      %198 = sbr.rel (0) target = $region97
    $region96: #{bps_cvae_forward.1} parent=1 // pred_region
      %200 = vsyncadd [#allocation17], 0
      %s201 = sshll.u32 %s23, 4
      %s202 = int_to_ptr.hbm [resolvable:$true] %s201
      %s203 = sshll.u32 [#allocation18], 4
      %s204 = int_to_ptr.vmem [resolvable:$true] %s203
      %209 = dma.hbm_to_vmem [thread:$0]  %s202, 1024, %s204, [#allocation17], 64, 64, 4
    $region97: #{bps_cvae_forward.1} parent=1 // pred_fallthru
      _
    // Predicated region
    $region98: #{bps_cvae_forward.1} parent=1 // pred_check
      _
    $region99: #{bps_cvae_forward.1} parent=1 // pred_check_branch
      %211 = sbr.rel (0) target = $region101
    $region100: #{bps_cvae_forward.1} parent=1 // pred_region
      %213 = vsyncadd [#allocation20], 0
      %s214 = sshll.u32 %s24, 4
      %s215 = int_to_ptr.hbm [resolvable:$true] %s214
      %s216 = sshll.u32 [#allocation19], 4
      %s217 = int_to_ptr.vmem [resolvable:$true] %s216
      %222 = dma.hbm_to_vmem [thread:$0]  %s215, 1024, %s217, [#allocation20], 64, 64, 4
    $region101: #{bps_cvae_forward.1} parent=1 // pred_fallthru
      _
    // Predicated region
    $region102: #{bps_cvae_forward.1} parent=1 // pred_check
      _
    $region103: #{bps_cvae_forward.1} parent=1 // pred_check_branch
      %224 = sbr.rel (0) target = $region105
    $region104: #{bps_cvae_forward.1} parent=1 // pred_region
      %226 = vsyncadd [#allocation20], 0
      %s227 = sshll.u32 %s25, 4
      %s228 = int_to_ptr.hbm [resolvable:$true] %s227
      %s229 = sshll.u32 [#allocation21], 4
      %s230 = int_to_ptr.vmem [resolvable:$true] %s229
      %235 = dma.hbm_to_vmem [thread:$0]  %s228, 1024, %s230, [#allocation20], 64, 64, 4
    $region105: #{bps_cvae_forward.1} parent=1 // pred_fallthru
      _
    // Predicated region
    $region106: #{bps_cvae_forward.1} parent=1 // pred_check
      _
    $region107: #{bps_cvae_forward.1} parent=1 // pred_check_branch
      %237 = sbr.rel (0) target = $region109
    $region108: #{bps_cvae_forward.1} parent=1 // pred_region
      _
    $region109: #{bps_cvae_forward.1} parent=1 // pred_fallthru
      _
    // Predicated region
    $region110: #{bps_cvae_forward.1} parent=1 // pred_check
      _
    $region111: #{bps_cvae_forward.1} parent=1 // pred_check_branch
      %239 = sbr.rel (0) target = $region113
    $region112: #{bps_cvae_forward.1} parent=1 // pred_region
      %241 = dma.done [#allocation3], 1024
    $region113: #{bps_cvae_forward.1} parent=1 // pred_fallthru
      _
    // Predicated region
    $region114: #{bps_cvae_forward.1} parent=1 // pred_check
      _
    $region115: #{bps_cvae_forward.1} parent=1 // pred_check_branch
      %243 = sbr.rel (0) target = $region117
    $region116: #{bps_cvae_forward.1} parent=1 // pred_region
      %245 = dma.done [#allocation5], 1024
    $region117: #{bps_cvae_forward.1} parent=1 // pred_fallthru
      _
    // Predicated region
    $region118: #{bps_cvae_forward.1} parent=1 // pred_check
      _
    $region119: #{bps_cvae_forward.1} parent=1 // pred_check_branch
      %247 = sbr.rel (0) target = $region121
    $region120: #{bps_cvae_forward.1} parent=1 // pred_region
      %249 = dma.done [#allocation5], 256
    $region121: #{bps_cvae_forward.1} parent=1 // pred_fallthru
      _
    // Predicated region
    $region122: #{bps_cvae_forward.1} parent=1 // pred_check
      _
    $region123: #{bps_cvae_forward.1} parent=1 // pred_check_branch
      %251 = sbr.rel (0) target = $region125
    $region124: #{bps_cvae_forward.1} parent=1 // pred_region
      %253 = dma.done [#allocation8], 1024
    $region125: #{bps_cvae_forward.1} parent=1 // pred_fallthru
      _
    // Predicated region
    $region126: #{bps_cvae_forward.1} parent=1 // pred_check
      _
    $region127: #{bps_cvae_forward.1} parent=1 // pred_check_branch
      %255 = sbr.rel (0) target = $region129
    $region128: #{bps_cvae_forward.1} parent=1 // pred_region
      %257 = dma.done [#allocation8], 1024
    $region129: #{bps_cvae_forward.1} parent=1 // pred_fallthru
      _
    // Predicated region
    $region130: #{bps_cvae_forward.1} parent=1 // pred_check
      _
    $region131: #{bps_cvae_forward.1} parent=1 // pred_check_branch
      %259 = sbr.rel (0) target = $region133
    $region132: #{bps_cvae_forward.1} parent=1 // pred_region
      %261 = dma.done [#allocation11], 1024
    $region133: #{bps_cvae_forward.1} parent=1 // pred_fallthru
      _
    // Predicated region
    $region134: #{bps_cvae_forward.1} parent=1 // pred_check
      _
    $region135: #{bps_cvae_forward.1} parent=1 // pred_check_branch
      %263 = sbr.rel (0) target = $region137
    $region136: #{bps_cvae_forward.1} parent=1 // pred_region
      %265 = dma.done [#allocation11], 1024
    $region137: #{bps_cvae_forward.1} parent=1 // pred_fallthru
      _
    // Predicated region
    $region138: #{bps_cvae_forward.1} parent=1 // pred_check
      _
    $region139: #{bps_cvae_forward.1} parent=1 // pred_check_branch
      %267 = sbr.rel (0) target = $region141
    $region140: #{bps_cvae_forward.1} parent=1 // pred_region
      %269 = dma.done [#allocation14], 1024
    $region141: #{bps_cvae_forward.1} parent=1 // pred_fallthru
      _
    // Predicated region
    $region142: #{bps_cvae_forward.1} parent=1 // pred_check
      _
    $region143: #{bps_cvae_forward.1} parent=1 // pred_check_branch
      %271 = sbr.rel (0) target = $region145
    $region144: #{bps_cvae_forward.1} parent=1 // pred_region
      %273 = dma.done [#allocation14], 1024
    $region145: #{bps_cvae_forward.1} parent=1 // pred_fallthru
      _
    // Predicated region
    $region146: #{bps_cvae_forward.1} parent=1 // pred_check
      _
    $region147: #{bps_cvae_forward.1} parent=1 // pred_check_branch
      %275 = sbr.rel (0) target = $region149
    $region148: #{bps_cvae_forward.1} parent=1 // pred_region
      %277 = dma.done [#allocation17], 1024
    $region149: #{bps_cvae_forward.1} parent=1 // pred_fallthru
      _
    // Predicated region
    $region150: #{bps_cvae_forward.1} parent=1 // pred_check
      _
    $region151: #{bps_cvae_forward.1} parent=1 // pred_check_branch
      %279 = sbr.rel (0) target = $region153
    $region152: #{bps_cvae_forward.1} parent=1 // pred_region
      %281 = dma.done [#allocation17], 1024
    $region153: #{bps_cvae_forward.1} parent=1 // pred_fallthru
      _
    // Predicated region
    $region154: #{bps_cvae_forward.1} parent=1 // pred_check
      _
    $region155: #{bps_cvae_forward.1} parent=1 // pred_check_branch
      %283 = sbr.rel (0) target = $region157
    $region156: #{bps_cvae_forward.1} parent=1 // pred_region
      %285 = dma.done [#allocation20], 1024
    $region157: #{bps_cvae_forward.1} parent=1 // pred_fallthru
      _
    // Predicated region
    $region158: #{bps_cvae_forward.1} parent=1 // pred_check
      _
    $region159: #{bps_cvae_forward.1} parent=1 // pred_check_branch
      %287 = sbr.rel (0) target = $region161
    $region160: #{bps_cvae_forward.1} parent=1 // pred_region
      %289 = dma.done [#allocation20], 1024
    $region161: #{bps_cvae_forward.1} parent=1 // pred_fallthru
      _
    %v291 = vld [vmem:[%s5] sm:$0xff]
    %v292 = vld [vmem:[%s1] sm:$0xf]
    %v293 = vld [vmem:[%s0] sm:$0xff]
    %v294 = vld [vmem:[%s7] sm:$0xf]
    %v295 = vld [vmem:[%s7 + $0x4] sm:$0xf]
    %v296 = vld [vmem:[%s7 + $0x8] sm:$0xf]
    %v297 = vld [vmem:[%s7 + $0xc] sm:$0xf]
    %v298 = vld [vmem:[%s7 + $0x10] sm:$0xf]
    %v299 = vld [vmem:[%s7 + $0x14] sm:$0xf]
    %v300 = vld [vmem:[%s7 + $0x18] sm:$0xf]
    %v301 = vld [vmem:[%s7 + $0x1c] sm:$0xf]
    %v302 = vld [vmem:[%s7 + $0x20] sm:$0xf]
    %v303 = vld [vmem:[%s7 + $0x24] sm:$0xf]
    %v304 = vld [vmem:[%s7 + $0x28] sm:$0xf]
    %v305 = vld [vmem:[%s7 + $0x2c] sm:$0xf]
    %v306 = vld [vmem:[%s7 + $0x30] sm:$0xf]
    %v307 = vld [vmem:[%s7 + $0x34] sm:$0xf]
    %v308 = vld [vmem:[%s7 + $0x38] sm:$0xf]
    %v309 = vld [vmem:[%s7 + $0x3c] sm:$0xf]
    %v310 = vld [vmem:[%s7 + $0x40] sm:$0xf]
    %v311 = vld [vmem:[%s7 + $0x44] sm:$0xf]
    %v312 = vld [vmem:[%s7 + $0x48] sm:$0xf]
    %v313 = vld [vmem:[%s7 + $0x4c] sm:$0xf]
    %v314 = vld [vmem:[%s7 + $0x50] sm:$0xf]
    %v315 = vld [vmem:[%s7 + $0x54] sm:$0xf]
    %v316 = vld [vmem:[%s7 + $0x58] sm:$0xf]
    %v317 = vld [vmem:[%s7 + $0x5c] sm:$0xf]
    %v318 = vld [vmem:[%s7 + $0x60] sm:$0xf]
    %v319 = vld [vmem:[%s7 + $0x64] sm:$0xf]
    %v320 = vld [vmem:[%s7 + $0x68] sm:$0xf]
    %v321 = vld [vmem:[%s7 + $0x6c] sm:$0xf]
    %v322 = vld [vmem:[%s7 + $0x70] sm:$0xf]
    %v323 = vld [vmem:[%s7 + $0x74] sm:$0xf]
    %v324 = vld [vmem:[%s7 + $0x78] sm:$0xf]
    %v325 = vld [vmem:[%s7 + $0x7c] sm:$0xf]
    %v327 = vunpack.c.l.b16 %v293
    %v328 = vunpack.c.h.b16 %v293
    %v329 = vpack.c.b16 %v327, %v327
    %v330 = vpack.c.b16 %v328, %v328
    %v365 = vunpack.c.l.b16 %v294
    %v366 = vunpack.c.l.b16 %v295
    %v367 = vunpack.c.l.b16 %v296
    %v368 = vunpack.c.l.b16 %v297
    %v369 = vunpack.c.l.b16 %v298
    %v370 = vunpack.c.l.b16 %v299
    %v371 = vunpack.c.l.b16 %v300
    %v372 = vunpack.c.l.b16 %v301
    %v373 = vunpack.c.l.b16 %v302
    %v374 = vunpack.c.l.b16 %v303
    %v375 = vunpack.c.l.b16 %v304
    %v376 = vunpack.c.l.b16 %v305
    %v377 = vunpack.c.l.b16 %v306
    %v378 = vunpack.c.l.b16 %v307
    %v379 = vunpack.c.l.b16 %v308
    %v380 = vunpack.c.l.b16 %v309
    %v381 = vunpack.c.l.b16 %v310
    %v382 = vunpack.c.l.b16 %v311
    %v383 = vunpack.c.l.b16 %v312
    %v384 = vunpack.c.l.b16 %v313
    %v385 = vunpack.c.l.b16 %v314
    %v386 = vunpack.c.l.b16 %v315
    %v387 = vunpack.c.l.b16 %v316
    %v388 = vunpack.c.l.b16 %v317
    %v389 = vunpack.c.l.b16 %v318
    %v390 = vunpack.c.l.b16 %v319
    %v391 = vunpack.c.l.b16 %v320
    %v392 = vunpack.c.l.b16 %v321
    %v393 = vunpack.c.l.b16 %v322
    %v394 = vunpack.c.l.b16 %v323
    %v395 = vunpack.c.l.b16 %v324
    %v396 = vunpack.c.l.b16 %v325
    %v397 = vpack.c.b16 %v366, %v365
    %v398 = vpack.c.b16 %v368, %v367
    %v399 = vpack.c.b16 %v370, %v369
    %v400 = vpack.c.b16 %v372, %v371
    %v401 = vpack.c.b16 %v374, %v373
    %v402 = vpack.c.b16 %v376, %v375
    %v403 = vpack.c.b16 %v378, %v377
    %v404 = vpack.c.b16 %v380, %v379
    %v405 = vpack.c.b16 %v382, %v381
    %v406 = vpack.c.b16 %v384, %v383
    %v407 = vpack.c.b16 %v386, %v385
    %v408 = vpack.c.b16 %v388, %v387
    %v409 = vpack.c.b16 %v390, %v389
    %v410 = vpack.c.b16 %v392, %v391
    %v411 = vpack.c.b16 %v394, %v393
    %v412 = vpack.c.b16 %v396, %v395
    %429 = vmatpush.bf16.msra.mxu0 %v404
    %430 = vmatpush.bf16.msra.mxu0 %v403
    %431 = vmatpush.bf16.msra.mxu0 %v402
    %432 = vmatpush.bf16.msra.mxu0 %v401
    %433 = vmatpush.bf16.msra.mxu0 %v400
    %434 = vmatpush.bf16.msra.mxu0 %v399
    %435 = vmatpush.bf16.msra.mxu0 %v398
    %436 = vmatpush.bf16.msra.mxu0 %v397
    %437 = vmatmul.bf16.gmra.mxu0 %v329
    %v438 = vpop.f32.mrf.mxu0
    %v439 = vadd.f32 0.0, %v438
    %v440 = vpop.f32.mrf.mxu0
    %441 = vdwg.mxu0
    %442 = vmatpush.bf16.msra.mxu0 %v412
    %443 = vmatpush.bf16.msra.mxu0 %v411
    %444 = vmatpush.bf16.msra.mxu0 %v410
    %445 = vmatpush.bf16.msra.mxu0 %v409
    %446 = vmatpush.bf16.msra.mxu0 %v408
    %447 = vmatpush.bf16.msra.mxu0 %v407
    %448 = vmatpush.bf16.msra.mxu0 %v406
    %449 = vmatpush.bf16.msra.mxu0 %v405
    %450 = vmatmul.bf16.gmra.mxu0 %v330
    %v451 = vpop.f32.mrf.mxu0
    %v452 = vadd.f32 %v439, %v451
    %v453 = vpop.f32.mrf.mxu0
    %454 = vdwg.mxu0
    %456 = vset.pattern.permute.xlu0 0
    %457 = vperm.xlu0 %456, %v291
    %v458 = vpop.permute.xlu0 %457
    %v460 = vmul.f32 %v452, %v458
    %v461 = vld [vmem:[%s6 + $0x1] sm:$0x1]
    %462 = vset.pattern.permute.xlu0 1
    %463 = vperm.xlu0 %462, %v291
    %v464 = vpop.permute.xlu0 %463
    %v467 = vperm.slane %v461, 0
    %v469 = vmul.f32 %v464, %v467
    %v470 = vld [vmem:[%s6] sm:$0x1]
    %v472 = vperm.slane %v470, 0
    %v474 = vadd.f32 %v469, %v472
    %v475 = vadd.f32 %v460, %v474
    %476 = vset.pattern.permute.xlu0 2
    %477 = vperm.xlu0 %476, %v291
    %v478 = vpop.permute.xlu0 %477
    %v480 = vmul.f32 %v475, %v478
    %481 = vset.pattern.permute.xlu0 3
    %482 = vperm.xlu0 %481, %v291
    %v483 = vpop.permute.xlu0 %482
    %v485 = vadd.f32 %v480, %v483
    %v486 = vmax.f32 %v485, 0.0
    %v487 = vpack.c.bf16 %v486, %v486
    %v488 = vld [vmem:[%s8] sm:$0xf]
    %v489 = vld [vmem:[%s8 + $0x4] sm:$0xf]
    %v490 = vld [vmem:[%s8 + $0x8] sm:$0xf]
    %v491 = vld [vmem:[%s8 + $0xc] sm:$0xf]
    %v492 = vld [vmem:[%s8 + $0x10] sm:$0xf]
    %v493 = vld [vmem:[%s8 + $0x14] sm:$0xf]
    %v494 = vld [vmem:[%s8 + $0x18] sm:$0xf]
    %v495 = vld [vmem:[%s8 + $0x1c] sm:$0xf]
    %v496 = vld [vmem:[%s8 + $0x20] sm:$0xf]
    %v497 = vld [vmem:[%s8 + $0x24] sm:$0xf]
    %v498 = vld [vmem:[%s8 + $0x28] sm:$0xf]
    %v499 = vld [vmem:[%s8 + $0x2c] sm:$0xf]
    %v500 = vld [vmem:[%s8 + $0x30] sm:$0xf]
    %v501 = vld [vmem:[%s8 + $0x34] sm:$0xf]
    %v502 = vld [vmem:[%s8 + $0x38] sm:$0xf]
    %v503 = vld [vmem:[%s8 + $0x3c] sm:$0xf]
    %v504 = vld [vmem:[%s9] sm:$0xf]
    %v505 = vld [vmem:[%s9 + $0x4] sm:$0xf]
    %v506 = vld [vmem:[%s9 + $0x8] sm:$0xf]
    %v507 = vld [vmem:[%s9 + $0xc] sm:$0xf]
    %v508 = vld [vmem:[%s9 + $0x10] sm:$0xf]
    %v509 = vld [vmem:[%s9 + $0x14] sm:$0xf]
    %v510 = vld [vmem:[%s9 + $0x18] sm:$0xf]
    %v511 = vld [vmem:[%s9 + $0x1c] sm:$0xf]
    %v512 = vld [vmem:[%s9 + $0x20] sm:$0xf]
    %v513 = vld [vmem:[%s9 + $0x24] sm:$0xf]
    %v514 = vld [vmem:[%s9 + $0x28] sm:$0xf]
    %v515 = vld [vmem:[%s9 + $0x2c] sm:$0xf]
    %v516 = vld [vmem:[%s9 + $0x30] sm:$0xf]
    %v517 = vld [vmem:[%s9 + $0x34] sm:$0xf]
    %v518 = vld [vmem:[%s9 + $0x38] sm:$0xf]
    %v519 = vld [vmem:[%s9 + $0x3c] sm:$0xf]
    %v536 = vunpack.c.l.b16 %v504
    %v537 = vunpack.c.l.b16 %v505
    %v538 = vunpack.c.l.b16 %v506
    %v539 = vunpack.c.l.b16 %v507
    %v540 = vunpack.c.l.b16 %v508
    %v541 = vunpack.c.l.b16 %v509
    %v542 = vunpack.c.l.b16 %v510
    %v543 = vunpack.c.l.b16 %v511
    %v544 = vunpack.c.l.b16 %v512
    %v545 = vunpack.c.l.b16 %v513
    %v546 = vunpack.c.l.b16 %v514
    %v547 = vunpack.c.l.b16 %v515
    %v548 = vunpack.c.l.b16 %v516
    %v549 = vunpack.c.l.b16 %v517
    %v550 = vunpack.c.l.b16 %v518
    %v551 = vunpack.c.l.b16 %v519
    %v552 = vpack.c.b16 %v537, %v536
    %v553 = vpack.c.b16 %v539, %v538
    %v554 = vpack.c.b16 %v541, %v540
    %v555 = vpack.c.b16 %v543, %v542
    %v556 = vpack.c.b16 %v545, %v544
    %v557 = vpack.c.b16 %v547, %v546
    %v558 = vpack.c.b16 %v549, %v548
    %v559 = vpack.c.b16 %v551, %v550
    %568 = vmatpush.bf16.msra.mxu0 %v559
    %569 = vmatpush.bf16.msra.mxu0 %v558
    %570 = vmatpush.bf16.msra.mxu0 %v557
    %571 = vmatpush.bf16.msra.mxu0 %v556
    %572 = vmatpush.bf16.msra.mxu0 %v555
    %573 = vmatpush.bf16.msra.mxu0 %v554
    %574 = vmatpush.bf16.msra.mxu0 %v553
    %575 = vmatpush.bf16.msra.mxu0 %v552
    %576 = vmatmul.bf16.gmra.mxu0 %v292
    %v577 = vpop.f32.mrf.mxu0
    %v578 = vadd.f32 0.0, %v577
    %v579 = vpop.f32.mrf.mxu0
    %580 = vdwg.mxu0
    %v597 = vunpack.c.l.b16 %v488
    %v598 = vunpack.c.l.b16 %v489
    %v599 = vunpack.c.l.b16 %v490
    %v600 = vunpack.c.l.b16 %v491
    %v601 = vunpack.c.l.b16 %v492
    %v602 = vunpack.c.l.b16 %v493
    %v603 = vunpack.c.l.b16 %v494
    %v604 = vunpack.c.l.b16 %v495
    %v605 = vunpack.c.l.b16 %v496
    %v606 = vunpack.c.l.b16 %v497
    %v607 = vunpack.c.l.b16 %v498
    %v608 = vunpack.c.l.b16 %v499
    %v609 = vunpack.c.l.b16 %v500
    %v610 = vunpack.c.l.b16 %v501
    %v611 = vunpack.c.l.b16 %v502
    %v612 = vunpack.c.l.b16 %v503
    %v613 = vpack.c.b16 %v598, %v597
    %v614 = vpack.c.b16 %v600, %v599
    %v615 = vpack.c.b16 %v602, %v601
    %v616 = vpack.c.b16 %v604, %v603
    %v617 = vpack.c.b16 %v606, %v605
    %v618 = vpack.c.b16 %v608, %v607
    %v619 = vpack.c.b16 %v610, %v609
    %v620 = vpack.c.b16 %v612, %v611
    %629 = vmatpush.bf16.msra.mxu0 %v620
    %630 = vmatpush.bf16.msra.mxu0 %v619
    %631 = vmatpush.bf16.msra.mxu0 %v618
    %632 = vmatpush.bf16.msra.mxu0 %v617
    %633 = vmatpush.bf16.msra.mxu0 %v616
    %634 = vmatpush.bf16.msra.mxu0 %v615
    %635 = vmatpush.bf16.msra.mxu0 %v614
    %636 = vmatpush.bf16.msra.mxu0 %v613
    %637 = vmatmul.bf16.gmra.mxu0 %v487
    %v638 = vpop.f32.mrf.mxu0
    %v639 = vadd.f32 %v578, %v638
    %v640 = vpop.f32.mrf.mxu0
    %641 = vdwg.mxu0
    %v642 = vld [vmem:[%s6 + $0x2] sm:$0x1]
    %v644 = vperm.slane %v642, 0
    %v646 = vadd.f32 %v639, %v644
    %647 = vset.pattern.permute.xlu0 4
    %648 = vperm.xlu0 %647, %v291
    %v649 = vpop.permute.xlu0 %648
    %v651 = vmul.f32 %v646, %v649
    %652 = vset.pattern.permute.xlu0 5
    %653 = vperm.xlu0 %652, %v291
    %v654 = vpop.permute.xlu0 %653
    %v656 = vadd.f32 %v651, %v654
    %v657 = vmax.f32 %v656, 0.0
    %v658 = vpack.c.bf16 %v657, %v657
    %v659 = vld [vmem:[%s10] sm:$0xf]
    %v660 = vld [vmem:[%s10 + $0x4] sm:$0xf]
    %v661 = vld [vmem:[%s10 + $0x8] sm:$0xf]
    %v662 = vld [vmem:[%s10 + $0xc] sm:$0xf]
    %v663 = vld [vmem:[%s10 + $0x10] sm:$0xf]
    %v664 = vld [vmem:[%s10 + $0x14] sm:$0xf]
    %v665 = vld [vmem:[%s10 + $0x18] sm:$0xf]
    %v666 = vld [vmem:[%s10 + $0x1c] sm:$0xf]
    %v667 = vld [vmem:[%s10 + $0x20] sm:$0xf]
    %v668 = vld [vmem:[%s10 + $0x24] sm:$0xf]
    %v669 = vld [vmem:[%s10 + $0x28] sm:$0xf]
    %v670 = vld [vmem:[%s10 + $0x2c] sm:$0xf]
    %v671 = vld [vmem:[%s10 + $0x30] sm:$0xf]
    %v672 = vld [vmem:[%s10 + $0x34] sm:$0xf]
    %v673 = vld [vmem:[%s10 + $0x38] sm:$0xf]
    %v674 = vld [vmem:[%s10 + $0x3c] sm:$0xf]
    %v675 = vld [vmem:[%s6 + $0x3] sm:$0x1]
    %v677 = vperm.slane %v675, 0
    %v695 = vunpack.c.l.b16 %v659
    %v696 = vunpack.c.l.b16 %v660
    %v697 = vunpack.c.l.b16 %v661
    %v698 = vunpack.c.l.b16 %v662
    %v699 = vunpack.c.l.b16 %v663
    %v700 = vunpack.c.l.b16 %v664
    %v701 = vunpack.c.l.b16 %v665
    %v702 = vunpack.c.l.b16 %v666
    %v703 = vunpack.c.l.b16 %v667
    %v704 = vunpack.c.l.b16 %v668
    %v705 = vunpack.c.l.b16 %v669
    %v706 = vunpack.c.l.b16 %v670
    %v707 = vunpack.c.l.b16 %v671
    %v708 = vunpack.c.l.b16 %v672
    %v709 = vunpack.c.l.b16 %v673
    %v710 = vunpack.c.l.b16 %v674
    %v711 = vpack.c.b16 %v696, %v695
    %v712 = vpack.c.b16 %v698, %v697
    %v713 = vpack.c.b16 %v700, %v699
    %v714 = vpack.c.b16 %v702, %v701
    %v715 = vpack.c.b16 %v704, %v703
    %v716 = vpack.c.b16 %v706, %v705
    %v717 = vpack.c.b16 %v708, %v707
    %v718 = vpack.c.b16 %v710, %v709
    %727 = vmatpush.bf16.msra.mxu0 %v718
    %728 = vmatpush.bf16.msra.mxu0 %v717
    %729 = vmatpush.bf16.msra.mxu0 %v716
    %730 = vmatpush.bf16.msra.mxu0 %v715
    %731 = vmatpush.bf16.msra.mxu0 %v714
    %732 = vmatpush.bf16.msra.mxu0 %v713
    %733 = vmatpush.bf16.msra.mxu0 %v712
    %734 = vmatpush.bf16.msra.mxu0 %v711
    %735 = vmatmul.bf16.gmra.mxu0 %v658
    %v736 = vpop.f32.mrf.mxu0
    %v737 = vadd.f32 %v677, %v736
    %v738 = vpop.f32.mrf.mxu0
    %739 = vdwg.mxu0
    %740 = vset.pattern.permute.xlu0 6
    %741 = vperm.xlu0 %740, %v291
    %v742 = vpop.permute.xlu0 %741
    %v744 = vmul.f32 %v737, %v742
    %745 = vset.pattern.permute.xlu0 7
    %746 = vperm.xlu0 %745, %v291
    %v747 = vpop.permute.xlu0 %746
    %v749 = vadd.f32 %v744, %v747
    %v750 = vmax.f32 %v749, 0.0
    %v751 = vpack.c.bf16 %v750, %v750
    %v752 = vld [vmem:[%s11] sm:$0xf]
    %v753 = vld [vmem:[%s11 + $0x4] sm:$0xf]
    %v754 = vld [vmem:[%s11 + $0x8] sm:$0xf]
    %v755 = vld [vmem:[%s11 + $0xc] sm:$0xf]
    %v756 = vld [vmem:[%s11 + $0x10] sm:$0xf]
    %v757 = vld [vmem:[%s11 + $0x14] sm:$0xf]
    %v758 = vld [vmem:[%s11 + $0x18] sm:$0xf]
    %v759 = vld [vmem:[%s11 + $0x1c] sm:$0xf]
    %v760 = vld [vmem:[%s11 + $0x20] sm:$0xf]
    %v761 = vld [vmem:[%s11 + $0x24] sm:$0xf]
    %v762 = vld [vmem:[%s11 + $0x28] sm:$0xf]
    %v763 = vld [vmem:[%s11 + $0x2c] sm:$0xf]
    %v764 = vld [vmem:[%s11 + $0x30] sm:$0xf]
    %v765 = vld [vmem:[%s11 + $0x34] sm:$0xf]
    %v766 = vld [vmem:[%s11 + $0x38] sm:$0xf]
    %v767 = vld [vmem:[%s11 + $0x3c] sm:$0xf]
    %v768 = vld [vmem:[%s6 + $0x4] sm:$0x1]
    %v770 = vperm.slane %v768, 0
    %v788 = vunpack.c.l.b16 %v752
    %v789 = vunpack.c.l.b16 %v753
    %v790 = vunpack.c.l.b16 %v754
    %v791 = vunpack.c.l.b16 %v755
    %v792 = vunpack.c.l.b16 %v756
    %v793 = vunpack.c.l.b16 %v757
    %v794 = vunpack.c.l.b16 %v758
    %v795 = vunpack.c.l.b16 %v759
    %v796 = vunpack.c.l.b16 %v760
    %v797 = vunpack.c.l.b16 %v761
    %v798 = vunpack.c.l.b16 %v762
    %v799 = vunpack.c.l.b16 %v763
    %v800 = vunpack.c.l.b16 %v764
    %v801 = vunpack.c.l.b16 %v765
    %v802 = vunpack.c.l.b16 %v766
    %v803 = vunpack.c.l.b16 %v767
    %v804 = vpack.c.b16 %v789, %v788
    %v805 = vpack.c.b16 %v791, %v790
    %v806 = vpack.c.b16 %v793, %v792
    %v807 = vpack.c.b16 %v795, %v794
    %v808 = vpack.c.b16 %v797, %v796
    %v809 = vpack.c.b16 %v799, %v798
    %v810 = vpack.c.b16 %v801, %v800
    %v811 = vpack.c.b16 %v803, %v802
    %820 = vmatpush.bf16.msra.mxu0 %v811
    %821 = vmatpush.bf16.msra.mxu0 %v810
    %822 = vmatpush.bf16.msra.mxu0 %v809
    %823 = vmatpush.bf16.msra.mxu0 %v808
    %824 = vmatpush.bf16.msra.mxu0 %v807
    %825 = vmatpush.bf16.msra.mxu0 %v806
    %826 = vmatpush.bf16.msra.mxu0 %v805
    %827 = vmatpush.bf16.msra.mxu0 %v804
    %828 = vmatmul.bf16.gmra.mxu0 %v751
    %v829 = vpop.f32.mrf.mxu0
    %v830 = vadd.f32 %v770, %v829
    %v831 = vpop.f32.mrf.mxu0
    %832 = vdwg.mxu0
    %833 = vset.pattern.permute.xlu0 8
    %834 = vperm.xlu0 %833, %v291
    %v835 = vpop.permute.xlu0 %834
    %v837 = vmul.f32 %v830, %v835
    %838 = vset.pattern.permute.xlu0 9
    %839 = vperm.xlu0 %838, %v291
    %v840 = vpop.permute.xlu0 %839
    %v842 = vadd.f32 %v837, %v840
    %v843 = vadd.f32 %v842, %v657
    %v844 = vmax.f32 %v843, 0.0
    %v845 = vpack.c.bf16 %v844, %v844
    %v846 = vld [vmem:[#allocation2] sm:$0xf]
    %v847 = vld [vmem:[#allocation2 + $0x4] sm:$0xf]
    %v848 = vld [vmem:[#allocation2 + $0x8] sm:$0xf]
    %v849 = vld [vmem:[#allocation2 + $0xc] sm:$0xf]
    %v850 = vld [vmem:[#allocation2 + $0x10] sm:$0xf]
    %v851 = vld [vmem:[#allocation2 + $0x14] sm:$0xf]
    %v852 = vld [vmem:[#allocation2 + $0x18] sm:$0xf]
    %v853 = vld [vmem:[#allocation2 + $0x1c] sm:$0xf]
    %v854 = vld [vmem:[#allocation2 + $0x20] sm:$0xf]
    %v855 = vld [vmem:[#allocation2 + $0x24] sm:$0xf]
    %v856 = vld [vmem:[#allocation2 + $0x28] sm:$0xf]
    %v857 = vld [vmem:[#allocation2 + $0x2c] sm:$0xf]
    %v858 = vld [vmem:[#allocation2 + $0x30] sm:$0xf]
    %v859 = vld [vmem:[#allocation2 + $0x34] sm:$0xf]
    %v860 = vld [vmem:[#allocation2 + $0x38] sm:$0xf]
    %v861 = vld [vmem:[#allocation2 + $0x3c] sm:$0xf]
    %v862 = vld [vmem:[%s6 + $0x5] sm:$0x1]
    %v864 = vperm.slane %v862, 0
    %v882 = vunpack.c.l.b16 %v846
    %v883 = vunpack.c.l.b16 %v847
    %v884 = vunpack.c.l.b16 %v848
    %v885 = vunpack.c.l.b16 %v849
    %v886 = vunpack.c.l.b16 %v850
    %v887 = vunpack.c.l.b16 %v851
    %v888 = vunpack.c.l.b16 %v852
    %v889 = vunpack.c.l.b16 %v853
    %v890 = vunpack.c.l.b16 %v854
    %v891 = vunpack.c.l.b16 %v855
    %v892 = vunpack.c.l.b16 %v856
    %v893 = vunpack.c.l.b16 %v857
    %v894 = vunpack.c.l.b16 %v858
    %v895 = vunpack.c.l.b16 %v859
    %v896 = vunpack.c.l.b16 %v860
    %v897 = vunpack.c.l.b16 %v861
    %v898 = vpack.c.b16 %v883, %v882
    %v899 = vpack.c.b16 %v885, %v884
    %v900 = vpack.c.b16 %v887, %v886
    %v901 = vpack.c.b16 %v889, %v888
    %v902 = vpack.c.b16 %v891, %v890
    %v903 = vpack.c.b16 %v893, %v892
    %v904 = vpack.c.b16 %v895, %v894
    %v905 = vpack.c.b16 %v897, %v896
    %914 = vmatpush.bf16.msra.mxu0 %v905
    %915 = vmatpush.bf16.msra.mxu0 %v904
    %916 = vmatpush.bf16.msra.mxu0 %v903
    %917 = vmatpush.bf16.msra.mxu0 %v902
    %918 = vmatpush.bf16.msra.mxu0 %v901
    %919 = vmatpush.bf16.msra.mxu0 %v900
    %920 = vmatpush.bf16.msra.mxu0 %v899
    %921 = vmatpush.bf16.msra.mxu0 %v898
    %922 = vmatmul.bf16.gmra.mxu0 %v845
    %v923 = vpop.f32.mrf.mxu0
    %v924 = vadd.f32 %v864, %v923
    %v925 = vpop.f32.mrf.mxu0
    %926 = vdwg.mxu0
    %927 = vset.pattern.permute.xlu0 10
    %928 = vperm.xlu0 %927, %v291
    %v929 = vpop.permute.xlu0 %928
    %v931 = vmul.f32 %v924, %v929
    %932 = vset.pattern.permute.xlu0 11
    %933 = vperm.xlu0 %932, %v291
    %v934 = vpop.permute.xlu0 %933
    %v936 = vadd.f32 %v931, %v934
    %v937 = vmax.f32 %v936, 0.0
    %v938 = vpack.c.bf16 %v937, %v937
    %v939 = vld [vmem:[#allocation4] sm:$0xf]
    %v940 = vld [vmem:[#allocation4 + $0x4] sm:$0xf]
    %v941 = vld [vmem:[#allocation4 + $0x8] sm:$0xf]
    %v942 = vld [vmem:[#allocation4 + $0xc] sm:$0xf]
    %v943 = vld [vmem:[#allocation4 + $0x10] sm:$0xf]
    %v944 = vld [vmem:[#allocation4 + $0x14] sm:$0xf]
    %v945 = vld [vmem:[#allocation4 + $0x18] sm:$0xf]
    %v946 = vld [vmem:[#allocation4 + $0x1c] sm:$0xf]
    %v947 = vld [vmem:[#allocation4 + $0x20] sm:$0xf]
    %v948 = vld [vmem:[#allocation4 + $0x24] sm:$0xf]
    %v949 = vld [vmem:[#allocation4 + $0x28] sm:$0xf]
    %v950 = vld [vmem:[#allocation4 + $0x2c] sm:$0xf]
    %v951 = vld [vmem:[#allocation4 + $0x30] sm:$0xf]
    %v952 = vld [vmem:[#allocation4 + $0x34] sm:$0xf]
    %v953 = vld [vmem:[#allocation4 + $0x38] sm:$0xf]
    %v954 = vld [vmem:[#allocation4 + $0x3c] sm:$0xf]
    %v955 = vld [vmem:[%s6 + $0x6] sm:$0x1]
    %v957 = vperm.slane %v955, 0
    %v975 = vunpack.c.l.b16 %v939
    %v976 = vunpack.c.l.b16 %v940
    %v977 = vunpack.c.l.b16 %v941
    %v978 = vunpack.c.l.b16 %v942
    %v979 = vunpack.c.l.b16 %v943
    %v980 = vunpack.c.l.b16 %v944
    %v981 = vunpack.c.l.b16 %v945
    %v982 = vunpack.c.l.b16 %v946
    %v983 = vunpack.c.l.b16 %v947
    %v984 = vunpack.c.l.b16 %v948
    %v985 = vunpack.c.l.b16 %v949
    %v986 = vunpack.c.l.b16 %v950
    %v987 = vunpack.c.l.b16 %v951
    %v988 = vunpack.c.l.b16 %v952
    %v989 = vunpack.c.l.b16 %v953
    %v990 = vunpack.c.l.b16 %v954
    %v991 = vpack.c.b16 %v976, %v975
    %v992 = vpack.c.b16 %v978, %v977
    %v993 = vpack.c.b16 %v980, %v979
    %v994 = vpack.c.b16 %v982, %v981
    %v995 = vpack.c.b16 %v984, %v983
    %v996 = vpack.c.b16 %v986, %v985
    %v997 = vpack.c.b16 %v988, %v987
    %v998 = vpack.c.b16 %v990, %v989
    %1007 = vmatpush.bf16.msra.mxu0 %v998
    %1008 = vmatpush.bf16.msra.mxu0 %v997
    %1009 = vmatpush.bf16.msra.mxu0 %v996
    %1010 = vmatpush.bf16.msra.mxu0 %v995
    %1011 = vmatpush.bf16.msra.mxu0 %v994
    %1012 = vmatpush.bf16.msra.mxu0 %v993
    %1013 = vmatpush.bf16.msra.mxu0 %v992
    %1014 = vmatpush.bf16.msra.mxu0 %v991
    %1015 = vmatmul.bf16.gmra.mxu0 %v938
    %v1016 = vpop.f32.mrf.mxu0
    %v1017 = vadd.f32 %v957, %v1016
    %v1018 = vpop.f32.mrf.mxu0
    %1019 = vdwg.mxu0
    %1020 = vset.pattern.permute.xlu0 12
    %1021 = vperm.xlu0 %1020, %v291
    %v1022 = vpop.permute.xlu0 %1021
    %v1024 = vmul.f32 %v1017, %v1022
    %1025 = vset.pattern.permute.xlu0 13
    %1026 = vperm.xlu0 %1025, %v291
    %v1027 = vpop.permute.xlu0 %1026
    %v1029 = vadd.f32 %v1024, %v1027
    %v1030 = vadd.f32 %v1029, %v844
    %v1031 = vmax.f32 %v1030, 0.0
    %v1032 = vpack.c.bf16 %v1031, %v1031
    %v1033 = vld [vmem:[%s14] sm:$0xf]
    %v1034 = vld [vmem:[%s14 + $0x4] sm:$0xf]
    %v1035 = vld [vmem:[%s14 + $0x8] sm:$0xf]
    %v1036 = vld [vmem:[%s14 + $0xc] sm:$0xf]
    %v1037 = vld [vmem:[%s14 + $0x10] sm:$0xf]
    %v1038 = vld [vmem:[%s14 + $0x14] sm:$0xf]
    %v1039 = vld [vmem:[%s14 + $0x18] sm:$0xf]
    %v1040 = vld [vmem:[%s14 + $0x1c] sm:$0xf]
    %v1041 = vld [vmem:[%s14 + $0x20] sm:$0xf]
    %v1042 = vld [vmem:[%s14 + $0x24] sm:$0xf]
    %v1043 = vld [vmem:[%s14 + $0x28] sm:$0xf]
    %v1044 = vld [vmem:[%s14 + $0x2c] sm:$0xf]
    %v1045 = vld [vmem:[%s14 + $0x30] sm:$0xf]
    %v1046 = vld [vmem:[%s14 + $0x34] sm:$0xf]
    %v1047 = vld [vmem:[%s14 + $0x38] sm:$0xf]
    %v1048 = vld [vmem:[%s14 + $0x3c] sm:$0xf]
    %v1049 = vld [vmem:[%s6 + $0x11] sm:$0x1]
    %v1051 = vperm.slane %v1049, 0
    %v1069 = vunpack.c.l.b16 %v1033
    %v1070 = vunpack.c.l.b16 %v1034
    %v1071 = vunpack.c.l.b16 %v1035
    %v1072 = vunpack.c.l.b16 %v1036
    %v1073 = vunpack.c.l.b16 %v1037
    %v1074 = vunpack.c.l.b16 %v1038
    %v1075 = vunpack.c.l.b16 %v1039
    %v1076 = vunpack.c.l.b16 %v1040
    %v1077 = vunpack.c.l.b16 %v1041
    %v1078 = vunpack.c.l.b16 %v1042
    %v1079 = vunpack.c.l.b16 %v1043
    %v1080 = vunpack.c.l.b16 %v1044
    %v1081 = vunpack.c.l.b16 %v1045
    %v1082 = vunpack.c.l.b16 %v1046
    %v1083 = vunpack.c.l.b16 %v1047
    %v1084 = vunpack.c.l.b16 %v1048
    %v1085 = vpack.c.b16 %v1070, %v1069
    %v1086 = vpack.c.b16 %v1072, %v1071
    %v1087 = vpack.c.b16 %v1074, %v1073
    %v1088 = vpack.c.b16 %v1076, %v1075
    %v1089 = vpack.c.b16 %v1078, %v1077
    %v1090 = vpack.c.b16 %v1080, %v1079
    %v1091 = vpack.c.b16 %v1082, %v1081
    %v1092 = vpack.c.b16 %v1084, %v1083
    %1101 = vmatpush.bf16.msra.mxu0 %v1092
    %1102 = vmatpush.bf16.msra.mxu0 %v1091
    %1103 = vmatpush.bf16.msra.mxu0 %v1090
    %1104 = vmatpush.bf16.msra.mxu0 %v1089
    %1105 = vmatpush.bf16.msra.mxu0 %v1088
    %1106 = vmatpush.bf16.msra.mxu0 %v1087
    %1107 = vmatpush.bf16.msra.mxu0 %v1086
    %1108 = vmatpush.bf16.msra.mxu0 %v1085
    %1109 = vmatmul.bf16.gmra.mxu0 %v1032
    %v1110 = vpop.f32.mrf.mxu0
    %v1111 = vadd.f32 %v1051, %v1110
    %v1112 = vpop.f32.mrf.mxu0
    %1113 = vdwg.mxu0
    %vm1114 = vcmask 523264
    %1115 = vst.msk [vmem:[%s28] sm:$0xff] %vm1114, %v1111
    %v1116 = vld [vmem:[%s4] sm:$0xff]
    %v1117 = vmul.f32 %v1111, 0.5
    %v1118 = vmul.f32 %v1117, 1.442695
    %v1119 = vpow.pop %v1118
    %1121 = vrot.lane.b32.xlu0 %v1119, 96
    %v1122 = vpop.permute.xlu0 %1121
    %v1124 = vmul.f32 %v1116, %v1122
    %v1125 = vadd.f32 %v1124, %v1111
    %v1126 = vpack.c.bf16 %v1125, %v1125
    %v1127 = vld [vmem:[#allocation6] sm:$0xf]
    %v1128 = vld [vmem:[#allocation6 + $0x4] sm:$0xf]
    %v1129 = vld [vmem:[#allocation6 + $0x8] sm:$0xf]
    %v1130 = vld [vmem:[#allocation6 + $0xc] sm:$0xf]
    %v1131 = vld [vmem:[%s6 + $0x7] sm:$0x1]
    %v1133 = vperm.slane %v1131, 0
    %v1139 = vunpack.c.l.b16 %v1127
    %v1140 = vunpack.c.l.b16 %v1128
    %v1141 = vunpack.c.l.b16 %v1129
    %v1142 = vunpack.c.l.b16 %v1130
    %v1143 = vpack.c.b16 %v1140, %v1139
    %v1144 = vpack.c.b16 %v1142, %v1141
    %vm1147 = vcmask 261120
    %v1149 = vsel %vm1147, %v1126, 0
    %1151 = vmatpush.bf16.msra.mxu0 0
    %1152 = vmatpush.bf16.msra.mxu0 0
    %1153 = vmatpush.bf16.msra.mxu0 0
    %1154 = vmatpush.bf16.msra.mxu0 0
    %1155 = vmatpush.bf16.msra.mxu0 0
    %1156 = vmatpush.bf16.msra.mxu0 0
    %1157 = vmatpush.bf16.msra.mxu0 %v1144
    %1158 = vmatpush.bf16.msra.mxu0 %v1143
    %1159 = vmatmul.bf16.gmra.mxu0 %v1149
    %v1160 = vpop.f32.mrf.mxu0
    %v1161 = vadd.f32 %v1133, %v1160
    %v1162 = vpop.f32.mrf.mxu0
    %1163 = vdwg.mxu0
    %1164 = vset.pattern.permute.xlu0 14
    %1165 = vperm.xlu0 %1164, %v291
    %v1166 = vpop.permute.xlu0 %1165
    %v1168 = vmul.f32 %v1161, %v1166
    %1169 = vset.pattern.permute.xlu0 15
    %1170 = vperm.xlu0 %1169, %v291
    %v1171 = vpop.permute.xlu0 %1170
    %v1173 = vadd.f32 %v1168, %v1171
    %v1174 = vmax.f32 %v1173, 0.0
    %v1175 = vpack.c.bf16 %v1174, %v1174
    %v1176 = vld [vmem:[#allocation7] sm:$0xf]
    %v1177 = vld [vmem:[#allocation7 + $0x4] sm:$0xf]
    %v1178 = vld [vmem:[#allocation7 + $0x8] sm:$0xf]
    %v1179 = vld [vmem:[#allocation7 + $0xc] sm:$0xf]
    %v1180 = vld [vmem:[#allocation7 + $0x10] sm:$0xf]
    %v1181 = vld [vmem:[#allocation7 + $0x14] sm:$0xf]
    %v1182 = vld [vmem:[#allocation7 + $0x18] sm:$0xf]
    %v1183 = vld [vmem:[#allocation7 + $0x1c] sm:$0xf]
    %v1184 = vld [vmem:[#allocation7 + $0x20] sm:$0xf]
    %v1185 = vld [vmem:[#allocation7 + $0x24] sm:$0xf]
    %v1186 = vld [vmem:[#allocation7 + $0x28] sm:$0xf]
    %v1187 = vld [vmem:[#allocation7 + $0x2c] sm:$0xf]
    %v1188 = vld [vmem:[#allocation7 + $0x30] sm:$0xf]
    %v1189 = vld [vmem:[#allocation7 + $0x34] sm:$0xf]
    %v1190 = vld [vmem:[#allocation7 + $0x38] sm:$0xf]
    %v1191 = vld [vmem:[#allocation7 + $0x3c] sm:$0xf]
    %v1192 = vld [vmem:[#allocation9] sm:$0xf]
    %v1193 = vld [vmem:[#allocation9 + $0x4] sm:$0xf]
    %v1194 = vld [vmem:[#allocation9 + $0x8] sm:$0xf]
    %v1195 = vld [vmem:[#allocation9 + $0xc] sm:$0xf]
    %v1196 = vld [vmem:[#allocation9 + $0x10] sm:$0xf]
    %v1197 = vld [vmem:[#allocation9 + $0x14] sm:$0xf]
    %v1198 = vld [vmem:[#allocation9 + $0x18] sm:$0xf]
    %v1199 = vld [vmem:[#allocation9 + $0x1c] sm:$0xf]
    %v1200 = vld [vmem:[#allocation9 + $0x20] sm:$0xf]
    %v1201 = vld [vmem:[#allocation9 + $0x24] sm:$0xf]
    %v1202 = vld [vmem:[#allocation9 + $0x28] sm:$0xf]
    %v1203 = vld [vmem:[#allocation9 + $0x2c] sm:$0xf]
    %v1204 = vld [vmem:[#allocation9 + $0x30] sm:$0xf]
    %v1205 = vld [vmem:[#allocation9 + $0x34] sm:$0xf]
    %v1206 = vld [vmem:[#allocation9 + $0x38] sm:$0xf]
    %v1207 = vld [vmem:[#allocation9 + $0x3c] sm:$0xf]
    %v1224 = vunpack.c.l.b16 %v1192
    %v1225 = vunpack.c.l.b16 %v1193
    %v1226 = vunpack.c.l.b16 %v1194
    %v1227 = vunpack.c.l.b16 %v1195
    %v1228 = vunpack.c.l.b16 %v1196
    %v1229 = vunpack.c.l.b16 %v1197
    %v1230 = vunpack.c.l.b16 %v1198
    %v1231 = vunpack.c.l.b16 %v1199
    %v1232 = vunpack.c.l.b16 %v1200
    %v1233 = vunpack.c.l.b16 %v1201
    %v1234 = vunpack.c.l.b16 %v1202
    %v1235 = vunpack.c.l.b16 %v1203
    %v1236 = vunpack.c.l.b16 %v1204
    %v1237 = vunpack.c.l.b16 %v1205
    %v1238 = vunpack.c.l.b16 %v1206
    %v1239 = vunpack.c.l.b16 %v1207
    %v1240 = vpack.c.b16 %v1225, %v1224
    %v1241 = vpack.c.b16 %v1227, %v1226
    %v1242 = vpack.c.b16 %v1229, %v1228
    %v1243 = vpack.c.b16 %v1231, %v1230
    %v1244 = vpack.c.b16 %v1233, %v1232
    %v1245 = vpack.c.b16 %v1235, %v1234
    %v1246 = vpack.c.b16 %v1237, %v1236
    %v1247 = vpack.c.b16 %v1239, %v1238
    %1256 = vmatpush.bf16.msra.mxu0 %v1247
    %1257 = vmatpush.bf16.msra.mxu0 %v1246
    %1258 = vmatpush.bf16.msra.mxu0 %v1245
    %1259 = vmatpush.bf16.msra.mxu0 %v1244
    %1260 = vmatpush.bf16.msra.mxu0 %v1243
    %1261 = vmatpush.bf16.msra.mxu0 %v1242
    %1262 = vmatpush.bf16.msra.mxu0 %v1241
    %1263 = vmatpush.bf16.msra.mxu0 %v1240
    %1264 = vmatmul.bf16.gmra.mxu0 %v292
    %v1265 = vpop.f32.mrf.mxu0
    %v1266 = vadd.f32 0.0, %v1265
    %v1267 = vpop.f32.mrf.mxu0
    %1268 = vdwg.mxu0
    %v1285 = vunpack.c.l.b16 %v1176
    %v1286 = vunpack.c.l.b16 %v1177
    %v1287 = vunpack.c.l.b16 %v1178
    %v1288 = vunpack.c.l.b16 %v1179
    %v1289 = vunpack.c.l.b16 %v1180
    %v1290 = vunpack.c.l.b16 %v1181
    %v1291 = vunpack.c.l.b16 %v1182
    %v1292 = vunpack.c.l.b16 %v1183
    %v1293 = vunpack.c.l.b16 %v1184
    %v1294 = vunpack.c.l.b16 %v1185
    %v1295 = vunpack.c.l.b16 %v1186
    %v1296 = vunpack.c.l.b16 %v1187
    %v1297 = vunpack.c.l.b16 %v1188
    %v1298 = vunpack.c.l.b16 %v1189
    %v1299 = vunpack.c.l.b16 %v1190
    %v1300 = vunpack.c.l.b16 %v1191
    %v1301 = vpack.c.b16 %v1286, %v1285
    %v1302 = vpack.c.b16 %v1288, %v1287
    %v1303 = vpack.c.b16 %v1290, %v1289
    %v1304 = vpack.c.b16 %v1292, %v1291
    %v1305 = vpack.c.b16 %v1294, %v1293
    %v1306 = vpack.c.b16 %v1296, %v1295
    %v1307 = vpack.c.b16 %v1298, %v1297
    %v1308 = vpack.c.b16 %v1300, %v1299
    %1317 = vmatpush.bf16.msra.mxu0 %v1308
    %1318 = vmatpush.bf16.msra.mxu0 %v1307
    %1319 = vmatpush.bf16.msra.mxu0 %v1306
    %1320 = vmatpush.bf16.msra.mxu0 %v1305
    %1321 = vmatpush.bf16.msra.mxu0 %v1304
    %1322 = vmatpush.bf16.msra.mxu0 %v1303
    %1323 = vmatpush.bf16.msra.mxu0 %v1302
    %1324 = vmatpush.bf16.msra.mxu0 %v1301
    %1325 = vmatmul.bf16.gmra.mxu0 %v1175
    %v1326 = vpop.f32.mrf.mxu0
    %v1327 = vadd.f32 %v1266, %v1326
    %v1328 = vpop.f32.mrf.mxu0
    %1329 = vdwg.mxu0
    %v1330 = vld [vmem:[%s6 + $0x8] sm:$0x1]
    %v1332 = vperm.slane %v1330, 0
    %v1334 = vadd.f32 %v1327, %v1332
    %1335 = vset.pattern.permute.xlu0 16
    %1336 = vperm.xlu0 %1335, %v291
    %v1337 = vpop.permute.xlu0 %1336
    %v1339 = vmul.f32 %v1334, %v1337
    %1340 = vset.pattern.permute.xlu0 17
    %1341 = vperm.xlu0 %1340, %v291
    %v1342 = vpop.permute.xlu0 %1341
    %v1344 = vadd.f32 %v1339, %v1342
    %v1345 = vmax.f32 %v1344, 0.0
    %v1346 = vpack.c.bf16 %v1345, %v1345
    %v1347 = vld [vmem:[#allocation10] sm:$0xf]
    %v1348 = vld [vmem:[#allocation10 + $0x4] sm:$0xf]
    %v1349 = vld [vmem:[#allocation10 + $0x8] sm:$0xf]
    %v1350 = vld [vmem:[#allocation10 + $0xc] sm:$0xf]
    %v1351 = vld [vmem:[#allocation10 + $0x10] sm:$0xf]
    %v1352 = vld [vmem:[#allocation10 + $0x14] sm:$0xf]
    %v1353 = vld [vmem:[#allocation10 + $0x18] sm:$0xf]
    %v1354 = vld [vmem:[#allocation10 + $0x1c] sm:$0xf]
    %v1355 = vld [vmem:[#allocation10 + $0x20] sm:$0xf]
    %v1356 = vld [vmem:[#allocation10 + $0x24] sm:$0xf]
    %v1357 = vld [vmem:[#allocation10 + $0x28] sm:$0xf]
    %v1358 = vld [vmem:[#allocation10 + $0x2c] sm:$0xf]
    %v1359 = vld [vmem:[#allocation10 + $0x30] sm:$0xf]
    %v1360 = vld [vmem:[#allocation10 + $0x34] sm:$0xf]
    %v1361 = vld [vmem:[#allocation10 + $0x38] sm:$0xf]
    %v1362 = vld [vmem:[#allocation10 + $0x3c] sm:$0xf]
    %v1363 = vld [vmem:[%s6 + $0x9] sm:$0x1]
    %v1365 = vperm.slane %v1363, 0
    %v1383 = vunpack.c.l.b16 %v1347
    %v1384 = vunpack.c.l.b16 %v1348
    %v1385 = vunpack.c.l.b16 %v1349
    %v1386 = vunpack.c.l.b16 %v1350
    %v1387 = vunpack.c.l.b16 %v1351
    %v1388 = vunpack.c.l.b16 %v1352
    %v1389 = vunpack.c.l.b16 %v1353
    %v1390 = vunpack.c.l.b16 %v1354
    %v1391 = vunpack.c.l.b16 %v1355
    %v1392 = vunpack.c.l.b16 %v1356
    %v1393 = vunpack.c.l.b16 %v1357
    %v1394 = vunpack.c.l.b16 %v1358
    %v1395 = vunpack.c.l.b16 %v1359
    %v1396 = vunpack.c.l.b16 %v1360
    %v1397 = vunpack.c.l.b16 %v1361
    %v1398 = vunpack.c.l.b16 %v1362
    %v1399 = vpack.c.b16 %v1384, %v1383
    %v1400 = vpack.c.b16 %v1386, %v1385
    %v1401 = vpack.c.b16 %v1388, %v1387
    %v1402 = vpack.c.b16 %v1390, %v1389
    %v1403 = vpack.c.b16 %v1392, %v1391
    %v1404 = vpack.c.b16 %v1394, %v1393
    %v1405 = vpack.c.b16 %v1396, %v1395
    %v1406 = vpack.c.b16 %v1398, %v1397
    %1415 = vmatpush.bf16.msra.mxu0 %v1406
    %1416 = vmatpush.bf16.msra.mxu0 %v1405
    %1417 = vmatpush.bf16.msra.mxu0 %v1404
    %1418 = vmatpush.bf16.msra.mxu0 %v1403
    %1419 = vmatpush.bf16.msra.mxu0 %v1402
    %1420 = vmatpush.bf16.msra.mxu0 %v1401
    %1421 = vmatpush.bf16.msra.mxu0 %v1400
    %1422 = vmatpush.bf16.msra.mxu0 %v1399
    %1423 = vmatmul.bf16.gmra.mxu0 %v1346
    %v1424 = vpop.f32.mrf.mxu0
    %v1425 = vadd.f32 %v1365, %v1424
    %v1426 = vpop.f32.mrf.mxu0
    %1427 = vdwg.mxu0
    %1428 = vset.pattern.permute.xlu0 18
    %1429 = vperm.xlu0 %1428, %v291
    %v1430 = vpop.permute.xlu0 %1429
    %v1432 = vmul.f32 %v1425, %v1430
    %1433 = vset.pattern.permute.xlu0 19
    %1434 = vperm.xlu0 %1433, %v291
    %v1435 = vpop.permute.xlu0 %1434
    %v1437 = vadd.f32 %v1432, %v1435
    %v1438 = vmax.f32 %v1437, 0.0
    %v1439 = vpack.c.bf16 %v1438, %v1438
    %v1440 = vld [vmem:[#allocation12] sm:$0xf]
    %v1441 = vld [vmem:[#allocation12 + $0x4] sm:$0xf]
    %v1442 = vld [vmem:[#allocation12 + $0x8] sm:$0xf]
    %v1443 = vld [vmem:[#allocation12 + $0xc] sm:$0xf]
    %v1444 = vld [vmem:[#allocation12 + $0x10] sm:$0xf]
    %v1445 = vld [vmem:[#allocation12 + $0x14] sm:$0xf]
    %v1446 = vld [vmem:[#allocation12 + $0x18] sm:$0xf]
    %v1447 = vld [vmem:[#allocation12 + $0x1c] sm:$0xf]
    %v1448 = vld [vmem:[#allocation12 + $0x20] sm:$0xf]
    %v1449 = vld [vmem:[#allocation12 + $0x24] sm:$0xf]
    %v1450 = vld [vmem:[#allocation12 + $0x28] sm:$0xf]
    %v1451 = vld [vmem:[#allocation12 + $0x2c] sm:$0xf]
    %v1452 = vld [vmem:[#allocation12 + $0x30] sm:$0xf]
    %v1453 = vld [vmem:[#allocation12 + $0x34] sm:$0xf]
    %v1454 = vld [vmem:[#allocation12 + $0x38] sm:$0xf]
    %v1455 = vld [vmem:[#allocation12 + $0x3c] sm:$0xf]
    %v1456 = vld [vmem:[%s6 + $0xa] sm:$0x1]
    %v1458 = vperm.slane %v1456, 0
    %v1476 = vunpack.c.l.b16 %v1440
    %v1477 = vunpack.c.l.b16 %v1441
    %v1478 = vunpack.c.l.b16 %v1442
    %v1479 = vunpack.c.l.b16 %v1443
    %v1480 = vunpack.c.l.b16 %v1444
    %v1481 = vunpack.c.l.b16 %v1445
    %v1482 = vunpack.c.l.b16 %v1446
    %v1483 = vunpack.c.l.b16 %v1447
    %v1484 = vunpack.c.l.b16 %v1448
    %v1485 = vunpack.c.l.b16 %v1449
    %v1486 = vunpack.c.l.b16 %v1450
    %v1487 = vunpack.c.l.b16 %v1451
    %v1488 = vunpack.c.l.b16 %v1452
    %v1489 = vunpack.c.l.b16 %v1453
    %v1490 = vunpack.c.l.b16 %v1454
    %v1491 = vunpack.c.l.b16 %v1455
    %v1492 = vpack.c.b16 %v1477, %v1476
    %v1493 = vpack.c.b16 %v1479, %v1478
    %v1494 = vpack.c.b16 %v1481, %v1480
    %v1495 = vpack.c.b16 %v1483, %v1482
    %v1496 = vpack.c.b16 %v1485, %v1484
    %v1497 = vpack.c.b16 %v1487, %v1486
    %v1498 = vpack.c.b16 %v1489, %v1488
    %v1499 = vpack.c.b16 %v1491, %v1490
    %1508 = vmatpush.bf16.msra.mxu0 %v1499
    %1509 = vmatpush.bf16.msra.mxu0 %v1498
    %1510 = vmatpush.bf16.msra.mxu0 %v1497
    %1511 = vmatpush.bf16.msra.mxu0 %v1496
    %1512 = vmatpush.bf16.msra.mxu0 %v1495
    %1513 = vmatpush.bf16.msra.mxu0 %v1494
    %1514 = vmatpush.bf16.msra.mxu0 %v1493
    %1515 = vmatpush.bf16.msra.mxu0 %v1492
    %1516 = vmatmul.bf16.gmra.mxu0 %v1439
    %v1517 = vpop.f32.mrf.mxu0
    %v1518 = vadd.f32 %v1458, %v1517
    %v1519 = vpop.f32.mrf.mxu0
    %1520 = vdwg.mxu0
    %1521 = vset.pattern.permute.xlu0 20
    %1522 = vperm.xlu0 %1521, %v291
    %v1523 = vpop.permute.xlu0 %1522
    %v1525 = vmul.f32 %v1518, %v1523
    %1526 = vset.pattern.permute.xlu0 21
    %1527 = vperm.xlu0 %1526, %v291
    %v1528 = vpop.permute.xlu0 %1527
    %v1530 = vadd.f32 %v1525, %v1528
    %v1531 = vadd.f32 %v1530, %v1345
    %v1532 = vmax.f32 %v1531, 0.0
    %v1533 = vld [vmem:[%s2] sm:$0xf]
    %v1534 = vpack.c.bf16 %v1532, %v1532
    %v1535 = vld [vmem:[#allocation13] sm:$0xf]
    %v1536 = vld [vmem:[#allocation13 + $0x4] sm:$0xf]
    %v1537 = vld [vmem:[#allocation13 + $0x8] sm:$0xf]
    %v1538 = vld [vmem:[#allocation13 + $0xc] sm:$0xf]
    %v1539 = vld [vmem:[#allocation13 + $0x10] sm:$0xf]
    %v1540 = vld [vmem:[#allocation13 + $0x14] sm:$0xf]
    %v1541 = vld [vmem:[#allocation13 + $0x18] sm:$0xf]
    %v1542 = vld [vmem:[#allocation13 + $0x1c] sm:$0xf]
    %v1543 = vld [vmem:[#allocation13 + $0x20] sm:$0xf]
    %v1544 = vld [vmem:[#allocation13 + $0x24] sm:$0xf]
    %v1545 = vld [vmem:[#allocation13 + $0x28] sm:$0xf]
    %v1546 = vld [vmem:[#allocation13 + $0x2c] sm:$0xf]
    %v1547 = vld [vmem:[#allocation13 + $0x30] sm:$0xf]
    %v1548 = vld [vmem:[#allocation13 + $0x34] sm:$0xf]
    %v1549 = vld [vmem:[#allocation13 + $0x38] sm:$0xf]
    %v1550 = vld [vmem:[#allocation13 + $0x3c] sm:$0xf]
    %v1551 = vld [vmem:[#allocation15] sm:$0xf]
    %v1552 = vld [vmem:[#allocation15 + $0x4] sm:$0xf]
    %v1553 = vld [vmem:[#allocation15 + $0x8] sm:$0xf]
    %v1554 = vld [vmem:[#allocation15 + $0xc] sm:$0xf]
    %v1555 = vld [vmem:[#allocation15 + $0x10] sm:$0xf]
    %v1556 = vld [vmem:[#allocation15 + $0x14] sm:$0xf]
    %v1557 = vld [vmem:[#allocation15 + $0x18] sm:$0xf]
    %v1558 = vld [vmem:[#allocation15 + $0x1c] sm:$0xf]
    %v1559 = vld [vmem:[#allocation15 + $0x20] sm:$0xf]
    %v1560 = vld [vmem:[#allocation15 + $0x24] sm:$0xf]
    %v1561 = vld [vmem:[#allocation15 + $0x28] sm:$0xf]
    %v1562 = vld [vmem:[#allocation15 + $0x2c] sm:$0xf]
    %v1563 = vld [vmem:[#allocation15 + $0x30] sm:$0xf]
    %v1564 = vld [vmem:[#allocation15 + $0x34] sm:$0xf]
    %v1565 = vld [vmem:[#allocation15 + $0x38] sm:$0xf]
    %v1566 = vld [vmem:[#allocation15 + $0x3c] sm:$0xf]
    %v1583 = vunpack.c.l.b16 %v1551
    %v1584 = vunpack.c.l.b16 %v1552
    %v1585 = vunpack.c.l.b16 %v1553
    %v1586 = vunpack.c.l.b16 %v1554
    %v1587 = vunpack.c.l.b16 %v1555
    %v1588 = vunpack.c.l.b16 %v1556
    %v1589 = vunpack.c.l.b16 %v1557
    %v1590 = vunpack.c.l.b16 %v1558
    %v1591 = vunpack.c.l.b16 %v1559
    %v1592 = vunpack.c.l.b16 %v1560
    %v1593 = vunpack.c.l.b16 %v1561
    %v1594 = vunpack.c.l.b16 %v1562
    %v1595 = vunpack.c.l.b16 %v1563
    %v1596 = vunpack.c.l.b16 %v1564
    %v1597 = vunpack.c.l.b16 %v1565
    %v1598 = vunpack.c.l.b16 %v1566
    %v1599 = vpack.c.b16 %v1584, %v1583
    %v1600 = vpack.c.b16 %v1586, %v1585
    %v1601 = vpack.c.b16 %v1588, %v1587
    %v1602 = vpack.c.b16 %v1590, %v1589
    %v1603 = vpack.c.b16 %v1592, %v1591
    %v1604 = vpack.c.b16 %v1594, %v1593
    %v1605 = vpack.c.b16 %v1596, %v1595
    %v1606 = vpack.c.b16 %v1598, %v1597
    %1615 = vmatpush.bf16.msra.mxu0 %v1606
    %1616 = vmatpush.bf16.msra.mxu0 %v1605
    %1617 = vmatpush.bf16.msra.mxu0 %v1604
    %1618 = vmatpush.bf16.msra.mxu0 %v1603
    %1619 = vmatpush.bf16.msra.mxu0 %v1602
    %1620 = vmatpush.bf16.msra.mxu0 %v1601
    %1621 = vmatpush.bf16.msra.mxu0 %v1600
    %1622 = vmatpush.bf16.msra.mxu0 %v1599
    %1623 = vmatmul.bf16.gmra.mxu0 %v1533
    %v1624 = vpop.f32.mrf.mxu0
    %v1625 = vadd.f32 0.0, %v1624
    %v1626 = vpop.f32.mrf.mxu0
    %1627 = vdwg.mxu0
    %v1644 = vunpack.c.l.b16 %v1535
    %v1645 = vunpack.c.l.b16 %v1536
    %v1646 = vunpack.c.l.b16 %v1537
    %v1647 = vunpack.c.l.b16 %v1538
    %v1648 = vunpack.c.l.b16 %v1539
    %v1649 = vunpack.c.l.b16 %v1540
    %v1650 = vunpack.c.l.b16 %v1541
    %v1651 = vunpack.c.l.b16 %v1542
    %v1652 = vunpack.c.l.b16 %v1543
    %v1653 = vunpack.c.l.b16 %v1544
    %v1654 = vunpack.c.l.b16 %v1545
    %v1655 = vunpack.c.l.b16 %v1546
    %v1656 = vunpack.c.l.b16 %v1547
    %v1657 = vunpack.c.l.b16 %v1548
    %v1658 = vunpack.c.l.b16 %v1549
    %v1659 = vunpack.c.l.b16 %v1550
    %v1660 = vpack.c.b16 %v1645, %v1644
    %v1661 = vpack.c.b16 %v1647, %v1646
    %v1662 = vpack.c.b16 %v1649, %v1648
    %v1663 = vpack.c.b16 %v1651, %v1650
    %v1664 = vpack.c.b16 %v1653, %v1652
    %v1665 = vpack.c.b16 %v1655, %v1654
    %v1666 = vpack.c.b16 %v1657, %v1656
    %v1667 = vpack.c.b16 %v1659, %v1658
    %1676 = vmatpush.bf16.msra.mxu0 %v1667
    %1677 = vmatpush.bf16.msra.mxu0 %v1666
    %1678 = vmatpush.bf16.msra.mxu0 %v1665
    %1679 = vmatpush.bf16.msra.mxu0 %v1664
    %1680 = vmatpush.bf16.msra.mxu0 %v1663
    %1681 = vmatpush.bf16.msra.mxu0 %v1662
    %1682 = vmatpush.bf16.msra.mxu0 %v1661
    %1683 = vmatpush.bf16.msra.mxu0 %v1660
    %1684 = vmatmul.bf16.gmra.mxu0 %v1534
    %v1685 = vpop.f32.mrf.mxu0
    %v1686 = vadd.f32 %v1625, %v1685
    %v1687 = vpop.f32.mrf.mxu0
    %1688 = vdwg.mxu0
    %v1689 = vld [vmem:[%s6 + $0xb] sm:$0x1]
    %v1691 = vperm.slane %v1689, 0
    %v1693 = vadd.f32 %v1686, %v1691
    %1694 = vset.pattern.permute.xlu0 22
    %1695 = vperm.xlu0 %1694, %v291
    %v1696 = vpop.permute.xlu0 %1695
    %v1698 = vmul.f32 %v1693, %v1696
    %1699 = vset.pattern.permute.xlu0 23
    %1700 = vperm.xlu0 %1699, %v291
    %v1701 = vpop.permute.xlu0 %1700
    %v1703 = vadd.f32 %v1698, %v1701
    %v1704 = vmax.f32 %v1703, 0.0
    %v1705 = vpack.c.bf16 %v1704, %v1704
    %v1706 = vld [vmem:[#allocation16] sm:$0xf]
    %v1707 = vld [vmem:[#allocation16 + $0x4] sm:$0xf]
    %v1708 = vld [vmem:[#allocation16 + $0x8] sm:$0xf]
    %v1709 = vld [vmem:[#allocation16 + $0xc] sm:$0xf]
    %v1710 = vld [vmem:[#allocation16 + $0x10] sm:$0xf]
    %v1711 = vld [vmem:[#allocation16 + $0x14] sm:$0xf]
    %v1712 = vld [vmem:[#allocation16 + $0x18] sm:$0xf]
    %v1713 = vld [vmem:[#allocation16 + $0x1c] sm:$0xf]
    %v1714 = vld [vmem:[#allocation16 + $0x20] sm:$0xf]
    %v1715 = vld [vmem:[#allocation16 + $0x24] sm:$0xf]
    %v1716 = vld [vmem:[#allocation16 + $0x28] sm:$0xf]
    %v1717 = vld [vmem:[#allocation16 + $0x2c] sm:$0xf]
    %v1718 = vld [vmem:[#allocation16 + $0x30] sm:$0xf]
    %v1719 = vld [vmem:[#allocation16 + $0x34] sm:$0xf]
    %v1720 = vld [vmem:[#allocation16 + $0x38] sm:$0xf]
    %v1721 = vld [vmem:[#allocation16 + $0x3c] sm:$0xf]
    %v1722 = vld [vmem:[%s6 + $0xc] sm:$0x1]
    %v1724 = vperm.slane %v1722, 0
    %v1742 = vunpack.c.l.b16 %v1706
    %v1743 = vunpack.c.l.b16 %v1707
    %v1744 = vunpack.c.l.b16 %v1708
    %v1745 = vunpack.c.l.b16 %v1709
    %v1746 = vunpack.c.l.b16 %v1710
    %v1747 = vunpack.c.l.b16 %v1711
    %v1748 = vunpack.c.l.b16 %v1712
    %v1749 = vunpack.c.l.b16 %v1713
    %v1750 = vunpack.c.l.b16 %v1714
    %v1751 = vunpack.c.l.b16 %v1715
    %v1752 = vunpack.c.l.b16 %v1716
    %v1753 = vunpack.c.l.b16 %v1717
    %v1754 = vunpack.c.l.b16 %v1718
    %v1755 = vunpack.c.l.b16 %v1719
    %v1756 = vunpack.c.l.b16 %v1720
    %v1757 = vunpack.c.l.b16 %v1721
    %v1758 = vpack.c.b16 %v1743, %v1742
    %v1759 = vpack.c.b16 %v1745, %v1744
    %v1760 = vpack.c.b16 %v1747, %v1746
    %v1761 = vpack.c.b16 %v1749, %v1748
    %v1762 = vpack.c.b16 %v1751, %v1750
    %v1763 = vpack.c.b16 %v1753, %v1752
    %v1764 = vpack.c.b16 %v1755, %v1754
    %v1765 = vpack.c.b16 %v1757, %v1756
    %1774 = vmatpush.bf16.msra.mxu0 %v1765
    %1775 = vmatpush.bf16.msra.mxu0 %v1764
    %1776 = vmatpush.bf16.msra.mxu0 %v1763
    %1777 = vmatpush.bf16.msra.mxu0 %v1762
    %1778 = vmatpush.bf16.msra.mxu0 %v1761
    %1779 = vmatpush.bf16.msra.mxu0 %v1760
    %1780 = vmatpush.bf16.msra.mxu0 %v1759
    %1781 = vmatpush.bf16.msra.mxu0 %v1758
    %1782 = vmatmul.bf16.gmra.mxu0 %v1705
    %v1783 = vpop.f32.mrf.mxu0
    %v1784 = vadd.f32 %v1724, %v1783
    %v1785 = vpop.f32.mrf.mxu0
    %1786 = vdwg.mxu0
    %1787 = vset.pattern.permute.xlu0 24
    %1788 = vperm.xlu0 %1787, %v291
    %v1789 = vpop.permute.xlu0 %1788
    %v1791 = vmul.f32 %v1784, %v1789
    %1792 = vset.pattern.permute.xlu0 25
    %1793 = vperm.xlu0 %1792, %v291
    %v1794 = vpop.permute.xlu0 %1793
    %v1796 = vadd.f32 %v1791, %v1794
    %v1797 = vmax.f32 %v1796, 0.0
    %v1798 = vpack.c.bf16 %v1797, %v1797
    %v1799 = vld [vmem:[#allocation18] sm:$0xf]
    %v1800 = vld [vmem:[#allocation18 + $0x4] sm:$0xf]
    %v1801 = vld [vmem:[#allocation18 + $0x8] sm:$0xf]
    %v1802 = vld [vmem:[#allocation18 + $0xc] sm:$0xf]
    %v1803 = vld [vmem:[#allocation18 + $0x10] sm:$0xf]
    %v1804 = vld [vmem:[#allocation18 + $0x14] sm:$0xf]
    %v1805 = vld [vmem:[#allocation18 + $0x18] sm:$0xf]
    %v1806 = vld [vmem:[#allocation18 + $0x1c] sm:$0xf]
    %v1807 = vld [vmem:[#allocation18 + $0x20] sm:$0xf]
    %v1808 = vld [vmem:[#allocation18 + $0x24] sm:$0xf]
    %v1809 = vld [vmem:[#allocation18 + $0x28] sm:$0xf]
    %v1810 = vld [vmem:[#allocation18 + $0x2c] sm:$0xf]
    %v1811 = vld [vmem:[#allocation18 + $0x30] sm:$0xf]
    %v1812 = vld [vmem:[#allocation18 + $0x34] sm:$0xf]
    %v1813 = vld [vmem:[#allocation18 + $0x38] sm:$0xf]
    %v1814 = vld [vmem:[#allocation18 + $0x3c] sm:$0xf]
    %v1815 = vld [vmem:[%s6 + $0xd] sm:$0x1]
    %v1817 = vperm.slane %v1815, 0
    %v1835 = vunpack.c.l.b16 %v1799
    %v1836 = vunpack.c.l.b16 %v1800
    %v1837 = vunpack.c.l.b16 %v1801
    %v1838 = vunpack.c.l.b16 %v1802
    %v1839 = vunpack.c.l.b16 %v1803
    %v1840 = vunpack.c.l.b16 %v1804
    %v1841 = vunpack.c.l.b16 %v1805
    %v1842 = vunpack.c.l.b16 %v1806
    %v1843 = vunpack.c.l.b16 %v1807
    %v1844 = vunpack.c.l.b16 %v1808
    %v1845 = vunpack.c.l.b16 %v1809
    %v1846 = vunpack.c.l.b16 %v1810
    %v1847 = vunpack.c.l.b16 %v1811
    %v1848 = vunpack.c.l.b16 %v1812
    %v1849 = vunpack.c.l.b16 %v1813
    %v1850 = vunpack.c.l.b16 %v1814
    %v1851 = vpack.c.b16 %v1836, %v1835
    %v1852 = vpack.c.b16 %v1838, %v1837
    %v1853 = vpack.c.b16 %v1840, %v1839
    %v1854 = vpack.c.b16 %v1842, %v1841
    %v1855 = vpack.c.b16 %v1844, %v1843
    %v1856 = vpack.c.b16 %v1846, %v1845
    %v1857 = vpack.c.b16 %v1848, %v1847
    %v1858 = vpack.c.b16 %v1850, %v1849
    %1867 = vmatpush.bf16.msra.mxu0 %v1858
    %1868 = vmatpush.bf16.msra.mxu0 %v1857
    %1869 = vmatpush.bf16.msra.mxu0 %v1856
    %1870 = vmatpush.bf16.msra.mxu0 %v1855
    %1871 = vmatpush.bf16.msra.mxu0 %v1854
    %1872 = vmatpush.bf16.msra.mxu0 %v1853
    %1873 = vmatpush.bf16.msra.mxu0 %v1852
    %1874 = vmatpush.bf16.msra.mxu0 %v1851
    %1875 = vmatmul.bf16.gmra.mxu0 %v1798
    %v1876 = vpop.f32.mrf.mxu0
    %v1877 = vadd.f32 %v1817, %v1876
    %v1878 = vpop.f32.mrf.mxu0
    %1879 = vdwg.mxu0
    %1880 = vset.pattern.permute.xlu0 26
    %1881 = vperm.xlu0 %1880, %v291
    %v1882 = vpop.permute.xlu0 %1881
    %v1884 = vmul.f32 %v1877, %v1882
    %1885 = vset.pattern.permute.xlu0 27
    %1886 = vperm.xlu0 %1885, %v291
    %v1887 = vpop.permute.xlu0 %1886
    %v1889 = vadd.f32 %v1884, %v1887
    %v1890 = vadd.f32 %v1889, %v1704
    %v1891 = vmax.f32 %v1890, 0.0
    %v1892 = vld [vmem:[%s3] sm:$0xf]
    %v1893 = vpack.c.bf16 %v1891, %v1891
    %v1894 = vld [vmem:[#allocation19] sm:$0xf]
    %v1895 = vld [vmem:[#allocation19 + $0x4] sm:$0xf]
    %v1896 = vld [vmem:[#allocation19 + $0x8] sm:$0xf]
    %v1897 = vld [vmem:[#allocation19 + $0xc] sm:$0xf]
    %v1898 = vld [vmem:[#allocation19 + $0x10] sm:$0xf]
    %v1899 = vld [vmem:[#allocation19 + $0x14] sm:$0xf]
    %v1900 = vld [vmem:[#allocation19 + $0x18] sm:$0xf]
    %v1901 = vld [vmem:[#allocation19 + $0x1c] sm:$0xf]
    %v1902 = vld [vmem:[#allocation19 + $0x20] sm:$0xf]
    %v1903 = vld [vmem:[#allocation19 + $0x24] sm:$0xf]
    %v1904 = vld [vmem:[#allocation19 + $0x28] sm:$0xf]
    %v1905 = vld [vmem:[#allocation19 + $0x2c] sm:$0xf]
    %v1906 = vld [vmem:[#allocation19 + $0x30] sm:$0xf]
    %v1907 = vld [vmem:[#allocation19 + $0x34] sm:$0xf]
    %v1908 = vld [vmem:[#allocation19 + $0x38] sm:$0xf]
    %v1909 = vld [vmem:[#allocation19 + $0x3c] sm:$0xf]
    %v1910 = vld [vmem:[#allocation21] sm:$0xf]
    %v1911 = vld [vmem:[#allocation21 + $0x4] sm:$0xf]
    %v1912 = vld [vmem:[#allocation21 + $0x8] sm:$0xf]
    %v1913 = vld [vmem:[#allocation21 + $0xc] sm:$0xf]
    %v1914 = vld [vmem:[#allocation21 + $0x10] sm:$0xf]
    %v1915 = vld [vmem:[#allocation21 + $0x14] sm:$0xf]
    %v1916 = vld [vmem:[#allocation21 + $0x18] sm:$0xf]
    %v1917 = vld [vmem:[#allocation21 + $0x1c] sm:$0xf]
    %v1918 = vld [vmem:[#allocation21 + $0x20] sm:$0xf]
    %v1919 = vld [vmem:[#allocation21 + $0x24] sm:$0xf]
    %v1920 = vld [vmem:[#allocation21 + $0x28] sm:$0xf]
    %v1921 = vld [vmem:[#allocation21 + $0x2c] sm:$0xf]
    %v1922 = vld [vmem:[#allocation21 + $0x30] sm:$0xf]
    %v1923 = vld [vmem:[#allocation21 + $0x34] sm:$0xf]
    %v1924 = vld [vmem:[#allocation21 + $0x38] sm:$0xf]
    %v1925 = vld [vmem:[#allocation21 + $0x3c] sm:$0xf]
    %v1942 = vunpack.c.l.b16 %v1910
    %v1943 = vunpack.c.l.b16 %v1911
    %v1944 = vunpack.c.l.b16 %v1912
    %v1945 = vunpack.c.l.b16 %v1913
    %v1946 = vunpack.c.l.b16 %v1914
    %v1947 = vunpack.c.l.b16 %v1915
    %v1948 = vunpack.c.l.b16 %v1916
    %v1949 = vunpack.c.l.b16 %v1917
    %v1950 = vunpack.c.l.b16 %v1918
    %v1951 = vunpack.c.l.b16 %v1919
    %v1952 = vunpack.c.l.b16 %v1920
    %v1953 = vunpack.c.l.b16 %v1921
    %v1954 = vunpack.c.l.b16 %v1922
    %v1955 = vunpack.c.l.b16 %v1923
    %v1956 = vunpack.c.l.b16 %v1924
    %v1957 = vunpack.c.l.b16 %v1925
    %v1958 = vpack.c.b16 %v1943, %v1942
    %v1959 = vpack.c.b16 %v1945, %v1944
    %v1960 = vpack.c.b16 %v1947, %v1946
    %v1961 = vpack.c.b16 %v1949, %v1948
    %v1962 = vpack.c.b16 %v1951, %v1950
    %v1963 = vpack.c.b16 %v1953, %v1952
    %v1964 = vpack.c.b16 %v1955, %v1954
    %v1965 = vpack.c.b16 %v1957, %v1956
    %1974 = vmatpush.bf16.msra.mxu0 %v1965
    %1975 = vmatpush.bf16.msra.mxu0 %v1964
    %1976 = vmatpush.bf16.msra.mxu0 %v1963
    %1977 = vmatpush.bf16.msra.mxu0 %v1962
    %1978 = vmatpush.bf16.msra.mxu0 %v1961
    %1979 = vmatpush.bf16.msra.mxu0 %v1960
    %1980 = vmatpush.bf16.msra.mxu0 %v1959
    %1981 = vmatpush.bf16.msra.mxu0 %v1958
    %1982 = vmatmul.bf16.gmra.mxu0 %v1892
    %v1983 = vpop.f32.mrf.mxu0
    %v1984 = vadd.f32 0.0, %v1983
    %v1985 = vpop.f32.mrf.mxu0
    %1986 = vdwg.mxu0
    %v2003 = vunpack.c.l.b16 %v1894
    %v2004 = vunpack.c.l.b16 %v1895
    %v2005 = vunpack.c.l.b16 %v1896
    %v2006 = vunpack.c.l.b16 %v1897
    %v2007 = vunpack.c.l.b16 %v1898
    %v2008 = vunpack.c.l.b16 %v1899
    %v2009 = vunpack.c.l.b16 %v1900
    %v2010 = vunpack.c.l.b16 %v1901
    %v2011 = vunpack.c.l.b16 %v1902
    %v2012 = vunpack.c.l.b16 %v1903
    %v2013 = vunpack.c.l.b16 %v1904
    %v2014 = vunpack.c.l.b16 %v1905
    %v2015 = vunpack.c.l.b16 %v1906
    %v2016 = vunpack.c.l.b16 %v1907
    %v2017 = vunpack.c.l.b16 %v1908
    %v2018 = vunpack.c.l.b16 %v1909
    %v2019 = vpack.c.b16 %v2004, %v2003
    %v2020 = vpack.c.b16 %v2006, %v2005
    %v2021 = vpack.c.b16 %v2008, %v2007
    %v2022 = vpack.c.b16 %v2010, %v2009
    %v2023 = vpack.c.b16 %v2012, %v2011
    %v2024 = vpack.c.b16 %v2014, %v2013
    %v2025 = vpack.c.b16 %v2016, %v2015
    %v2026 = vpack.c.b16 %v2018, %v2017
    %2035 = vmatpush.bf16.msra.mxu0 %v2026
    %2036 = vmatpush.bf16.msra.mxu0 %v2025
    %2037 = vmatpush.bf16.msra.mxu0 %v2024
    %2038 = vmatpush.bf16.msra.mxu0 %v2023
    %2039 = vmatpush.bf16.msra.mxu0 %v2022
    %2040 = vmatpush.bf16.msra.mxu0 %v2021
    %2041 = vmatpush.bf16.msra.mxu0 %v2020
    %2042 = vmatpush.bf16.msra.mxu0 %v2019
    %2043 = vmatmul.bf16.gmra.mxu0 %v1893
    %v2044 = vpop.f32.mrf.mxu0
    %v2045 = vadd.f32 %v1984, %v2044
    %v2046 = vpop.f32.mrf.mxu0
    %2047 = vdwg.mxu0
    %v2048 = vld [vmem:[%s6 + $0xe] sm:$0x1]
    %v2050 = vperm.slane %v2048, 0
    %v2052 = vadd.f32 %v2045, %v2050
    %2053 = vset.pattern.permute.xlu0 28
    %2054 = vperm.xlu0 %2053, %v291
    %v2055 = vpop.permute.xlu0 %2054
    %v2057 = vmul.f32 %v2052, %v2055
    %2058 = vset.pattern.permute.xlu0 29
    %2059 = vperm.xlu0 %2058, %v291
    %v2060 = vpop.permute.xlu0 %2059
    %v2062 = vadd.f32 %v2057, %v2060
    %v2063 = vmax.f32 %v2062, 0.0
    %v2064 = vpack.c.bf16 %v2063, %v2063
    %v2065 = vld [vmem:[%s26] sm:$0xff]
    %v2066 = vld [vmem:[%s26 + $0x8] sm:$0xff]
    %v2067 = vld [vmem:[%s26 + $0x10] sm:$0xff]
    %v2068 = vld [vmem:[%s26 + $0x18] sm:$0xff]
    %v2069 = vld [vmem:[%s26 + $0x20] sm:$0xff]
    %v2070 = vld [vmem:[%s26 + $0x28] sm:$0xff]
    %v2071 = vld [vmem:[%s26 + $0x30] sm:$0xff]
    %v2072 = vld [vmem:[%s26 + $0x38] sm:$0xff]
    %v2073 = vld [vmem:[%s26 + $0x40] sm:$0xff]
    %v2074 = vld [vmem:[%s26 + $0x48] sm:$0xff]
    %v2075 = vld [vmem:[%s26 + $0x50] sm:$0xff]
    %v2076 = vld [vmem:[%s26 + $0x58] sm:$0xff]
    %v2077 = vld [vmem:[%s26 + $0x60] sm:$0xff]
    %v2078 = vld [vmem:[%s26 + $0x68] sm:$0xff]
    %v2079 = vld [vmem:[%s26 + $0x70] sm:$0xff]
    %v2080 = vld [vmem:[%s26 + $0x78] sm:$0xff]
    %v2081 = vld [vmem:[%s6 + $0xf] sm:$0x3]
    %v2083 = vperm.slane %v2081, 0
    %v2084 = vperm.slane %v2081, 1
    %v2103 = vunpack.c.l.b16 %v2065
    %v2104 = vunpack.c.h.b16 %v2065
    %v2105 = vunpack.c.l.b16 %v2066
    %v2106 = vunpack.c.h.b16 %v2066
    %v2107 = vunpack.c.l.b16 %v2067
    %v2108 = vunpack.c.h.b16 %v2067
    %v2109 = vunpack.c.l.b16 %v2068
    %v2110 = vunpack.c.h.b16 %v2068
    %v2111 = vunpack.c.l.b16 %v2069
    %v2112 = vunpack.c.h.b16 %v2069
    %v2113 = vunpack.c.l.b16 %v2070
    %v2114 = vunpack.c.h.b16 %v2070
    %v2115 = vunpack.c.l.b16 %v2071
    %v2116 = vunpack.c.h.b16 %v2071
    %v2117 = vunpack.c.l.b16 %v2072
    %v2118 = vunpack.c.h.b16 %v2072
    %v2119 = vunpack.c.l.b16 %v2073
    %v2120 = vunpack.c.h.b16 %v2073
    %v2121 = vunpack.c.l.b16 %v2074
    %v2122 = vunpack.c.h.b16 %v2074
    %v2123 = vunpack.c.l.b16 %v2075
    %v2124 = vunpack.c.h.b16 %v2075
    %v2125 = vunpack.c.l.b16 %v2076
    %v2126 = vunpack.c.h.b16 %v2076
    %v2127 = vunpack.c.l.b16 %v2077
    %v2128 = vunpack.c.h.b16 %v2077
    %v2129 = vunpack.c.l.b16 %v2078
    %v2130 = vunpack.c.h.b16 %v2078
    %v2131 = vunpack.c.l.b16 %v2079
    %v2132 = vunpack.c.h.b16 %v2079
    %v2133 = vunpack.c.l.b16 %v2080
    %v2134 = vunpack.c.h.b16 %v2080
    %v2135 = vpack.c.b16 %v2105, %v2103
    %v2136 = vpack.c.b16 %v2106, %v2104
    %v2137 = vpack.c.b16 %v2109, %v2107
    %v2138 = vpack.c.b16 %v2110, %v2108
    %v2139 = vpack.c.b16 %v2113, %v2111
    %v2140 = vpack.c.b16 %v2114, %v2112
    %v2141 = vpack.c.b16 %v2117, %v2115
    %v2142 = vpack.c.b16 %v2118, %v2116
    %v2143 = vpack.c.b16 %v2121, %v2119
    %v2144 = vpack.c.b16 %v2122, %v2120
    %v2145 = vpack.c.b16 %v2125, %v2123
    %v2146 = vpack.c.b16 %v2126, %v2124
    %v2147 = vpack.c.b16 %v2129, %v2127
    %v2148 = vpack.c.b16 %v2130, %v2128
    %v2149 = vpack.c.b16 %v2133, %v2131
    %v2150 = vpack.c.b16 %v2134, %v2132
    %2167 = vmatpush.bf16.msra.mxu0 %v2149
    %2168 = vmatpush.bf16.msra.mxu0 %v2147
    %2169 = vmatpush.bf16.msra.mxu0 %v2145
    %2170 = vmatpush.bf16.msra.mxu0 %v2143
    %2171 = vmatpush.bf16.msra.mxu0 %v2141
    %2172 = vmatpush.bf16.msra.mxu0 %v2139
    %2173 = vmatpush.bf16.msra.mxu0 %v2137
    %2174 = vmatpush.bf16.msra.mxu0 %v2135
    %2175 = vmatmul.bf16.gmra.mxu0 %v2064
    %v2176 = vpop.f32.mrf.mxu0
    %v2177 = vadd.f32 %v2083, %v2176
    %v2178 = vpop.f32.mrf.mxu0
    %2179 = vdwg.mxu0
    %2180 = vmatpush.bf16.msra.mxu0 %v2150
    %2181 = vmatpush.bf16.msra.mxu0 %v2148
    %2182 = vmatpush.bf16.msra.mxu0 %v2146
    %2183 = vmatpush.bf16.msra.mxu0 %v2144
    %2184 = vmatpush.bf16.msra.mxu0 %v2142
    %2185 = vmatpush.bf16.msra.mxu0 %v2140
    %2186 = vmatpush.bf16.msra.mxu0 %v2138
    %2187 = vmatpush.bf16.msra.mxu0 %v2136
    %2188 = vmatmul.bf16.gmra.mxu0 %v2064
    %v2189 = vpop.f32.mrf.mxu0
    %v2190 = vadd.f32 %v2084, %v2189
    %v2191 = vpop.f32.mrf.mxu0
    %2192 = vdwg.mxu0
    %2193 = vset.pattern.permute.xlu0 30
    %2194 = vperm.xlu0 %2193, %v291
    %v2195 = vpop.permute.xlu0 %2194
    %v2197 = vmul.f32 %v2177, %v2195
    %v2198 = vmul.f32 %v2190, %v2195
    %2199 = vset.pattern.permute.xlu0 31
    %2200 = vperm.xlu0 %2199, %v291
    %v2201 = vpop.permute.xlu0 %2200
    %v2203 = vadd.f32 %v2197, %v2201
    %v2204 = vadd.f32 %v2198, %v2201
    %v2205 = vmax.f32 %v2203, 0.0
    %v2206 = vmax.f32 %v2204, 0.0
    %v2207 = vpack.c.bf16 %v2206, %v2205
    %2208 = vst [vmem:[%s27] sm:$0xff] %v2207
    // Predicated region
    $region162: #{bps_cvae_forward.1} parent=1 // pred_check
      _
    $region163: #{bps_cvae_forward.1} parent=1 // pred_check_branch
      %2210 = sbr.rel (0) target = $region165
    $region164: #{bps_cvae_forward.1} parent=1 // pred_region
      _
    $region165: #{bps_cvae_forward.1} parent=1 // pred_fallthru
      _
    // Predicated region
    $region166: #{bps_cvae_forward.1} parent=1 // pred_check
      _
    $region167: #{bps_cvae_forward.1} parent=1 // pred_check_branch
      %2212 = sbr.rel (0) target = $region169
    $region168: #{bps_cvae_forward.1} parent=1 // pred_region
      _
    $region169: #{bps_cvae_forward.1} parent=1 // pred_fallthru
      _
    // Predicated region
    $region170: #{bps_cvae_forward.1} parent=1 // pred_check
      _
    $region171: #{bps_cvae_forward.1} parent=1 // pred_check_branch
      %2214 = sbr.rel (0) target = $region173
    $region172: #{bps_cvae_forward.1} parent=1 // pred_region
      _
    $region173: #{bps_cvae_forward.1} parent=1 // pred_fallthru
      _
    // Predicated region
    $region174: #{bps_cvae_forward.1} parent=1 // pred_check
      _
    $region175: #{bps_cvae_forward.1} parent=1 // pred_check_branch
      %2216 = sbr.rel (0) target = $region177
    $region176: #{bps_cvae_forward.1} parent=1 // pred_region
      _
    $region177: #{bps_cvae_forward.1} parent=1 // pred_fallthru
      _
    %2217 = vsyncpa [#allocation3], 1
    %2218 = vsyncpa [#allocation5], 1
    %2219 = vsyncpa [#allocation8], 1
    %2220 = vsyncpa [#allocation11], 1
    %2221 = vsyncpa [#allocation14], 1
    %2222 = vsyncpa [#allocation17], 1
    %2223 = vsyncpa [#allocation20], 1

</llo_original>
